<compile_context>
chip_gen: v6e
topology: v6e:2x2x1
jax: 0.10.0
libtpu: 0.0.40
codegen_flags: <defaults>
</compile_context>

<pallas_src>
import functools

import jax
import jax.numpy as jnp
from jax import lax
from jax.experimental import pallas as pl
from jax.experimental.pallas import tpu as pltpu


LANE = 128                      # pad output channels to a multiple of this
COMPUTE_DTYPE = jnp.bfloat16    # MXU operand dtype (accumulation stays f32)


def _round_up(x, m):
    return (x + m - 1) // m * m


# ------------------------------ Pallas kernel -------------------------------

def _accum_conv3x3(x_ref, w_refs, *, ho, wo, stride, cin):
    """Accumulate 3x3/pad=1 conv(s) as 9 matmuls over static tap offsets.

    x_ref : (1, stride*stride, Hd, Wd, Cin) parity-decimated, spatially padded
            input tile (bf16, VMEM resident).
    w_refs: each (9, Cin, Cp) bf16 weights (BN scale already folded in).
    Returns one (Ho*Wo, Cp) f32 accumulator per weight ref (taps share reads).
    """
    m = ho * wo
    accs = [jnp.zeros((m, w.shape[-1]), jnp.float32) for w in w_refs]
    for dh in range(3):
        for dw in range(3):
            pidx = (dh % stride) * stride + (dw % stride)
            ah, aw = dh // stride, dw // stride
            patch = x_ref[0, pidx, ah:ah + ho, aw:aw + wo, :].reshape(m, cin)
            for t, w_ref in enumerate(w_refs):
                accs[t] = accs[t] + jnp.dot(
                    patch, w_ref[dh * 3 + dw],
                    preferred_element_type=jnp.float32)
    return accs


def _fused_block_kernel(*refs, ho, wo, stride, has_proj, cin):
    """Whole BasicBlock for one batch image (tile fully resident in VMEM)."""
    if has_proj:
        (x_ref, w1_ref, b1_ref, w2_ref, b2_ref,
         ws_ref, bs_ref, o_ref, p1_ref) = refs
    else:
        (x_ref, w1_ref, b1_ref, w2_ref, b2_ref,
         r_ref, o_ref, p1_ref) = refs
    m = ho * wo
    cp = o_ref.shape[-1]

    # ---- conv1 (+ projection shortcut), sharing the input tap reads --------
    if has_proj:
        acc1, acc_s = _accum_conv3x3(x_ref, (w1_ref, ws_ref),
                                     ho=ho, wo=wo, stride=stride, cin=cin)
        res = acc_s + bs_ref[...]                     # BN(shortcut conv), f32
    else:
        (acc1,) = _accum_conv3x3(x_ref, (w1_ref,),
                                 ho=ho, wo=wo, stride=stride, cin=cin)
        res = r_ref[0].astype(jnp.float32)            # identity shortcut

    y1 = jnp.maximum(acc1 + b1_ref[...], 0.0).astype(p1_ref.dtype)

    # ---- conv2 on the spatially padded conv1 output kept in VMEM -----------
    p1_ref[...] = jnp.zeros_like(p1_ref)              # zero the pad=1 halo
    p1_ref[1:1 + ho, 1:1 + wo, :] = y1.reshape(ho, wo, cp)
    acc2 = jnp.zeros((m, cp), jnp.float32)
    for dh in range(3):
        for dw in range(3):
            patch = p1_ref[dh:dh + ho, dw:dw + wo, :].reshape(m, cp)
            acc2 = acc2 + jnp.dot(patch, w2_ref[dh * 3 + dw],
                                  preferred_element_type=jnp.float32)

    y2 = acc2 + b2_ref[...] + res                     # BN2 bias + residual
    o_ref[0] = jnp.maximum(y2, 0.0).astype(o_ref.dtype)


# ------------------------------- Glue (JAX) ---------------------------------

def _pad_and_decimate(x, stride, ho, wo):
    """Spatial pad=1 + stride-parity decimation so the kernel only performs
    contiguous static slices (no strided loads).  Total size == padded input
    (no 9x im2col blow-up).  Returns (N, stride*stride, Hd, Wd, C) bf16."""
    x = x.astype(COMPUTE_DTYPE)
    xp = jnp.pad(x, ((0, 0), (1, 1), (1, 1), (0, 0)))
    if stride == 1:
        return xp[:, None]
    extra = 2 // stride                # max(dh // stride) over taps dh in {0,1,2}
    hd, wd = ho + extra, wo + extra
    pad_h = max(0, hd * stride - xp.shape[1])
    pad_w = max(0, wd * stride - xp.shape[2])
    if pad_h or pad_w:
        xp = jnp.pad(xp, ((0, 0), (0, pad_h), (0, pad_w), (0, 0)))
    decs = [xp[:, rh::stride, rw::stride, :][:, :hd, :wd, :]
            for rh in range(stride) for rw in range(stride)]
    return jnp.stack(decs, axis=1)


def _fold_bn(w, gamma, beta, mean, var, *, cout_pad, cin_pad=None, eps=1e-5):
    """Fold eval-mode BN into the conv weights.  w is OIHW.
    Returns ((9, Cin[_pad], Cp) bf16 weights, (1, Cp) f32 bias)."""
    cout, cin = w.shape[0], w.shape[1]
    scale = gamma / jnp.sqrt(var + eps)
    bias = beta - mean * scale
    wf = (jnp.transpose(w, (2, 3, 1, 0)).reshape(9, cin, cout)
          * scale[None, None, :])
    if cin_pad is not None and cin_pad > cin:
        wf = jnp.pad(wf, ((0, 0), (0, cin_pad - cin), (0, 0)))
    if cout_pad > cout:
        wf = jnp.pad(wf, ((0, 0), (0, 0), (0, cout_pad - cout)))
        bias = jnp.pad(bias, (0, cout_pad - cout))
    return (wf.astype(COMPUTE_DTYPE),
            bias.reshape(1, cout_pad).astype(jnp.float32))


def basic_block_forward_nhwc(x, params, *, stride, eps=1e-5):
    """BasicBlock forward in NHWC.  x: (N, H, W, Cin) f32 -> (N, Ho, Wo, planes)."""
    n, h, w_, cin = x.shape
    cout = params["w1"].shape[0]
    cp = _round_up(cout, LANE)          # lane-dense channel width carried through
    ho = (h - 1) // stride + 1
    wo = (w_ - 1) // stride + 1
    m = ho * wo

    w1, b1 = _fold_bn(params["w1"], params["g1"], params["b1"],
                      params["m1"], params["v1"], cout_pad=cp, eps=eps)
    w2, b2 = _fold_bn(params["w2"], params["g2"], params["b2"],
                      params["m2"], params["v2"], cout_pad=cp, cin_pad=cp, eps=eps)
    xdec = _pad_and_decimate(x, stride, ho, wo)
    _, s2, hd, wd, _ = xdec.shape

    args = [xdec, w1, b1, w2, b2]
    in_specs = [
        pl.BlockSpec((1, s2, hd, wd, cin), lambda i: (i, 0, 0, 0, 0)),
        pl.BlockSpec(w1.shape, lambda i: (0, 0, 0)),    # grid-invariant weights
        pl.BlockSpec(b1.shape, lambda i: (0, 0)),
        pl.BlockSpec(w2.shape, lambda i: (0, 0, 0)),
        pl.BlockSpec(b2.shape, lambda i: (0, 0)),
    ]

    has_proj = "ws" in params
    if has_proj:
        # Projection shortcut (3x3, stride=s, +BN): computed in-kernel, sharing
        # the conv1 input tap reads.
        ws, bs = _fold_bn(params["ws"], params["gs"], params["bs"],
                          params["ms"], params["vs"], cout_pad=cp, eps=eps)
        args += [ws, bs]
        in_specs += [pl.BlockSpec(ws.shape, lambda i: (0, 0, 0)),
                     pl.BlockSpec(bs.shape, lambda i: (0, 0))]
    else:
        # Identity shortcut (PyTorch uses it only when stride==1, cin==planes):
        # pass x as a lane-dense f32 residual stream.
        assert stride == 1 and cin == cout
        res = jnp.pad(x.astype(jnp.float32).reshape(n, m, cin),
                      ((0, 0), (0, 0), (0, cp - cin)))
        args.append(res)
        in_specs.append(pl.BlockSpec((1, m, cp), lambda i: (i, 0, 0)))

    kernel = functools.partial(_fused_block_kernel, ho=ho, wo=wo,
                               stride=stride, has_proj=has_proj, cin=cin)

    out = pl.pallas_call(
        kernel,
        grid=(n,),
        in_specs=in_specs,
        out_specs=pl.BlockSpec((1, m, cp), lambda i: (i, 0, 0)),
        out_shape=jax.ShapeDtypeStruct((n, m, cp), jnp.float32),
        scratch_shapes=[pltpu.VMEM((ho + 2, wo + 2, cp), COMPUTE_DTYPE)],
        compiler_params=pltpu.CompilerParams(
            dimension_semantics=("parallel",),
            # Tiny tiles here; re-derive tiling / budget for deep layers and
            # for v7x's 64 MiB physical VMEM.
            vmem_limit_bytes=32 * 1024 * 1024),
    )(*args)
    return out.reshape(n, ho, wo, cp)[..., :cout]


def basic_block_forward(x_nchw, params, *, stride):
    """PyTorch-layout wrapper: (N, Cin, H, W) -> (N, planes, Ho, Wo).
    Layout conversion only at this boundary; chain blocks through
    basic_block_forward_nhwc to stay NHWC end to end."""
    x = jnp.transpose(x_nchw, (0, 2, 3, 1))
    out = basic_block_forward_nhwc(x, params, stride=stride)
    return jnp.transpose(out, (0, 3, 1, 2))


# ---------------------------- Reference (pure JAX) ---------------------------

def _ref_conv_bn(x, w, gamma, beta, mean, var, stride, eps=1e-5):
    y = lax.conv_general_dilated(
        x, w, window_strides=(stride, stride), padding=((1, 1), (1, 1)),
        dimension_numbers=("NCHW", "OIHW", "NCHW"))
    s = (gamma / jnp.sqrt(var + eps)).reshape(1, -1, 1, 1)
    b = (beta - mean * gamma / jnp.sqrt(var + eps)).reshape(1, -1, 1, 1)
    return y * s + b


def ref_forward(x, params, *, stride):
    out = jax.nn.relu(_ref_conv_bn(x, params["w1"], params["g1"], params["b1"],
                                   params["m1"], params["v1"], stride))
    out2 = _ref_conv_bn(out, params["w2"], params["g2"], params["b2"],
                        params["m2"], params["v2"], 1)
    if "ws" in params:
        sc = _ref_conv_bn(x, params["ws"], params["gs"], params["bs"],
                          params["ms"], params["vs"], stride)
    else:
        sc = x
    return jax.nn.relu(out2 + sc)


# --------------------------------- Params ------------------------------------

def make_params(key, in_planes, planes, stride):
    keys = jax.random.split(key, 12)
    p = {
        "w1": jax.random.normal(keys[0], (planes, in_planes, 3, 3), jnp.float32) * 0.1,
        "g1": 1.0 + 0.1 * jax.random.normal(keys[1], (planes,), jnp.float32),
        "b1": 0.1 * jax.random.normal(keys[2], (planes,), jnp.float32),
        "m1": 0.1 * jax.random.normal(keys[3], (planes,), jnp.float32),
        "v1": 1.0 + 0.1 * jax.random.uniform(keys[4], (planes,), jnp.float32),
        "w2": jax.random.normal(keys[5], (planes, planes, 3, 3), jnp.float32) * 0.1,
        "g2": 1.0 + 0.1 * jax.random.normal(keys[6], (planes,), jnp.float32),
        "b2": 0.1 * jax.random.normal(keys[7], (planes,), jnp.float32),
        "m2": 0.1 * jax.random.normal(keys[8], (planes,), jnp.float32),
        "v2": 1.0 + 0.1 * jax.random.uniform(keys[9], (planes,), jnp.float32),
    }
    if stride != 1 or in_planes != planes:
        sk = jax.random.split(keys[10], 5)
        p.update({
            "ws": jax.random.normal(sk[0], (planes, in_planes, 3, 3), jnp.float32) * 0.1,
            "gs": 1.0 + 0.1 * jax.random.normal(sk[1], (planes,), jnp.float32),
            "bs": 0.1 * jax.random.normal(sk[2], (planes,), jnp.float32),
            "ms": 0.1 * jax.random.normal(sk[3], (planes,), jnp.float32),
            "vs": 1.0 + 0.1 * jax.random.uniform(sk[4], (planes,), jnp.float32),
        })
    return p


# ----------------------------------- Main -------------------------------------

if __name__ == "__main__":
    key = jax.random.PRNGKey(0)
    kx, kp1, kp2 = jax.random.split(key, 3)

    # Kernel computes with bf16 MXU operands (f32 accumulation); compare
    # against the f32 reference with a correspondingly loose tolerance.
    TOL = dict(atol=5e-2, rtol=5e-2)

    # Config 1: projection shortcut (stride=2, channel expansion 4 -> 8).
    x = jax.random.normal(kx, (2, 4, 16, 16), jnp.float32)
    params_proj = make_params(kp1, in_planes=4, planes=8, stride=2)
    fwd2 = jax.jit(functools.partial(basic_block_forward, stride=2))
    out_proj = jax.block_until_ready(fwd2(x, params_proj))
    ref_proj = ref_forward(x, params_proj, stride=2)
    assert out_proj.shape == (2, 8, 8, 8)
    assert jnp.allclose(out_proj, ref_proj, **TOL)

    # Config 2: identity shortcut (stride=1, in_planes == planes).
    x2 = jax.random.normal(kx, (2, 8, 16, 16), jnp.float32)
    params_id = make_params(kp2, in_planes=8, planes=8, stride=1)
    fwd1 = jax.jit(functools.partial(basic_block_forward, stride=1))
    out_id = jax.block_until_ready(fwd1(x2, params_id))
    ref_id = ref_forward(x2, params_id, stride=1)
    assert out_id.shape == (2, 8, 16, 16)
    assert jnp.allclose(out_id, ref_id, **TOL)

    print("KERNEL_OK")
</pallas_src>

<mosaic_0001>
module attributes {stable_mosaic.version = 11 : i64} {
  func.func @_fused_block_kernel(%arg0: i32, %arg1: memref<1x4x9x9x4xbf16, #tpu.memory_space<vmem>>, %arg2: memref<9x4x128xbf16, #tpu.memory_space<vmem>>, %arg3: memref<1x128xf32, #tpu.memory_space<vmem>>, %arg4: memref<9x128x128xbf16, #tpu.memory_space<vmem>>, %arg5: memref<1x128xf32, #tpu.memory_space<vmem>>, %arg6: memref<9x4x128xbf16, #tpu.memory_space<vmem>>, %arg7: memref<1x128xf32, #tpu.memory_space<vmem>>, %arg8: memref<1x64x128xf32, #tpu.memory_space<vmem>>, %arg9: memref<10x10x128xbf16, #tpu.memory_space<vmem>>) attributes {dimension_semantics = [#tpu.dimension_semantics<parallel>], iteration_bounds = array<i64: 2>, scalar_prefetch = 0 : i64, scratch_operands = 1 : i64, tpu.core_type = #tpu.core_type<tc>, window_params = [{transform_indices = @transform_0, window_bounds = array<i64: 1, 4, 9, 9, 4>}, {pipeline_mode = #tpu.pipeline_mode<synchronous>, transform_indices = @transform_1, window_bounds = array<i64: 9, 4, 128>}, {pipeline_mode = #tpu.pipeline_mode<synchronous>, transform_indices = @transform_2, window_bounds = array<i64: 1, 128>}, {pipeline_mode = #tpu.pipeline_mode<synchronous>, transform_indices = @transform_3, window_bounds = array<i64: 9, 128, 128>}, {pipeline_mode = #tpu.pipeline_mode<synchronous>, transform_indices = @transform_4, window_bounds = array<i64: 1, 128>}, {pipeline_mode = #tpu.pipeline_mode<synchronous>, transform_indices = @transform_5, window_bounds = array<i64: 9, 4, 128>}, {pipeline_mode = #tpu.pipeline_mode<synchronous>, transform_indices = @transform_6, window_bounds = array<i64: 1, 128>}, {transform_indices = @transform_7, window_bounds = array<i64: 1, 64, 128>}]} {
    %cst = arith.constant 0.000000e+00 : f32
    %0 = vector.broadcast %cst : f32 to vector<64x128xf32>
    %cst_0 = arith.constant 0.000000e+00 : f32
    %1 = vector.broadcast %cst_0 : f32 to vector<64x128xf32>
    %c0 = arith.constant 0 : index
    %c0_1 = arith.constant 0 : index
    %c0_2 = arith.constant 0 : index
    %c0_3 = arith.constant 0 : index
    %c0_4 = arith.constant 0 : index
    %2 = vector.load %arg1[%c0, %c0_1, %c0_2, %c0_3, %c0_4] : memref<1x4x9x9x4xbf16, #tpu.memory_space<vmem>>, vector<1x1x8x8x4xbf16>
    %3 = vector.shape_cast %2 : vector<1x1x8x8x4xbf16> to vector<8x8x4xbf16>
    %4 = vector.shape_cast %3 : vector<8x8x4xbf16> to vector<64x4xbf16>
    %c0_5 = arith.constant 0 : index
    %c0_6 = arith.constant 0 : index
    %c0_7 = arith.constant 0 : index
    %5 = vector.load %arg2[%c0_5, %c0_6, %c0_7] : memref<9x4x128xbf16, #tpu.memory_space<vmem>>, vector<1x4x128xbf16>
    %6 = vector.shape_cast %5 : vector<1x4x128xbf16> to vector<4x128xbf16>
    %cst_8 = arith.constant dense<0.000000e+00> : vector<64x128xf32>
    %7 = tpu.matmul %4, %6, %cst_8 {dimension_numbers = #tpu.dot_dimension_numbers<[1], [0], [0], [1], [0, 0, 1, 1], [], []>} : vector<64x4xbf16>, vector<4x128xbf16>, vector<64x128xf32> -> vector<64x128xf32>
    %8 = arith.addf %0, %7 : vector<64x128xf32>
    %c0_9 = arith.constant 0 : index
    %c0_10 = arith.constant 0 : index
    %c0_11 = arith.constant 0 : index
    %9 = vector.load %arg6[%c0_9, %c0_10, %c0_11] : memref<9x4x128xbf16, #tpu.memory_space<vmem>>, vector<1x4x128xbf16>
    %10 = vector.shape_cast %9 : vector<1x4x128xbf16> to vector<4x128xbf16>
    %cst_12 = arith.constant dense<0.000000e+00> : vector<64x128xf32>
    %11 = tpu.matmul %4, %10, %cst_12 {dimension_numbers = #tpu.dot_dimension_numbers<[1], [0], [0], [1], [0, 0, 1, 1], [], []>} : vector<64x4xbf16>, vector<4x128xbf16>, vector<64x128xf32> -> vector<64x128xf32>
    %12 = arith.addf %1, %11 : vector<64x128xf32>
    %c0_13 = arith.constant 0 : index
    %c1 = arith.constant 1 : index
    %c0_14 = arith.constant 0 : index
    %c0_15 = arith.constant 0 : index
    %c0_16 = arith.constant 0 : index
    %13 = vector.load %arg1[%c0_13, %c1, %c0_14, %c0_15, %c0_16] : memref<1x4x9x9x4xbf16, #tpu.memory_space<vmem>>, vector<1x1x8x8x4xbf16>
    %14 = vector.shape_cast %13 : vector<1x1x8x8x4xbf16> to vector<8x8x4xbf16>
    %15 = vector.shape_cast %14 : vector<8x8x4xbf16> to vector<64x4xbf16>
    %c1_17 = arith.constant 1 : index
    %c0_18 = arith.constant 0 : index
    %c0_19 = arith.constant 0 : index
    %16 = vector.load %arg2[%c1_17, %c0_18, %c0_19] : memref<9x4x128xbf16, #tpu.memory_space<vmem>>, vector<1x4x128xbf16>
    %17 = vector.shape_cast %16 : vector<1x4x128xbf16> to vector<4x128xbf16>
    %cst_20 = arith.constant dense<0.000000e+00> : vector<64x128xf32>
    %18 = tpu.matmul %15, %17, %cst_20 {dimension_numbers = #tpu.dot_dimension_numbers<[1], [0], [0], [1], [0, 0, 1, 1], [], []>} : vector<64x4xbf16>, vector<4x128xbf16>, vector<64x128xf32> -> vector<64x128xf32>
    %19 = arith.addf %8, %18 : vector<64x128xf32>
    %c1_21 = arith.constant 1 : index
    %c0_22 = arith.constant 0 : index
    %c0_23 = arith.constant 0 : index
    %20 = vector.load %arg6[%c1_21, %c0_22, %c0_23] : memref<9x4x128xbf16, #tpu.memory_space<vmem>>, vector<1x4x128xbf16>
    %21 = vector.shape_cast %20 : vector<1x4x128xbf16> to vector<4x128xbf16>
    %cst_24 = arith.constant dense<0.000000e+00> : vector<64x128xf32>
    %22 = tpu.matmul %15, %21, %cst_24 {dimension_numbers = #tpu.dot_dimension_numbers<[1], [0], [0], [1], [0, 0, 1, 1], [], []>} : vector<64x4xbf16>, vector<4x128xbf16>, vector<64x128xf32> -> vector<64x128xf32>
    %23 = arith.addf %12, %22 : vector<64x128xf32>
    %c0_25 = arith.constant 0 : index
    %c0_26 = arith.constant 0 : index
    %c0_27 = arith.constant 0 : index
    %c1_28 = arith.constant 1 : index
    %c0_29 = arith.constant 0 : index
    %24 = vector.load %arg1[%c0_25, %c0_26, %c0_27, %c1_28, %c0_29] : memref<1x4x9x9x4xbf16, #tpu.memory_space<vmem>>, vector<1x1x8x8x4xbf16>
    %25 = vector.shape_cast %24 : vector<1x1x8x8x4xbf16> to vector<8x8x4xbf16>
    %26 = vector.shape_cast %25 : vector<8x8x4xbf16> to vector<64x4xbf16>
    %c2 = arith.constant 2 : index
    %c0_30 = arith.constant 0 : index
    %c0_31 = arith.constant 0 : index
    %27 = vector.load %arg2[%c2, %c0_30, %c0_31] : memref<9x4x128xbf16, #tpu.memory_space<vmem>>, vector<1x4x128xbf16>
    %28 = vector.shape_cast %27 : vector<1x4x128xbf16> to vector<4x128xbf16>
    %cst_32 = arith.constant dense<0.000000e+00> : vector<64x128xf32>
    %29 = tpu.matmul %26, %28, %cst_32 {dimension_numbers = #tpu.dot_dimension_numbers<[1], [0], [0], [1], [0, 0, 1, 1], [], []>} : vector<64x4xbf16>, vector<4x128xbf16>, vector<64x128xf32> -> vector<64x128xf32>
    %30 = arith.addf %19, %29 : vector<64x128xf32>
    %c2_33 = arith.constant 2 : index
    %c0_34 = arith.constant 0 : index
    %c0_35 = arith.constant 0 : index
    %31 = vector.load %arg6[%c2_33, %c0_34, %c0_35] : memref<9x4x128xbf16, #tpu.memory_space<vmem>>, vector<1x4x128xbf16>
    %32 = vector.shape_cast %31 : vector<1x4x128xbf16> to vector<4x128xbf16>
    %cst_36 = arith.constant dense<0.000000e+00> : vector<64x128xf32>
    %33 = tpu.matmul %26, %32, %cst_36 {dimension_numbers = #tpu.dot_dimension_numbers<[1], [0], [0], [1], [0, 0, 1, 1], [], []>} : vector<64x4xbf16>, vector<4x128xbf16>, vector<64x128xf32> -> vector<64x128xf32>
    %34 = arith.addf %23, %33 : vector<64x128xf32>
    %c0_37 = arith.constant 0 : index
    %c2_38 = arith.constant 2 : index
    %c0_39 = arith.constant 0 : index
    %c0_40 = arith.constant 0 : index
    %c0_41 = arith.constant 0 : index
    %35 = vector.load %arg1[%c0_37, %c2_38, %c0_39, %c0_40, %c0_41] : memref<1x4x9x9x4xbf16, #tpu.memory_space<vmem>>, vector<1x1x8x8x4xbf16>
    %36 = vector.shape_cast %35 : vector<1x1x8x8x4xbf16> to vector<8x8x4xbf16>
    %37 = vector.shape_cast %36 : vector<8x8x4xbf16> to vector<64x4xbf16>
    %c3 = arith.constant 3 : index
    %c0_42 = arith.constant 0 : index
    %c0_43 = arith.constant 0 : index
    %38 = vector.load %arg2[%c3, %c0_42, %c0_43] : memref<9x4x128xbf16, #tpu.memory_space<vmem>>, vector<1x4x128xbf16>
    %39 = vector.shape_cast %38 : vector<1x4x128xbf16> to vector<4x128xbf16>
    %cst_44 = arith.constant dense<0.000000e+00> : vector<64x128xf32>
    %40 = tpu.matmul %37, %39, %cst_44 {dimension_numbers = #tpu.dot_dimension_numbers<[1], [0], [0], [1], [0, 0, 1, 1], [], []>} : vector<64x4xbf16>, vector<4x128xbf16>, vector<64x128xf32> -> vector<64x128xf32>
    %41 = arith.addf %30, %40 : vector<64x128xf32>
    %c3_45 = arith.constant 3 : index
    %c0_46 = arith.constant 0 : index
    %c0_47 = arith.constant 0 : index
    %42 = vector.load %arg6[%c3_45, %c0_46, %c0_47] : memref<9x4x128xbf16, #tpu.memory_space<vmem>>, vector<1x4x128xbf16>
    %43 = vector.shape_cast %42 : vector<1x4x128xbf16> to vector<4x128xbf16>
    %cst_48 = arith.constant dense<0.000000e+00> : vector<64x128xf32>
    %44 = tpu.matmul %37, %43, %cst_48 {dimension_numbers = #tpu.dot_dimension_numbers<[1], [0], [0], [1], [0, 0, 1, 1], [], []>} : vector<64x4xbf16>, vector<4x128xbf16>, vector<64x128xf32> -> vector<64x128xf32>
    %45 = arith.addf %34, %44 : vector<64x128xf32>
    %c0_49 = arith.constant 0 : index
    %c3_50 = arith.constant 3 : index
    %c0_51 = arith.constant 0 : index
    %c0_52 = arith.constant 0 : index
    %c0_53 = arith.constant 0 : index
    %46 = vector.load %arg1[%c0_49, %c3_50, %c0_51, %c0_52, %c0_53] : memref<1x4x9x9x4xbf16, #tpu.memory_space<vmem>>, vector<1x1x8x8x4xbf16>
    %47 = vector.shape_cast %46 : vector<1x1x8x8x4xbf16> to vector<8x8x4xbf16>
    %48 = vector.shape_cast %47 : vector<8x8x4xbf16> to vector<64x4xbf16>
    %c4 = arith.constant 4 : index
    %c0_54 = arith.constant 0 : index
    %c0_55 = arith.constant 0 : index
    %49 = vector.load %arg2[%c4, %c0_54, %c0_55] : memref<9x4x128xbf16, #tpu.memory_space<vmem>>, vector<1x4x128xbf16>
    %50 = vector.shape_cast %49 : vector<1x4x128xbf16> to vector<4x128xbf16>
    %cst_56 = arith.constant dense<0.000000e+00> : vector<64x128xf32>
    %51 = tpu.matmul %48, %50, %cst_56 {dimension_numbers = #tpu.dot_dimension_numbers<[1], [0], [0], [1], [0, 0, 1, 1], [], []>} : vector<64x4xbf16>, vector<4x128xbf16>, vector<64x128xf32> -> vector<64x128xf32>
    %52 = arith.addf %41, %51 : vector<64x128xf32>
    %c4_57 = arith.constant 4 : index
    %c0_58 = arith.constant 0 : index
    %c0_59 = arith.constant 0 : index
    %53 = vector.load %arg6[%c4_57, %c0_58, %c0_59] : memref<9x4x128xbf16, #tpu.memory_space<vmem>>, vector<1x4x128xbf16>
    %54 = vector.shape_cast %53 : vector<1x4x128xbf16> to vector<4x128xbf16>
    %cst_60 = arith.constant dense<0.000000e+00> : vector<64x128xf32>
    %55 = tpu.matmul %48, %54, %cst_60 {dimension_numbers = #tpu.dot_dimension_numbers<[1], [0], [0], [1], [0, 0, 1, 1], [], []>} : vector<64x4xbf16>, vector<4x128xbf16>, vector<64x128xf32> -> vector<64x128xf32>
    %56 = arith.addf %45, %55 : vector<64x128xf32>
    %c0_61 = arith.constant 0 : index
    %c2_62 = arith.constant 2 : index
    %c0_63 = arith.constant 0 : index
    %c1_64 = arith.constant 1 : index
    %c0_65 = arith.constant 0 : index
    %57 = vector.load %arg1[%c0_61, %c2_62, %c0_63, %c1_64, %c0_65] : memref<1x4x9x9x4xbf16, #tpu.memory_space<vmem>>, vector<1x1x8x8x4xbf16>
    %58 = vector.shape_cast %57 : vector<1x1x8x8x4xbf16> to vector<8x8x4xbf16>
    %59 = vector.shape_cast %58 : vector<8x8x4xbf16> to vector<64x4xbf16>
    %c5 = arith.constant 5 : index
    %c0_66 = arith.constant 0 : index
    %c0_67 = arith.constant 0 : index
    %60 = vector.load %arg2[%c5, %c0_66, %c0_67] : memref<9x4x128xbf16, #tpu.memory_space<vmem>>, vector<1x4x128xbf16>
    %61 = vector.shape_cast %60 : vector<1x4x128xbf16> to vector<4x128xbf16>
    %cst_68 = arith.constant dense<0.000000e+00> : vector<64x128xf32>
    %62 = tpu.matmul %59, %61, %cst_68 {dimension_numbers = #tpu.dot_dimension_numbers<[1], [0], [0], [1], [0, 0, 1, 1], [], []>} : vector<64x4xbf16>, vector<4x128xbf16>, vector<64x128xf32> -> vector<64x128xf32>
    %63 = arith.addf %52, %62 : vector<64x128xf32>
    %c5_69 = arith.constant 5 : index
    %c0_70 = arith.constant 0 : index
    %c0_71 = arith.constant 0 : index
    %64 = vector.load %arg6[%c5_69, %c0_70, %c0_71] : memref<9x4x128xbf16, #tpu.memory_space<vmem>>, vector<1x4x128xbf16>
    %65 = vector.shape_cast %64 : vector<1x4x128xbf16> to vector<4x128xbf16>
    %cst_72 = arith.constant dense<0.000000e+00> : vector<64x128xf32>
    %66 = tpu.matmul %59, %65, %cst_72 {dimension_numbers = #tpu.dot_dimension_numbers<[1], [0], [0], [1], [0, 0, 1, 1], [], []>} : vector<64x4xbf16>, vector<4x128xbf16>, vector<64x128xf32> -> vector<64x128xf32>
    %67 = arith.addf %56, %66 : vector<64x128xf32>
    %c0_73 = arith.constant 0 : index
    %c0_74 = arith.constant 0 : index
    %c1_75 = arith.constant 1 : index
    %c0_76 = arith.constant 0 : index
    %c0_77 = arith.constant 0 : index
    %68 = vector.load %arg1[%c0_73, %c0_74, %c1_75, %c0_76, %c0_77] : memref<1x4x9x9x4xbf16, #tpu.memory_space<vmem>>, vector<1x1x8x8x4xbf16>
    %69 = vector.shape_cast %68 : vector<1x1x8x8x4xbf16> to vector<8x8x4xbf16>
    %70 = vector.shape_cast %69 : vector<8x8x4xbf16> to vector<64x4xbf16>
    %c6 = arith.constant 6 : index
    %c0_78 = arith.constant 0 : index
    %c0_79 = arith.constant 0 : index
    %71 = vector.load %arg2[%c6, %c0_78, %c0_79] : memref<9x4x128xbf16, #tpu.memory_space<vmem>>, vector<1x4x128xbf16>
    %72 = vector.shape_cast %71 : vector<1x4x128xbf16> to vector<4x128xbf16>
    %cst_80 = arith.constant dense<0.000000e+00> : vector<64x128xf32>
    %73 = tpu.matmul %70, %72, %cst_80 {dimension_numbers = #tpu.dot_dimension_numbers<[1], [0], [0], [1], [0, 0, 1, 1], [], []>} : vector<64x4xbf16>, vector<4x128xbf16>, vector<64x128xf32> -> vector<64x128xf32>
    %74 = arith.addf %63, %73 : vector<64x128xf32>
    %c6_81 = arith.constant 6 : index
    %c0_82 = arith.constant 0 : index
    %c0_83 = arith.constant 0 : index
    %75 = vector.load %arg6[%c6_81, %c0_82, %c0_83] : memref<9x4x128xbf16, #tpu.memory_space<vmem>>, vector<1x4x128xbf16>
    %76 = vector.shape_cast %75 : vector<1x4x128xbf16> to vector<4x128xbf16>
    %cst_84 = arith.constant dense<0.000000e+00> : vector<64x128xf32>
    %77 = tpu.matmul %70, %76, %cst_84 {dimension_numbers = #tpu.dot_dimension_numbers<[1], [0], [0], [1], [0, 0, 1, 1], [], []>} : vector<64x4xbf16>, vector<4x128xbf16>, vector<64x128xf32> -> vector<64x128xf32>
    %78 = arith.addf %67, %77 : vector<64x128xf32>
    %c0_85 = arith.constant 0 : index
    %c1_86 = arith.constant 1 : index
    %c1_87 = arith.constant 1 : index
    %c0_88 = arith.constant 0 : index
    %c0_89 = arith.constant 0 : index
    %79 = vector.load %arg1[%c0_85, %c1_86, %c1_87, %c0_88, %c0_89] : memref<1x4x9x9x4xbf16, #tpu.memory_space<vmem>>, vector<1x1x8x8x4xbf16>
    %80 = vector.shape_cast %79 : vector<1x1x8x8x4xbf16> to vector<8x8x4xbf16>
    %81 = vector.shape_cast %80 : vector<8x8x4xbf16> to vector<64x4xbf16>
    %c7 = arith.constant 7 : index
    %c0_90 = arith.constant 0 : index
    %c0_91 = arith.constant 0 : index
    %82 = vector.load %arg2[%c7, %c0_90, %c0_91] : memref<9x4x128xbf16, #tpu.memory_space<vmem>>, vector<1x4x128xbf16>
    %83 = vector.shape_cast %82 : vector<1x4x128xbf16> to vector<4x128xbf16>
    %cst_92 = arith.constant dense<0.000000e+00> : vector<64x128xf32>
    %84 = tpu.matmul %81, %83, %cst_92 {dimension_numbers = #tpu.dot_dimension_numbers<[1], [0], [0], [1], [0, 0, 1, 1], [], []>} : vector<64x4xbf16>, vector<4x128xbf16>, vector<64x128xf32> -> vector<64x128xf32>
    %85 = arith.addf %74, %84 : vector<64x128xf32>
    %c7_93 = arith.constant 7 : index
    %c0_94 = arith.constant 0 : index
    %c0_95 = arith.constant 0 : index
    %86 = vector.load %arg6[%c7_93, %c0_94, %c0_95] : memref<9x4x128xbf16, #tpu.memory_space<vmem>>, vector<1x4x128xbf16>
    %87 = vector.shape_cast %86 : vector<1x4x128xbf16> to vector<4x128xbf16>
    %cst_96 = arith.constant dense<0.000000e+00> : vector<64x128xf32>
    %88 = tpu.matmul %81, %87, %cst_96 {dimension_numbers = #tpu.dot_dimension_numbers<[1], [0], [0], [1], [0, 0, 1, 1], [], []>} : vector<64x4xbf16>, vector<4x128xbf16>, vector<64x128xf32> -> vector<64x128xf32>
    %89 = arith.addf %78, %88 : vector<64x128xf32>
    %c0_97 = arith.constant 0 : index
    %c0_98 = arith.constant 0 : index
    %c1_99 = arith.constant 1 : index
    %c1_100 = arith.constant 1 : index
    %c0_101 = arith.constant 0 : index
    %90 = vector.load %arg1[%c0_97, %c0_98, %c1_99, %c1_100, %c0_101] : memref<1x4x9x9x4xbf16, #tpu.memory_space<vmem>>, vector<1x1x8x8x4xbf16>
    %91 = vector.shape_cast %90 : vector<1x1x8x8x4xbf16> to vector<8x8x4xbf16>
    %92 = vector.shape_cast %91 : vector<8x8x4xbf16> to vector<64x4xbf16>
    %c8 = arith.constant 8 : index
    %c0_102 = arith.constant 0 : index
    %c0_103 = arith.constant 0 : index
    %93 = vector.load %arg2[%c8, %c0_102, %c0_103] : memref<9x4x128xbf16, #tpu.memory_space<vmem>>, vector<1x4x128xbf16>
    %94 = vector.shape_cast %93 : vector<1x4x128xbf16> to vector<4x128xbf16>
    %cst_104 = arith.constant dense<0.000000e+00> : vector<64x128xf32>
    %95 = tpu.matmul %92, %94, %cst_104 {dimension_numbers = #tpu.dot_dimension_numbers<[1], [0], [0], [1], [0, 0, 1, 1], [], []>} : vector<64x4xbf16>, vector<4x128xbf16>, vector<64x128xf32> -> vector<64x128xf32>
    %96 = arith.addf %85, %95 : vector<64x128xf32>
    %c8_105 = arith.constant 8 : index
    %c0_106 = arith.constant 0 : index
    %c0_107 = arith.constant 0 : index
    %97 = vector.load %arg6[%c8_105, %c0_106, %c0_107] : memref<9x4x128xbf16, #tpu.memory_space<vmem>>, vector<1x4x128xbf16>
    %98 = vector.shape_cast %97 : vector<1x4x128xbf16> to vector<4x128xbf16>
    %cst_108 = arith.constant dense<0.000000e+00> : vector<64x128xf32>
    %99 = tpu.matmul %92, %98, %cst_108 {dimension_numbers = #tpu.dot_dimension_numbers<[1], [0], [0], [1], [0, 0, 1, 1], [], []>} : vector<64x4xbf16>, vector<4x128xbf16>, vector<64x128xf32> -> vector<64x128xf32>
    %100 = arith.addf %89, %99 : vector<64x128xf32>
    %c0_109 = arith.constant 0 : index
    %c0_110 = arith.constant 0 : index
    %101 = vector.load %arg7[%c0_109, %c0_110] : memref<1x128xf32, #tpu.memory_space<vmem>>, vector<1x128xf32>
    %102 = vector.broadcast %101 : vector<1x128xf32> to vector<64x128xf32>
    %103 = arith.addf %100, %102 : vector<64x128xf32>
    %c0_111 = arith.constant 0 : index
    %c0_112 = arith.constant 0 : index
    %104 = vector.load %arg3[%c0_111, %c0_112] : memref<1x128xf32, #tpu.memory_space<vmem>>, vector<1x128xf32>
    %105 = vector.broadcast %104 : vector<1x128xf32> to vector<64x128xf32>
    %106 = arith.addf %96, %105 : vector<64x128xf32>
    %cst_113 = arith.constant 0.000000e+00 : f32
    %107 = vector.broadcast %cst_113 : f32 to vector<64x128xf32>
    %108 = arith.maximumf %106, %107 : vector<64x128xf32>
    %109 = arith.truncf %108 : vector<64x128xf32> to vector<64x128xbf16>
    %cst_114 = arith.constant 0.000000e+00 : bf16
    %110 = vector.broadcast %cst_114 : bf16 to vector<10x10x128xbf16>
    %c0_115 = arith.constant 0 : index
    %c0_116 = arith.constant 0 : index
    %c0_117 = arith.constant 0 : index
    %111 = vector.load %arg9[%c0_115, %c0_116, %c0_117] : memref<10x10x128xbf16, #tpu.memory_space<vmem>>, vector<10x10x128xbf16>
    tpu.vector_store %arg9[%c0_115, %c0_116, %c0_117], %110 {strides = array<i32>} : memref<10x10x128xbf16, #tpu.memory_space<vmem>>, vector<10x10x128xbf16>,
    %112 = vector.shape_cast %109 : vector<64x128xbf16> to vector<8x8x128xbf16>
    %c1_118 = arith.constant 1 : index
    %c1_119 = arith.constant 1 : index
    %c0_120 = arith.constant 0 : index
    %113 = vector.load %arg9[%c1_118, %c1_119, %c0_120] : memref<10x10x128xbf16, #tpu.memory_space<vmem>>, vector<8x8x128xbf16>
    tpu.vector_store %arg9[%c1_118, %c1_119, %c0_120], %112 {strides = array<i32>} : memref<10x10x128xbf16, #tpu.memory_space<vmem>>, vector<8x8x128xbf16>,
    %cst_121 = arith.constant 0.000000e+00 : f32
    %114 = vector.broadcast %cst_121 : f32 to vector<64x128xf32>
    %c0_122 = arith.constant 0 : index
    %c0_123 = arith.constant 0 : index
    %c0_124 = arith.constant 0 : index
    %115 = vector.load %arg9[%c0_122, %c0_123, %c0_124] : memref<10x10x128xbf16, #tpu.memory_space<vmem>>, vector<8x8x128xbf16>
    %116 = vector.shape_cast %115 : vector<8x8x128xbf16> to vector<64x128xbf16>
    %c0_125 = arith.constant 0 : index
    %c0_126 = arith.constant 0 : index
    %c0_127 = arith.constant 0 : index
    %117 = vector.load %arg4[%c0_125, %c0_126, %c0_127] : memref<9x128x128xbf16, #tpu.memory_space<vmem>>, vector<1x128x128xbf16>
    %118 = vector.shape_cast %117 : vector<1x128x128xbf16> to vector<128x128xbf16>
    %cst_128 = arith.constant dense<0.000000e+00> : vector<64x128xf32>
    %119 = tpu.matmul %116, %118, %cst_128 {dimension_numbers = #tpu.dot_dimension_numbers<[1], [0], [0], [1], [0, 0, 1, 1], [], []>} : vector<64x128xbf16>, vector<128x128xbf16>, vector<64x128xf32> -> vector<64x128xf32>
    %120 = arith.addf %114, %119 : vector<64x128xf32>
    %c0_129 = arith.constant 0 : index
    %c1_130 = arith.constant 1 : index
    %c0_131 = arith.constant 0 : index
    %121 = vector.load %arg9[%c0_129, %c1_130, %c0_131] : memref<10x10x128xbf16, #tpu.memory_space<vmem>>, vector<8x8x128xbf16>
    %122 = vector.shape_cast %121 : vector<8x8x128xbf16> to vector<64x128xbf16>
    %c1_132 = arith.constant 1 : index
    %c0_133 = arith.constant 0 : index
    %c0_134 = arith.constant 0 : index
    %123 = vector.load %arg4[%c1_132, %c0_133, %c0_134] : memref<9x128x128xbf16, #tpu.memory_space<vmem>>, vector<1x128x128xbf16>
    %124 = vector.shape_cast %123 : vector<1x128x128xbf16> to vector<128x128xbf16>
    %cst_135 = arith.constant dense<0.000000e+00> : vector<64x128xf32>
    %125 = tpu.matmul %122, %124, %cst_135 {dimension_numbers = #tpu.dot_dimension_numbers<[1], [0], [0], [1], [0, 0, 1, 1], [], []>} : vector<64x128xbf16>, vector<128x128xbf16>, vector<64x128xf32> -> vector<64x128xf32>
    %126 = arith.addf %120, %125 : vector<64x128xf32>
    %c0_136 = arith.constant 0 : index
    %c2_137 = arith.constant 2 : index
    %c0_138 = arith.constant 0 : index
    %127 = vector.load %arg9[%c0_136, %c2_137, %c0_138] : memref<10x10x128xbf16, #tpu.memory_space<vmem>>, vector<8x8x128xbf16>
    %128 = vector.shape_cast %127 : vector<8x8x128xbf16> to vector<64x128xbf16>
    %c2_139 = arith.constant 2 : index
    %c0_140 = arith.constant 0 : index
    %c0_141 = arith.constant 0 : index
    %129 = vector.load %arg4[%c2_139, %c0_140, %c0_141] : memref<9x128x128xbf16, #tpu.memory_space<vmem>>, vector<1x128x128xbf16>
    %130 = vector.shape_cast %129 : vector<1x128x128xbf16> to vector<128x128xbf16>
    %cst_142 = arith.constant dense<0.000000e+00> : vector<64x128xf32>
    %131 = tpu.matmul %128, %130, %cst_142 {dimension_numbers = #tpu.dot_dimension_numbers<[1], [0], [0], [1], [0, 0, 1, 1], [], []>} : vector<64x128xbf16>, vector<128x128xbf16>, vector<64x128xf32> -> vector<64x128xf32>
    %132 = arith.addf %126, %131 : vector<64x128xf32>
    %c1_143 = arith.constant 1 : index
    %c0_144 = arith.constant 0 : index
    %c0_145 = arith.constant 0 : index
    %133 = vector.load %arg9[%c1_143, %c0_144, %c0_145] : memref<10x10x128xbf16, #tpu.memory_space<vmem>>, vector<8x8x128xbf16>
    %134 = vector.shape_cast %133 : vector<8x8x128xbf16> to vector<64x128xbf16>
    %c3_146 = arith.constant 3 : index
    %c0_147 = arith.constant 0 : index
    %c0_148 = arith.constant 0 : index
    %135 = vector.load %arg4[%c3_146, %c0_147, %c0_148] : memref<9x128x128xbf16, #tpu.memory_space<vmem>>, vector<1x128x128xbf16>
    %136 = vector.shape_cast %135 : vector<1x128x128xbf16> to vector<128x128xbf16>
    %cst_149 = arith.constant dense<0.000000e+00> : vector<64x128xf32>
    %137 = tpu.matmul %134, %136, %cst_149 {dimension_numbers = #tpu.dot_dimension_numbers<[1], [0], [0], [1], [0, 0, 1, 1], [], []>} : vector<64x128xbf16>, vector<128x128xbf16>, vector<64x128xf32> -> vector<64x128xf32>
    %138 = arith.addf %132, %137 : vector<64x128xf32>
    %c1_150 = arith.constant 1 : index
    %c1_151 = arith.constant 1 : index
    %c0_152 = arith.constant 0 : index
    %139 = vector.load %arg9[%c1_150, %c1_151, %c0_152] : memref<10x10x128xbf16, #tpu.memory_space<vmem>>, vector<8x8x128xbf16>
    %140 = vector.shape_cast %139 : vector<8x8x128xbf16> to vector<64x128xbf16>
    %c4_153 = arith.constant 4 : index
    %c0_154 = arith.constant 0 : index
    %c0_155 = arith.constant 0 : index
    %141 = vector.load %arg4[%c4_153, %c0_154, %c0_155] : memref<9x128x128xbf16, #tpu.memory_space<vmem>>, vector<1x128x128xbf16>
    %142 = vector.shape_cast %141 : vector<1x128x128xbf16> to vector<128x128xbf16>
    %cst_156 = arith.constant dense<0.000000e+00> : vector<64x128xf32>
    %143 = tpu.matmul %140, %142, %cst_156 {dimension_numbers = #tpu.dot_dimension_numbers<[1], [0], [0], [1], [0, 0, 1, 1], [], []>} : vector<64x128xbf16>, vector<128x128xbf16>, vector<64x128xf32> -> vector<64x128xf32>
    %144 = arith.addf %138, %143 : vector<64x128xf32>
    %c1_157 = arith.constant 1 : index
    %c2_158 = arith.constant 2 : index
    %c0_159 = arith.constant 0 : index
    %145 = vector.load %arg9[%c1_157, %c2_158, %c0_159] : memref<10x10x128xbf16, #tpu.memory_space<vmem>>, vector<8x8x128xbf16>
    %146 = vector.shape_cast %145 : vector<8x8x128xbf16> to vector<64x128xbf16>
    %c5_160 = arith.constant 5 : index
    %c0_161 = arith.constant 0 : index
    %c0_162 = arith.constant 0 : index
    %147 = vector.load %arg4[%c5_160, %c0_161, %c0_162] : memref<9x128x128xbf16, #tpu.memory_space<vmem>>, vector<1x128x128xbf16>
    %148 = vector.shape_cast %147 : vector<1x128x128xbf16> to vector<128x128xbf16>
    %cst_163 = arith.constant dense<0.000000e+00> : vector<64x128xf32>
    %149 = tpu.matmul %146, %148, %cst_163 {dimension_numbers = #tpu.dot_dimension_numbers<[1], [0], [0], [1], [0, 0, 1, 1], [], []>} : vector<64x128xbf16>, vector<128x128xbf16>, vector<64x128xf32> -> vector<64x128xf32>
    %150 = arith.addf %144, %149 : vector<64x128xf32>
    %c2_164 = arith.constant 2 : index
    %c0_165 = arith.constant 0 : index
    %c0_166 = arith.constant 0 : index
    %151 = vector.load %arg9[%c2_164, %c0_165, %c0_166] : memref<10x10x128xbf16, #tpu.memory_space<vmem>>, vector<8x8x128xbf16>
    %152 = vector.shape_cast %151 : vector<8x8x128xbf16> to vector<64x128xbf16>
    %c6_167 = arith.constant 6 : index
    %c0_168 = arith.constant 0 : index
    %c0_169 = arith.constant 0 : index
    %153 = vector.load %arg4[%c6_167, %c0_168, %c0_169] : memref<9x128x128xbf16, #tpu.memory_space<vmem>>, vector<1x128x128xbf16>
    %154 = vector.shape_cast %153 : vector<1x128x128xbf16> to vector<128x128xbf16>
    %cst_170 = arith.constant dense<0.000000e+00> : vector<64x128xf32>
    %155 = tpu.matmul %152, %154, %cst_170 {dimension_numbers = #tpu.dot_dimension_numbers<[1], [0], [0], [1], [0, 0, 1, 1], [], []>} : vector<64x128xbf16>, vector<128x128xbf16>, vector<64x128xf32> -> vector<64x128xf32>
    %156 = arith.addf %150, %155 : vector<64x128xf32>
    %c2_171 = arith.constant 2 : index
    %c1_172 = arith.constant 1 : index
    %c0_173 = arith.constant 0 : index
    %157 = vector.load %arg9[%c2_171, %c1_172, %c0_173] : memref<10x10x128xbf16, #tpu.memory_space<vmem>>, vector<8x8x128xbf16>
    %158 = vector.shape_cast %157 : vector<8x8x128xbf16> to vector<64x128xbf16>
    %c7_174 = arith.constant 7 : index
    %c0_175 = arith.constant 0 : index
    %c0_176 = arith.constant 0 : index
    %159 = vector.load %arg4[%c7_174, %c0_175, %c0_176] : memref<9x128x128xbf16, #tpu.memory_space<vmem>>, vector<1x128x128xbf16>
    %160 = vector.shape_cast %159 : vector<1x128x128xbf16> to vector<128x128xbf16>
    %cst_177 = arith.constant dense<0.000000e+00> : vector<64x128xf32>
    %161 = tpu.matmul %158, %160, %cst_177 {dimension_numbers = #tpu.dot_dimension_numbers<[1], [0], [0], [1], [0, 0, 1, 1], [], []>} : vector<64x128xbf16>, vector<128x128xbf16>, vector<64x128xf32> -> vector<64x128xf32>
    %162 = arith.addf %156, %161 : vector<64x128xf32>
    %c2_178 = arith.constant 2 : index
    %c2_179 = arith.constant 2 : index
    %c0_180 = arith.constant 0 : index
    %163 = vector.load %arg9[%c2_178, %c2_179, %c0_180] : memref<10x10x128xbf16, #tpu.memory_space<vmem>>, vector<8x8x128xbf16>
    %164 = vector.shape_cast %163 : vector<8x8x128xbf16> to vector<64x128xbf16>
    %c8_181 = arith.constant 8 : index
    %c0_182 = arith.constant 0 : index
    %c0_183 = arith.constant 0 : index
    %165 = vector.load %arg4[%c8_181, %c0_182, %c0_183] : memref<9x128x128xbf16, #tpu.memory_space<vmem>>, vector<1x128x128xbf16>
    %166 = vector.shape_cast %165 : vector<1x128x128xbf16> to vector<128x128xbf16>
    %cst_184 = arith.constant dense<0.000000e+00> : vector<64x128xf32>
    %167 = tpu.matmul %164, %166, %cst_184 {dimension_numbers = #tpu.dot_dimension_numbers<[1], [0], [0], [1], [0, 0, 1, 1], [], []>} : vector<64x128xbf16>, vector<128x128xbf16>, vector<64x128xf32> -> vector<64x128xf32>
    %168 = arith.addf %162, %167 : vector<64x128xf32>
    %c0_185 = arith.constant 0 : index
    %c0_186 = arith.constant 0 : index
    %169 = vector.load %arg5[%c0_185, %c0_186] : memref<1x128xf32, #tpu.memory_space<vmem>>, vector<1x128xf32>
    %170 = vector.broadcast %169 : vector<1x128xf32> to vector<64x128xf32>
    %171 = arith.addf %168, %170 : vector<64x128xf32>
    %172 = arith.addf %171, %103 : vector<64x128xf32>
    %cst_187 = arith.constant 0.000000e+00 : f32
    %173 = vector.broadcast %cst_187 : f32 to vector<64x128xf32>
    %174 = arith.maximumf %172, %173 : vector<64x128xf32>
    %c0_188 = arith.constant 0 : index
    %c0_189 = arith.constant 0 : index
    %c0_190 = arith.constant 0 : index
    %175 = vector.load %arg8[%c0_188, %c0_189, %c0_190] : memref<1x64x128xf32, #tpu.memory_space<vmem>>, vector<1x64x128xf32>
    %176 = vector.shape_cast %175 : vector<1x64x128xf32> to vector<64x128xf32>
    %177 = vector.shape_cast %174 : vector<64x128xf32> to vector<1x64x128xf32>
    tpu.vector_store %arg8[%c0_188, %c0_189, %c0_190], %177 {strides = array<i32>} : memref<1x64x128xf32, #tpu.memory_space<vmem>>, vector<1x64x128xf32>,
    return
  }
  func.func @transform_0(%arg0: i32) -> (i32, i32, i32, i32, i32) {
    %c0_i32 = arith.constant 0 : i32
    %c0_i32_0 = arith.constant 0 : i32
    %c0_i32_1 = arith.constant 0 : i32
    %c0_i32_2 = arith.constant 0 : i32
    %c0_i32_3 = arith.constant 0 : i32
    return %arg0, %c0_i32, %c0_i32_0, %c0_i32_1, %c0_i32_2 : i32, i32, i32, i32, i32
  }
  func.func @transform_1(%arg0: i32) -> (i32, i32, i32) {
    %c0_i32 = arith.constant 0 : i32
    %c0_i32_0 = arith.constant 0 : i32
    %c0_i32_1 = arith.constant 0 : i32
    %c0_i32_2 = arith.constant 0 : i32
    return %c0_i32, %c0_i32_0, %c0_i32_1 : i32, i32, i32
  }
  func.func @transform_2(%arg0: i32) -> (i32, i32) {
    %c0_i32 = arith.constant 0 : i32
    %c0_i32_0 = arith.constant 0 : i32
    %c0_i32_1 = arith.constant 0 : i32
    return %c0_i32, %c0_i32_0 : i32, i32
  }
  func.func @transform_3(%arg0: i32) -> (i32, i32, i32) {
    %c0_i32 = arith.constant 0 : i32
    %c0_i32_0 = arith.constant 0 : i32
    %c0_i32_1 = arith.constant 0 : i32
    %c0_i32_2 = arith.constant 0 : i32
    return %c0_i32, %c0_i32_0, %c0_i32_1 : i32, i32, i32
  }
  func.func @transform_4(%arg0: i32) -> (i32, i32) {
    %c0_i32 = arith.constant 0 : i32
    %c0_i32_0 = arith.constant 0 : i32
    %c0_i32_1 = arith.constant 0 : i32
    return %c0_i32, %c0_i32_0 : i32, i32
  }
  func.func @transform_5(%arg0: i32) -> (i32, i32, i32) {
    %c0_i32 = arith.constant 0 : i32
    %c0_i32_0 = arith.constant 0 : i32
    %c0_i32_1 = arith.constant 0 : i32
    %c0_i32_2 = arith.constant 0 : i32
    return %c0_i32, %c0_i32_0, %c0_i32_1 : i32, i32, i32
  }
  func.func @transform_6(%arg0: i32) -> (i32, i32) {
    %c0_i32 = arith.constant 0 : i32
    %c0_i32_0 = arith.constant 0 : i32
    %c0_i32_1 = arith.constant 0 : i32
    return %c0_i32, %c0_i32_0 : i32, i32
  }
  func.func @transform_7(%arg0: i32) -> (i32, i32, i32) {
    %c0_i32 = arith.constant 0 : i32
    %c0_i32_0 = arith.constant 0 : i32
    %c0_i32_1 = arith.constant 0 : i32
    return %arg0, %c0_i32, %c0_i32_0 : i32, i32, i32
  }
}

</mosaic_0001>

<llo_original>
// kernel: basic_block_forward.1
$region0: #{basic_block_forward.1}
  #allocation0 [shape = 'u32[]', space=smem, size = 0x4, offset = 0x4, fixed_abs, tag = 'smem constant byte address 0x4 - core index']
  #allocation1 [shape = 'u32[144,128]{1,0:T(1,128)}', space=vmem, size = 0x12000, scoped, tag = 'internal scratch']
  #allocation2 [shape = 'bf16[10,10,128]{2,1,0:T(8,128)(2,1)}', space=vmem, size = 0xa000, scoped, tag = 'scratch operand']
  %s0 = inlined_call_operand.vmem [shape: bf16[2,4,9,9,4], index: 0, kind: input, shape index: {}]
  %s1 = inlined_call_operand.vmem [shape: bf16[9,4,128], index: 1, kind: input, shape index: {}]
  %s2 = inlined_call_operand.vmem [shape: f32[1,128], index: 2, kind: input, shape index: {}]
  %s3 = inlined_call_operand.vmem [shape: bf16[9,128,128], index: 3, kind: input, shape index: {}]
  %s4 = inlined_call_operand.vmem [shape: f32[1,128], index: 4, kind: input, shape index: {}]
  %s5 = inlined_call_operand.vmem [shape: bf16[9,4,128], index: 5, kind: input, shape index: {}]
  %s6 = inlined_call_operand.vmem [shape: f32[1,128], index: 6, kind: input, shape index: {}]
  %s7 = inlined_call_operand.vmem [shape: f32[2,64,128], index: 7, kind: output, shape index: {}]
  %s8 = sld [smem:[#allocation0]]
  $region61: #{basic_block_forward.1} parent=0
    _
  %s10 = ssub.s32 1, %s8
  %s11 = scalar_select 0, %s10, %s8
  loop: start=0, step=1, limit=4
  $region2: #{basic_block_forward.1} parent=0 // loop_pre_header
    _
  $region3: #{basic_block_forward.1} parent=0 // loop_header
    %s13 = sphi 0, %s17
    %p14 = scmp.ge.s32.totalorder %s13, 4
    %s23 = sphi 0, %s25
    %s26 = sphi 0, %s23
    %s27 = sphi 0, %s26
    %s43 = sphi 0, %s27
    %s47 = sphi 0, %s47
    %s49 = sphi 0, %s47
    %s50 = sphi 0, %s49
    %s64 = sphi 0, %s50
    %s68 = sphi 0, %s68
    %s70 = sphi 0, %s68
    %s71 = sphi 0, %s70
    %s85 = sphi 0, %s71
    %s89 = sphi 0, %s89
    %s91 = sphi 0, %s89
    %s92 = sphi 0, %s91
    %s106 = sphi 0, %s92
    %s110 = sphi 0, %s110
    %s112 = sphi 0, %s110
    %s113 = sphi 0, %s112
    %s127 = sphi 0, %s113
    %s131 = sphi 0, %s131
    %s133 = sphi 0, %s131
    %s134 = sphi 0, %s133
    %s148 = sphi 0, %s134
    %s152 = sphi 0, %s152
    %s154 = sphi 0, %s152
    %s155 = sphi 0, %s154
    %s169 = sphi 0, %s155
    %s175 = sphi 0, %s177
    %s178 = sphi 0, %s175
    %s179 = sphi 0, %s178
    %s195 = sphi 0, %s179
  $region4: #{basic_block_forward.1} parent=0 // loop_header_branch
    %16 = sbr.rel (%p14) target = $region8
  $region5: #{basic_block_forward.1} parent=0 // loop_body
    %s18 = ssub.s32 %s13, 1
    %s19 = ssub.s32 %s13, 2
    %s20 = sadd.s32 %s13, 1
    %s21 = ssub.s32 %s13, %s20
    %p22 = scmp.eq.s32.totalorder %s21, 0
    %s24 = sadd.s32 %s23, 1
    %s25 = scalar_select %p22, %s23, %s24
    %p28 = pneg %p22
    %p29 = scmp.eq.s32.totalorder %s13, 1
    %p30 = por %p28, %p29
    %p31 = scmp.ne.s32.totalorder %s23, %s26
    %p32 = scmp.eq.s32.totalorder %s13, 0
    %p33 = por %p31, %p32
    %p34 = scmp.ne.s32.totalorder %s23, %s26
    %p35 = scmp.eq.s32.totalorder %s18, 1
    %p36 = por %p34, %p35
    %p37 = scmp.ne.s32.totalorder %s26, %s27
    %p38 = scmp.eq.s32.totalorder %s18, 0
    %p39 = por %p37, %p38
    %p40 = scmp.ne.s32.totalorder %s26, %s27
    %p41 = scmp.eq.s32.totalorder %s19, 1
    %p42 = por %p40, %p41
    %p44 = scmp.ne.s32.totalorder %s27, %s43
    %p45 = scmp.eq.s32.totalorder %s19, 0
    %p46 = por %p44, %p45
    %s48 = sadd.s32 %s47, 1
    %p51 = scmp.eq.s32.totalorder %s13, 1
    %p52 = scmp.ne.s32.totalorder %s47, %s49
    %p53 = scmp.eq.s32.totalorder %s13, 0
    %p54 = por %p52, %p53
    %p55 = scmp.ne.s32.totalorder %s47, %s49
    %p56 = scmp.eq.s32.totalorder %s18, 1
    %p57 = por %p55, %p56
    %p58 = scmp.ne.s32.totalorder %s49, %s50
    %p59 = scmp.eq.s32.totalorder %s18, 0
    %p60 = por %p58, %p59
    %p61 = scmp.ne.s32.totalorder %s49, %s50
    %p62 = scmp.eq.s32.totalorder %s19, 1
    %p63 = por %p61, %p62
    %p65 = scmp.ne.s32.totalorder %s50, %s64
    %p66 = scmp.eq.s32.totalorder %s19, 0
    %p67 = por %p65, %p66
    %s69 = sadd.s32 %s68, 1
    %p72 = scmp.eq.s32.totalorder %s13, 1
    %p73 = scmp.ne.s32.totalorder %s68, %s70
    %p74 = scmp.eq.s32.totalorder %s13, 0
    %p75 = por %p73, %p74
    %p76 = scmp.ne.s32.totalorder %s68, %s70
    %p77 = scmp.eq.s32.totalorder %s18, 1
    %p78 = por %p76, %p77
    %p79 = scmp.ne.s32.totalorder %s70, %s71
    %p80 = scmp.eq.s32.totalorder %s18, 0
    %p81 = por %p79, %p80
    %p82 = scmp.ne.s32.totalorder %s70, %s71
    %p83 = scmp.eq.s32.totalorder %s19, 1
    %p84 = por %p82, %p83
    %p86 = scmp.ne.s32.totalorder %s71, %s85
    %p87 = scmp.eq.s32.totalorder %s19, 0
    %p88 = por %p86, %p87
    %s90 = sadd.s32 %s89, 1
    %p93 = scmp.eq.s32.totalorder %s13, 1
    %p94 = scmp.ne.s32.totalorder %s89, %s91
    %p95 = scmp.eq.s32.totalorder %s13, 0
    %p96 = por %p94, %p95
    %p97 = scmp.ne.s32.totalorder %s89, %s91
    %p98 = scmp.eq.s32.totalorder %s18, 1
    %p99 = por %p97, %p98
    %p100 = scmp.ne.s32.totalorder %s91, %s92
    %p101 = scmp.eq.s32.totalorder %s18, 0
    %p102 = por %p100, %p101
    %p103 = scmp.ne.s32.totalorder %s91, %s92
    %p104 = scmp.eq.s32.totalorder %s19, 1
    %p105 = por %p103, %p104
    %p107 = scmp.ne.s32.totalorder %s92, %s106
    %p108 = scmp.eq.s32.totalorder %s19, 0
    %p109 = por %p107, %p108
    %s111 = sadd.s32 %s110, 1
    %p114 = scmp.eq.s32.totalorder %s13, 1
    %p115 = scmp.ne.s32.totalorder %s110, %s112
    %p116 = scmp.eq.s32.totalorder %s13, 0
    %p117 = por %p115, %p116
    %p118 = scmp.ne.s32.totalorder %s110, %s112
    %p119 = scmp.eq.s32.totalorder %s18, 1
    %p120 = por %p118, %p119
    %p121 = scmp.ne.s32.totalorder %s112, %s113
    %p122 = scmp.eq.s32.totalorder %s18, 0
    %p123 = por %p121, %p122
    %p124 = scmp.ne.s32.totalorder %s112, %s113
    %p125 = scmp.eq.s32.totalorder %s19, 1
    %p126 = por %p124, %p125
    %p128 = scmp.ne.s32.totalorder %s113, %s127
    %p129 = scmp.eq.s32.totalorder %s19, 0
    %p130 = por %p128, %p129
    %s132 = sadd.s32 %s131, 1
    %p135 = scmp.eq.s32.totalorder %s13, 1
    %p136 = scmp.ne.s32.totalorder %s131, %s133
    %p137 = scmp.eq.s32.totalorder %s13, 0
    %p138 = por %p136, %p137
    %p139 = scmp.ne.s32.totalorder %s131, %s133
    %p140 = scmp.eq.s32.totalorder %s18, 1
    %p141 = por %p139, %p140
    %p142 = scmp.ne.s32.totalorder %s133, %s134
    %p143 = scmp.eq.s32.totalorder %s18, 0
    %p144 = por %p142, %p143
    %p145 = scmp.ne.s32.totalorder %s133, %s134
    %p146 = scmp.eq.s32.totalorder %s19, 1
    %p147 = por %p145, %p146
    %p149 = scmp.ne.s32.totalorder %s134, %s148
    %p150 = scmp.eq.s32.totalorder %s19, 0
    %p151 = por %p149, %p150
    %s153 = sadd.s32 %s152, 1
    %p156 = scmp.eq.s32.totalorder %s13, 1
    %p157 = scmp.ne.s32.totalorder %s152, %s154
    %p158 = scmp.eq.s32.totalorder %s13, 0
    %p159 = por %p157, %p158
    %p160 = scmp.ne.s32.totalorder %s152, %s154
    %p161 = scmp.eq.s32.totalorder %s18, 1
    %p162 = por %p160, %p161
    %p163 = scmp.ne.s32.totalorder %s154, %s155
    %p164 = scmp.eq.s32.totalorder %s18, 0
    %p165 = por %p163, %p164
    %p166 = scmp.ne.s32.totalorder %s154, %s155
    %p167 = scmp.eq.s32.totalorder %s19, 1
    %p168 = por %p166, %p167
    %p170 = scmp.ne.s32.totalorder %s155, %s169
    %p171 = scmp.eq.s32.totalorder %s19, 0
    %p172 = por %p170, %p171
    %s173 = ssub.s32 %s13, %s20
    %p174 = scmp.eq.s32.totalorder %s173, 0
    %s176 = sadd.s32 %s175, 1
    %s177 = scalar_select %p174, %s175, %s176
    %p180 = pneg %p174
    %p181 = scmp.eq.s32.totalorder %s13, 1
    %p182 = por %p180, %p181
    %p183 = scmp.ne.s32.totalorder %s175, %s178
    %p184 = scmp.eq.s32.totalorder %s13, 0
    %p185 = por %p183, %p184
    %p186 = scmp.ne.s32.totalorder %s175, %s178
    %p187 = scmp.eq.s32.totalorder %s18, 1
    %p188 = por %p186, %p187
    %p189 = scmp.ne.s32.totalorder %s178, %s179
    %p190 = scmp.eq.s32.totalorder %s18, 0
    %p191 = por %p189, %p190
    %p192 = scmp.ne.s32.totalorder %s178, %s179
    %p193 = scmp.eq.s32.totalorder %s19, 1
    %p194 = por %p192, %p193
    %p196 = scmp.ne.s32.totalorder %s179, %s195
    %p197 = scmp.eq.s32.totalorder %s19, 0
    %p198 = por %p196, %p197
    %p199 = scmp.le.s32.totalorder 1, %s13
    %p200 = scmp.lt.s32.totalorder %s13, 3
    %p201 = pnand %p199, %p200
    %p202 = pneg %p201
    // Predicated region
    $region9: #{basic_block_forward.1} parent=5 // pred_check
      _
    $region10: #{basic_block_forward.1} parent=5 // pred_check_branch
      %204 = sbr.rel (%p201) target = $region12
    $region11: #{basic_block_forward.1} parent=5 // pred_region
      %s205 = ssub.s32 %s13, 1
      // Predicated region
      $region13: #{basic_block_forward.1} parent=11 // pred_check
        %p206 = pneg %p60
      $region14: #{basic_block_forward.1} parent=11 // pred_check_branch
        %208 = sbr.rel (%p206) target = $region16
      $region15: #{basic_block_forward.1} parent=11 // pred_region
        _
      $region16: #{basic_block_forward.1} parent=11 // pred_fallthru
        _
      // Predicated region
      $region17: #{basic_block_forward.1} parent=11 // pred_check
        %p209 = pneg %p81
      $region18: #{basic_block_forward.1} parent=11 // pred_check_branch
        %211 = sbr.rel (%p209) target = $region20
      $region19: #{basic_block_forward.1} parent=11 // pred_region
        _
      $region20: #{basic_block_forward.1} parent=11 // pred_fallthru
        _
      // Predicated region
      $region21: #{basic_block_forward.1} parent=11 // pred_check
        %p212 = pneg %p102
      $region22: #{basic_block_forward.1} parent=11 // pred_check_branch
        %214 = sbr.rel (%p212) target = $region24
      $region23: #{basic_block_forward.1} parent=11 // pred_region
        _
      $region24: #{basic_block_forward.1} parent=11 // pred_fallthru
        _
      // Predicated region
      $region25: #{basic_block_forward.1} parent=11 // pred_check
        %p215 = pneg %p123
      $region26: #{basic_block_forward.1} parent=11 // pred_check_branch
        %217 = sbr.rel (%p215) target = $region28
      $region27: #{basic_block_forward.1} parent=11 // pred_region
        _
      $region28: #{basic_block_forward.1} parent=11 // pred_fallthru
        _
      // Predicated region
      $region29: #{basic_block_forward.1} parent=11 // pred_check
        %p218 = pneg %p144
      $region30: #{basic_block_forward.1} parent=11 // pred_check_branch
        %220 = sbr.rel (%p218) target = $region32
      $region31: #{basic_block_forward.1} parent=11 // pred_region
        _
      $region32: #{basic_block_forward.1} parent=11 // pred_fallthru
        _
      // Predicated region
      $region33: #{basic_block_forward.1} parent=11 // pred_check
        %p221 = pneg %p165
      $region34: #{basic_block_forward.1} parent=11 // pred_check_branch
        %223 = sbr.rel (%p221) target = $region36
      $region35: #{basic_block_forward.1} parent=11 // pred_region
        _
      $region36: #{basic_block_forward.1} parent=11 // pred_fallthru
        _
    $region12: #{basic_block_forward.1} parent=5 // pred_fallthru
      _
    %p224 = scmp.lt.s32.totalorder %s13, 2
    // Predicated region
    $region37: #{basic_block_forward.1} parent=5 // pred_check
      %p225 = pneg %p224
    $region38: #{basic_block_forward.1} parent=5 // pred_check_branch
      %227 = sbr.rel (%p225) target = $region40
    $region39: #{basic_block_forward.1} parent=5 // pred_region
      // Predicated region
      $region41: #{basic_block_forward.1} parent=39 // pred_check
        %p228 = pneg %p33
      $region42: #{basic_block_forward.1} parent=39 // pred_check_branch
        %230 = sbr.rel (%p228) target = $region44
      $region43: #{basic_block_forward.1} parent=39 // pred_region
        %p231 = scmp.lt.s32.totalorder %s13, 1
        %s232 = scalar_select %p231, %s13, 1
        %s233 = smul.addr %s232, 72
        %s234 = smul.addr %s233, 4
        %s235 = scalar_lea.vmem %s0, %s234
      $region44: #{basic_block_forward.1} parent=39 // pred_fallthru
        _
    $region40: #{basic_block_forward.1} parent=5 // pred_fallthru
      _
    %p236 = scmp.le.s32.totalorder 1, %s13
    %p237 = scmp.lt.s32.totalorder %s13, 3
    %p238 = pnand %p236, %p237
    %p239 = pneg %p238
    // Predicated region
    $region45: #{basic_block_forward.1} parent=5 // pred_check
      _
    $region46: #{basic_block_forward.1} parent=5 // pred_check_branch
      %241 = sbr.rel (%p238) target = $region48
    $region47: #{basic_block_forward.1} parent=5 // pred_region
      %s242 = ssub.s32 %s13, 1
      %p243 = scmp.lt.s32.totalorder %s18, 1
      %s244 = scalar_select %p243, %s18, 1
      %s245 = smul.addr %s244, 72
      %s246 = smul.addr %s245, 4
      %s247 = scalar_lea.vmem %s0, %s246
      %p248 = pneg %p39
      %p249 = pneg %p36
      %p250 = pneg %p60
      %p251 = pneg %p57
      %p252 = pneg %p81
      %p253 = pneg %p78
      %p254 = pneg %p102
      %p255 = pneg %p99
      %p256 = pneg %p123
      %p257 = pneg %p120
      %p258 = pneg %p144
      %p259 = pneg %p141
      %p260 = pneg %p165
      %p261 = pneg %p162
      %p262 = pneg %p191
      %p263 = pneg %p188
      %p264 = scmp.lt.s32.totalorder %s18, 1
      %s265 = scalar_select %p264, %s18, 1
      %s266 = smul.addr %s265, 8
      %s267 = smul.addr %s266, 8
      %s268 = scalar_lea.vmem %s7, %s267
      %p269 = scmp.lt.s32.totalorder %s18, 1
      %s270 = scalar_select %p269, %s18, 1
      %s271 = smul.addr %s270, 72
      %s272 = smul.addr %s271, 4
      %s273 = scalar_lea.vmem %s0, %s272
      %p274 = scmp.lt.s32.totalorder %s18, 1
      %s275 = scalar_select %p274, %s18, 1
      %s276 = smul.addr %s275, 8
      %s277 = smul.addr %s276, 8
      %s278 = scalar_lea.vmem %s7, %s277
      %v280 = vld [vmem:[%s273] sm:$0xf]
      %v281 = vld [vmem:[%s273 + $0x8] sm:$0xf]
      %v282 = vld [vmem:[%s273 + $0x10] sm:$0xf]
      %v283 = vld [vmem:[%s273 + $0x18] sm:$0xf]
      %v284 = vld [vmem:[%s273 + $0x20] sm:$0xf]
      %v285 = vld [vmem:[%s273 + $0x28] sm:$0xf]
      %v286 = vld [vmem:[%s273 + $0x30] sm:$0xf]
      %v287 = vld [vmem:[%s273 + $0x38] sm:$0xf]
      %v288 = vld [vmem:[%s1] sm:$0x3]
      %v289 = vld [vmem:[%s5] sm:$0x3]
      %s290 = scalar_lea.vmem %s273, 72
      %v291 = vld [vmem:[%s290] sm:$0xf]
      %v292 = vld [vmem:[%s290 + $0x8] sm:$0xf]
      %v293 = vld [vmem:[%s290 + $0x10] sm:$0xf]
      %v294 = vld [vmem:[%s290 + $0x18] sm:$0xf]
      %v295 = vld [vmem:[%s290 + $0x20] sm:$0xf]
      %v296 = vld [vmem:[%s290 + $0x28] sm:$0xf]
      %v297 = vld [vmem:[%s290 + $0x30] sm:$0xf]
      %v298 = vld [vmem:[%s290 + $0x38] sm:$0xf]
      %s299 = scalar_lea.vmem %s1, 2
      %v300 = vld [vmem:[%s299] sm:$0x3]
      %v309 = vunpack.c.l.b16 %v291
      %v310 = vunpack.c.l.b16 %v292
      %v311 = vunpack.c.l.b16 %v293
      %v312 = vunpack.c.l.b16 %v294
      %v313 = vunpack.c.l.b16 %v295
      %v314 = vunpack.c.l.b16 %v296
      %v315 = vunpack.c.l.b16 %v297
      %v316 = vunpack.c.l.b16 %v298
      %v317 = vpack.c.b16 %v310, %v309
      %v318 = vpack.c.b16 %v312, %v311
      %v319 = vpack.c.b16 %v314, %v313
      %v320 = vpack.c.b16 %v316, %v315
      %vm321 = vcmask 31744
      %v323 = vsel %vm321, %v317, 0
      %v326 = vsel %vm321, %v318, 0
      %v329 = vsel %vm321, %v319, 0
      %v332 = vsel %vm321, %v320, 0
      %vm334 = vcmask 1041408
      %v336 = vsel %vm334, %v300, 0
      %338 = vmatprep.subr.bf16.mxu0 0
      %339 = vmatpush1.bf16.msra.mxu0 0
      %340 = vmatprep.subr.bf16.mxu0 0
      %341 = vmatpush1.bf16.msra.mxu0 0
      %342 = vmatprep.subr.bf16.mxu0 0
      %343 = vmatpush1.bf16.msra.mxu0 0
      %344 = vmatprep.subr.bf16.mxu0 0
      %345 = vmatpush1.bf16.msra.mxu0 0
      %346 = vmatprep.subr.bf16.mxu0 0
      %347 = vmatpush1.bf16.msra.mxu0 0
      %348 = vmatprep.subr.bf16.mxu0 0
      %349 = vmatpush1.bf16.msra.mxu0 0
      %350 = vmatprep.subr.bf16.mxu0 0
      %351 = vmatpush1.bf16.msra.mxu0 0
      %352 = vmatprep.subr.bf16.mxu0 0
      %353 = vmatpush1.bf16.msra.mxu0 %v336
      %354 = vmatprep.subr.bf16.mxu0 0
      %355 = vmatpush2.bf16.msra.mxu0 0
      %356 = vmatprep.subr.bf16.mxu0 0
      %357 = vmatpush2.bf16.msra.mxu0 0
      %358 = vmatprep.subr.bf16.mxu0 0
      %359 = vmatpush2.bf16.msra.mxu0 0
      %360 = vmatprep.subr.bf16.mxu0 0
      %361 = vmatpush2.bf16.msra.mxu0 0
      %362 = vmatprep.subr.bf16.mxu0 0
      %363 = vmatpush2.bf16.msra.mxu0 0
      %364 = vmatprep.subr.bf16.mxu0 0
      %365 = vmatpush2.bf16.msra.mxu0 0
      %366 = vmatprep.subr.bf16.mxu0 0
      %367 = vmatpush2.bf16.msra.mxu0 0
      %368 = vmatprep.subr.bf16.mxu0 0
      %369 = vmatpush2.bf16.msra.mxu0 0
      %370 = vmatprep.mubr.bf16.mxu0 0
      %371 = vmatmul.mubr.bf16.gmra.mxu0 %v323
      %v372 = vpop.f32.mrf.mxu0
      %v373 = vadd.f32 0.0, %v372
      %v374 = vpop.f32.mrf.mxu0
      %v375 = vpop.f32.mrf.mxu0
      %v376 = vadd.f32 0.0, %v375
      %v377 = vpop.f32.mrf.mxu0
      %378 = vmatprep.mubr.bf16.mxu0 0
      %379 = vmatmul.mubr.bf16.gmra.mxu0 %v326
      %v380 = vpop.f32.mrf.mxu0
      %v381 = vadd.f32 0.0, %v380
      %v382 = vpop.f32.mrf.mxu0
      %v383 = vpop.f32.mrf.mxu0
      %v384 = vadd.f32 0.0, %v383
      %v385 = vpop.f32.mrf.mxu0
      %386 = vmatprep.mubr.bf16.mxu0 0
      %387 = vmatmul.mubr.bf16.gmra.mxu0 %v329
      %v388 = vpop.f32.mrf.mxu0
      %v389 = vadd.f32 0.0, %v388
      %v390 = vpop.f32.mrf.mxu0
      %v391 = vpop.f32.mrf.mxu0
      %v392 = vadd.f32 0.0, %v391
      %v393 = vpop.f32.mrf.mxu0
      %394 = vmatprep.mubr.bf16.mxu0 0
      %395 = vmatmul.mubr.bf16.gmra.mxu0 %v332
      %v396 = vpop.f32.mrf.mxu0
      %v397 = vadd.f32 0.0, %v396
      %v398 = vpop.f32.mrf.mxu0
      %v399 = vpop.f32.mrf.mxu0
      %v400 = vadd.f32 0.0, %v399
      %v401 = vpop.f32.mrf.mxu0
      %402 = vdwg.mxu0
      %v411 = vunpack.c.l.b16 %v280
      %v412 = vunpack.c.l.b16 %v281
      %v413 = vunpack.c.l.b16 %v282
      %v414 = vunpack.c.l.b16 %v283
      %v415 = vunpack.c.l.b16 %v284
      %v416 = vunpack.c.l.b16 %v285
      %v417 = vunpack.c.l.b16 %v286
      %v418 = vunpack.c.l.b16 %v287
      %v419 = vpack.c.b16 %v412, %v411
      %v420 = vpack.c.b16 %v414, %v413
      %v421 = vpack.c.b16 %v416, %v415
      %v422 = vpack.c.b16 %v418, %v417
      %v424 = vsel %vm321, %v419, 0
      %v427 = vsel %vm321, %v420, 0
      %v430 = vsel %vm321, %v421, 0
      %v433 = vsel %vm321, %v422, 0
      %v436 = vsel %vm334, %v288, 0
      %438 = vmatprep.subr.bf16.mxu0 0
      %439 = vmatpush1.bf16.msra.mxu0 0
      %440 = vmatprep.subr.bf16.mxu0 0
      %441 = vmatpush1.bf16.msra.mxu0 0
      %442 = vmatprep.subr.bf16.mxu0 0
      %443 = vmatpush1.bf16.msra.mxu0 0
      %444 = vmatprep.subr.bf16.mxu0 0
      %445 = vmatpush1.bf16.msra.mxu0 0
      %446 = vmatprep.subr.bf16.mxu0 0
      %447 = vmatpush1.bf16.msra.mxu0 0
      %448 = vmatprep.subr.bf16.mxu0 0
      %449 = vmatpush1.bf16.msra.mxu0 0
      %450 = vmatprep.subr.bf16.mxu0 0
      %451 = vmatpush1.bf16.msra.mxu0 0
      %452 = vmatprep.subr.bf16.mxu0 0
      %453 = vmatpush1.bf16.msra.mxu0 %v436
      %454 = vmatprep.subr.bf16.mxu0 0
      %455 = vmatpush2.bf16.msra.mxu0 0
      %456 = vmatprep.subr.bf16.mxu0 0
      %457 = vmatpush2.bf16.msra.mxu0 0
      %458 = vmatprep.subr.bf16.mxu0 0
      %459 = vmatpush2.bf16.msra.mxu0 0
      %460 = vmatprep.subr.bf16.mxu0 0
      %461 = vmatpush2.bf16.msra.mxu0 0
      %462 = vmatprep.subr.bf16.mxu0 0
      %463 = vmatpush2.bf16.msra.mxu0 0
      %464 = vmatprep.subr.bf16.mxu0 0
      %465 = vmatpush2.bf16.msra.mxu0 0
      %466 = vmatprep.subr.bf16.mxu0 0
      %467 = vmatpush2.bf16.msra.mxu0 0
      %468 = vmatprep.subr.bf16.mxu0 0
      %469 = vmatpush2.bf16.msra.mxu0 0
      %470 = vmatprep.mubr.bf16.mxu0 0
      %471 = vmatmul.mubr.bf16.gmra.mxu0 %v424
      %v472 = vpop.f32.mrf.mxu0
      %v473 = vadd.f32 %v373, %v472
      %v474 = vpop.f32.mrf.mxu0
      %v475 = vpop.f32.mrf.mxu0
      %v476 = vadd.f32 %v376, %v475
      %v477 = vpop.f32.mrf.mxu0
      %478 = vmatprep.mubr.bf16.mxu0 0
      %479 = vmatmul.mubr.bf16.gmra.mxu0 %v427
      %v480 = vpop.f32.mrf.mxu0
      %v481 = vadd.f32 %v381, %v480
      %v482 = vpop.f32.mrf.mxu0
      %v483 = vpop.f32.mrf.mxu0
      %v484 = vadd.f32 %v384, %v483
      %v485 = vpop.f32.mrf.mxu0
      %486 = vmatprep.mubr.bf16.mxu0 0
      %487 = vmatmul.mubr.bf16.gmra.mxu0 %v430
      %v488 = vpop.f32.mrf.mxu0
      %v489 = vadd.f32 %v389, %v488
      %v490 = vpop.f32.mrf.mxu0
      %v491 = vpop.f32.mrf.mxu0
      %v492 = vadd.f32 %v392, %v491
      %v493 = vpop.f32.mrf.mxu0
      %494 = vmatprep.mubr.bf16.mxu0 0
      %495 = vmatmul.mubr.bf16.gmra.mxu0 %v433
      %v496 = vpop.f32.mrf.mxu0
      %v497 = vadd.f32 %v397, %v496
      %v498 = vpop.f32.mrf.mxu0
      %v499 = vpop.f32.mrf.mxu0
      %v500 = vadd.f32 %v400, %v499
      %v501 = vpop.f32.mrf.mxu0
      %502 = vdwg.mxu0
      %s503 = scalar_lea.vmem %s5, 2
      %v504 = vld [vmem:[%s503] sm:$0x3]
      %v506 = vsel %vm334, %v504, 0
      %508 = vmatprep.subr.bf16.mxu0 0
      %509 = vmatpush1.bf16.msra.mxu0 0
      %510 = vmatprep.subr.bf16.mxu0 0
      %511 = vmatpush1.bf16.msra.mxu0 0
      %512 = vmatprep.subr.bf16.mxu0 0
      %513 = vmatpush1.bf16.msra.mxu0 0
      %514 = vmatprep.subr.bf16.mxu0 0
      %515 = vmatpush1.bf16.msra.mxu0 0
      %516 = vmatprep.subr.bf16.mxu0 0
      %517 = vmatpush1.bf16.msra.mxu0 0
      %518 = vmatprep.subr.bf16.mxu0 0
      %519 = vmatpush1.bf16.msra.mxu0 0
      %520 = vmatprep.subr.bf16.mxu0 0
      %521 = vmatpush1.bf16.msra.mxu0 0
      %522 = vmatprep.subr.bf16.mxu0 0
      %523 = vmatpush1.bf16.msra.mxu0 %v506
      %524 = vmatprep.subr.bf16.mxu0 0
      %525 = vmatpush2.bf16.msra.mxu0 0
      %526 = vmatprep.subr.bf16.mxu0 0
      %527 = vmatpush2.bf16.msra.mxu0 0
      %528 = vmatprep.subr.bf16.mxu0 0
      %529 = vmatpush2.bf16.msra.mxu0 0
      %530 = vmatprep.subr.bf16.mxu0 0
      %531 = vmatpush2.bf16.msra.mxu0 0
      %532 = vmatprep.subr.bf16.mxu0 0
      %533 = vmatpush2.bf16.msra.mxu0 0
      %534 = vmatprep.subr.bf16.mxu0 0
      %535 = vmatpush2.bf16.msra.mxu0 0
      %536 = vmatprep.subr.bf16.mxu0 0
      %537 = vmatpush2.bf16.msra.mxu0 0
      %538 = vmatprep.subr.bf16.mxu0 0
      %539 = vmatpush2.bf16.msra.mxu0 0
      %540 = vmatprep.mubr.bf16.mxu0 0
      %541 = vmatmul.mubr.bf16.gmra.mxu0 %v323
      %v542 = vpop.f32.mrf.mxu0
      %v543 = vadd.f32 0.0, %v542
      %v544 = vpop.f32.mrf.mxu0
      %v545 = vpop.f32.mrf.mxu0
      %v546 = vadd.f32 0.0, %v545
      %v547 = vpop.f32.mrf.mxu0
      %548 = vmatprep.mubr.bf16.mxu0 0
      %549 = vmatmul.mubr.bf16.gmra.mxu0 %v326
      %v550 = vpop.f32.mrf.mxu0
      %v551 = vadd.f32 0.0, %v550
      %v552 = vpop.f32.mrf.mxu0
      %v553 = vpop.f32.mrf.mxu0
      %v554 = vadd.f32 0.0, %v553
      %v555 = vpop.f32.mrf.mxu0
      %556 = vmatprep.mubr.bf16.mxu0 0
      %557 = vmatmul.mubr.bf16.gmra.mxu0 %v329
      %v558 = vpop.f32.mrf.mxu0
      %v559 = vadd.f32 0.0, %v558
      %v560 = vpop.f32.mrf.mxu0
      %v561 = vpop.f32.mrf.mxu0
      %v562 = vadd.f32 0.0, %v561
      %v563 = vpop.f32.mrf.mxu0
      %564 = vmatprep.mubr.bf16.mxu0 0
      %565 = vmatmul.mubr.bf16.gmra.mxu0 %v332
      %v566 = vpop.f32.mrf.mxu0
      %v567 = vadd.f32 0.0, %v566
      %v568 = vpop.f32.mrf.mxu0
      %v569 = vpop.f32.mrf.mxu0
      %v570 = vadd.f32 0.0, %v569
      %v571 = vpop.f32.mrf.mxu0
      %572 = vdwg.mxu0
      %v574 = vsel %vm334, %v289, 0
      %576 = vmatprep.subr.bf16.mxu0 0
      %577 = vmatpush1.bf16.msra.mxu0 0
      %578 = vmatprep.subr.bf16.mxu0 0
      %579 = vmatpush1.bf16.msra.mxu0 0
      %580 = vmatprep.subr.bf16.mxu0 0
      %581 = vmatpush1.bf16.msra.mxu0 0
      %582 = vmatprep.subr.bf16.mxu0 0
      %583 = vmatpush1.bf16.msra.mxu0 0
      %584 = vmatprep.subr.bf16.mxu0 0
      %585 = vmatpush1.bf16.msra.mxu0 0
      %586 = vmatprep.subr.bf16.mxu0 0
      %587 = vmatpush1.bf16.msra.mxu0 0
      %588 = vmatprep.subr.bf16.mxu0 0
      %589 = vmatpush1.bf16.msra.mxu0 0
      %590 = vmatprep.subr.bf16.mxu0 0
      %591 = vmatpush1.bf16.msra.mxu0 %v574
      %592 = vmatprep.subr.bf16.mxu0 0
      %593 = vmatpush2.bf16.msra.mxu0 0
      %594 = vmatprep.subr.bf16.mxu0 0
      %595 = vmatpush2.bf16.msra.mxu0 0
      %596 = vmatprep.subr.bf16.mxu0 0
      %597 = vmatpush2.bf16.msra.mxu0 0
      %598 = vmatprep.subr.bf16.mxu0 0
      %599 = vmatpush2.bf16.msra.mxu0 0
      %600 = vmatprep.subr.bf16.mxu0 0
      %601 = vmatpush2.bf16.msra.mxu0 0
      %602 = vmatprep.subr.bf16.mxu0 0
      %603 = vmatpush2.bf16.msra.mxu0 0
      %604 = vmatprep.subr.bf16.mxu0 0
      %605 = vmatpush2.bf16.msra.mxu0 0
      %606 = vmatprep.subr.bf16.mxu0 0
      %607 = vmatpush2.bf16.msra.mxu0 0
      %608 = vmatprep.mubr.bf16.mxu0 0
      %609 = vmatmul.mubr.bf16.gmra.mxu0 %v424
      %v610 = vpop.f32.mrf.mxu0
      %v611 = vadd.f32 %v543, %v610
      %v612 = vpop.f32.mrf.mxu0
      %v613 = vpop.f32.mrf.mxu0
      %v614 = vadd.f32 %v546, %v613
      %v615 = vpop.f32.mrf.mxu0
      %616 = vmatprep.mubr.bf16.mxu0 0
      %617 = vmatmul.mubr.bf16.gmra.mxu0 %v427
      %v618 = vpop.f32.mrf.mxu0
      %v619 = vadd.f32 %v551, %v618
      %v620 = vpop.f32.mrf.mxu0
      %v621 = vpop.f32.mrf.mxu0
      %v622 = vadd.f32 %v554, %v621
      %v623 = vpop.f32.mrf.mxu0
      %624 = vmatprep.mubr.bf16.mxu0 0
      %625 = vmatmul.mubr.bf16.gmra.mxu0 %v430
      %v626 = vpop.f32.mrf.mxu0
      %v627 = vadd.f32 %v559, %v626
      %v628 = vpop.f32.mrf.mxu0
      %v629 = vpop.f32.mrf.mxu0
      %v630 = vadd.f32 %v562, %v629
      %v631 = vpop.f32.mrf.mxu0
      %632 = vmatprep.mubr.bf16.mxu0 0
      %633 = vmatmul.mubr.bf16.gmra.mxu0 %v433
      %v634 = vpop.f32.mrf.mxu0
      %v635 = vadd.f32 %v567, %v634
      %v636 = vpop.f32.mrf.mxu0
      %v637 = vpop.f32.mrf.mxu0
      %v638 = vadd.f32 %v570, %v637
      %v639 = vpop.f32.mrf.mxu0
      %640 = vdwg.mxu0
      %v641 = vld [vmem:[%s273] sm:$0xf]
      %v642 = vld [vmem:[%s273 + $0x4] sm:$0x1]
      %v643 = vld [vmem:[%s273 + $0x8] sm:$0xf]
      %v644 = vld [vmem:[%s273 + $0xc] sm:$0x1]
      %v645 = vld [vmem:[%s273 + $0x10] sm:$0xf]
      %v646 = vld [vmem:[%s273 + $0x14] sm:$0x1]
      %v647 = vld [vmem:[%s273 + $0x18] sm:$0xf]
      %v648 = vld [vmem:[%s273 + $0x1c] sm:$0x1]
      %v649 = vld [vmem:[%s273 + $0x20] sm:$0xf]
      %v650 = vld [vmem:[%s273 + $0x24] sm:$0x1]
      %v651 = vld [vmem:[%s273 + $0x28] sm:$0xf]
      %v652 = vld [vmem:[%s273 + $0x2c] sm:$0x1]
      %v653 = vld [vmem:[%s273 + $0x30] sm:$0xf]
      %v654 = vld [vmem:[%s273 + $0x34] sm:$0x1]
      %v655 = vld [vmem:[%s273 + $0x38] sm:$0xf]
      %v656 = vld [vmem:[%s273 + $0x3c] sm:$0x1]
      %vm657 = vsmask.f32 3328
      %vm658 = vsmask.f32 7440
      %vm659 = vmor %vm657, %vm658
      %v661 = vshrl.u32 %v641, 16
      %v663 = vrot.slane %v661, 4
      %v664 = vshll.u32 %v641, 16
      %v666 = vrot.slane %v664, 5
      %v667 = vor.u32 %v663, %v666
      %v668 = vrot.slane %v667, 4
      %v670 = vshll.u32 %v642, 16
      %v672 = vrot.slane %v670, 5
      %v673 = vsel %vm659, %v668, %v672
      %v675 = vshrl.u32 %v643, 16
      %v677 = vrot.slane %v675, 4
      %v678 = vshll.u32 %v643, 16
      %v680 = vrot.slane %v678, 5
      %v681 = vor.u32 %v677, %v680
      %v682 = vrot.slane %v681, 4
      %v684 = vshll.u32 %v644, 16
      %v686 = vrot.slane %v684, 5
      %v687 = vsel %vm659, %v682, %v686
      %v689 = vshrl.u32 %v645, 16
      %v691 = vrot.slane %v689, 4
      %v692 = vshll.u32 %v645, 16
      %v694 = vrot.slane %v692, 5
      %v695 = vor.u32 %v691, %v694
      %v696 = vrot.slane %v695, 4
      %v698 = vshll.u32 %v646, 16
      %v700 = vrot.slane %v698, 5
      %v701 = vsel %vm659, %v696, %v700
      %v703 = vshrl.u32 %v647, 16
      %v705 = vrot.slane %v703, 4
      %v706 = vshll.u32 %v647, 16
      %v708 = vrot.slane %v706, 5
      %v709 = vor.u32 %v705, %v708
      %v710 = vrot.slane %v709, 4
      %v712 = vshll.u32 %v648, 16
      %v714 = vrot.slane %v712, 5
      %v715 = vsel %vm659, %v710, %v714
      %v717 = vshrl.u32 %v649, 16
      %v719 = vrot.slane %v717, 4
      %v720 = vshll.u32 %v649, 16
      %v722 = vrot.slane %v720, 5
      %v723 = vor.u32 %v719, %v722
      %v724 = vrot.slane %v723, 4
      %v726 = vshll.u32 %v650, 16
      %v728 = vrot.slane %v726, 5
      %v729 = vsel %vm659, %v724, %v728
      %v731 = vshrl.u32 %v651, 16
      %v733 = vrot.slane %v731, 4
      %v734 = vshll.u32 %v651, 16
      %v736 = vrot.slane %v734, 5
      %v737 = vor.u32 %v733, %v736
      %v738 = vrot.slane %v737, 4
      %v740 = vshll.u32 %v652, 16
      %v742 = vrot.slane %v740, 5
      %v743 = vsel %vm659, %v738, %v742
      %v745 = vshrl.u32 %v653, 16
      %v747 = vrot.slane %v745, 4
      %v748 = vshll.u32 %v653, 16
      %v750 = vrot.slane %v748, 5
      %v751 = vor.u32 %v747, %v750
      %v752 = vrot.slane %v751, 4
      %v754 = vshll.u32 %v654, 16
      %v756 = vrot.slane %v754, 5
      %v757 = vsel %vm659, %v752, %v756
      %v759 = vshrl.u32 %v655, 16
      %v761 = vrot.slane %v759, 4
      %v762 = vshll.u32 %v655, 16
      %v764 = vrot.slane %v762, 5
      %v765 = vor.u32 %v761, %v764
      %v766 = vrot.slane %v765, 4
      %v768 = vshll.u32 %v656, 16
      %v770 = vrot.slane %v768, 5
      %v771 = vsel %vm659, %v766, %v770
      %s772 = scalar_lea.vmem %s1, 4
      %v773 = vld [vmem:[%s772] sm:$0x3]
      %v774 = vunpack.c.l.b16 %v673
      %v775 = vunpack.c.l.b16 %v687
      %v776 = vunpack.c.l.b16 %v701
      %v777 = vunpack.c.l.b16 %v715
      %v778 = vunpack.c.l.b16 %v729
      %v779 = vunpack.c.l.b16 %v743
      %v780 = vunpack.c.l.b16 %v757
      %v781 = vunpack.c.l.b16 %v771
      %v782 = vpack.c.b16 %v775, %v774
      %v783 = vpack.c.b16 %v777, %v776
      %v784 = vpack.c.b16 %v779, %v778
      %v785 = vpack.c.b16 %v781, %v780
      %v787 = vsel %vm321, %v782, 0
      %v790 = vsel %vm321, %v783, 0
      %v793 = vsel %vm321, %v784, 0
      %v796 = vsel %vm321, %v785, 0
      %v799 = vsel %vm334, %v773, 0
      %801 = vmatprep.subr.bf16.mxu0 0
      %802 = vmatpush1.bf16.msra.mxu0 0
      %803 = vmatprep.subr.bf16.mxu0 0
      %804 = vmatpush1.bf16.msra.mxu0 0
      %805 = vmatprep.subr.bf16.mxu0 0
      %806 = vmatpush1.bf16.msra.mxu0 0
      %807 = vmatprep.subr.bf16.mxu0 0
      %808 = vmatpush1.bf16.msra.mxu0 0
      %809 = vmatprep.subr.bf16.mxu0 0
      %810 = vmatpush1.bf16.msra.mxu0 0
      %811 = vmatprep.subr.bf16.mxu0 0
      %812 = vmatpush1.bf16.msra.mxu0 0
      %813 = vmatprep.subr.bf16.mxu0 0
      %814 = vmatpush1.bf16.msra.mxu0 0
      %815 = vmatprep.subr.bf16.mxu0 0
      %816 = vmatpush1.bf16.msra.mxu0 %v799
      %817 = vmatprep.subr.bf16.mxu0 0
      %818 = vmatpush2.bf16.msra.mxu0 0
      %819 = vmatprep.subr.bf16.mxu0 0
      %820 = vmatpush2.bf16.msra.mxu0 0
      %821 = vmatprep.subr.bf16.mxu0 0
      %822 = vmatpush2.bf16.msra.mxu0 0
      %823 = vmatprep.subr.bf16.mxu0 0
      %824 = vmatpush2.bf16.msra.mxu0 0
      %825 = vmatprep.subr.bf16.mxu0 0
      %826 = vmatpush2.bf16.msra.mxu0 0
      %827 = vmatprep.subr.bf16.mxu0 0
      %828 = vmatpush2.bf16.msra.mxu0 0
      %829 = vmatprep.subr.bf16.mxu0 0
      %830 = vmatpush2.bf16.msra.mxu0 0
      %831 = vmatprep.subr.bf16.mxu0 0
      %832 = vmatpush2.bf16.msra.mxu0 0
      %833 = vmatprep.mubr.bf16.mxu0 0
      %834 = vmatmul.mubr.bf16.gmra.mxu0 %v787
      %v835 = vpop.f32.mrf.mxu0
      %v836 = vadd.f32 0.0, %v835
      %v837 = vpop.f32.mrf.mxu0
      %v838 = vpop.f32.mrf.mxu0
      %v839 = vadd.f32 0.0, %v838
      %v840 = vpop.f32.mrf.mxu0
      %841 = vmatprep.mubr.bf16.mxu0 0
      %842 = vmatmul.mubr.bf16.gmra.mxu0 %v790
      %v843 = vpop.f32.mrf.mxu0
      %v844 = vadd.f32 0.0, %v843
      %v845 = vpop.f32.mrf.mxu0
      %v846 = vpop.f32.mrf.mxu0
      %v847 = vadd.f32 0.0, %v846
      %v848 = vpop.f32.mrf.mxu0
      %849 = vmatprep.mubr.bf16.mxu0 0
      %850 = vmatmul.mubr.bf16.gmra.mxu0 %v793
      %v851 = vpop.f32.mrf.mxu0
      %v852 = vadd.f32 0.0, %v851
      %v853 = vpop.f32.mrf.mxu0
      %v854 = vpop.f32.mrf.mxu0
      %v855 = vadd.f32 0.0, %v854
      %v856 = vpop.f32.mrf.mxu0
      %857 = vmatprep.mubr.bf16.mxu0 0
      %858 = vmatmul.mubr.bf16.gmra.mxu0 %v796
      %v859 = vpop.f32.mrf.mxu0
      %v860 = vadd.f32 0.0, %v859
      %v861 = vpop.f32.mrf.mxu0
      %v862 = vpop.f32.mrf.mxu0
      %v863 = vadd.f32 0.0, %v862
      %v864 = vpop.f32.mrf.mxu0
      %865 = vdwg.mxu0
      %v866 = vadd.f32 %v473, %v836
      %v867 = vadd.f32 %v476, %v839
      %v868 = vadd.f32 %v481, %v844
      %v869 = vadd.f32 %v484, %v847
      %v870 = vadd.f32 %v489, %v852
      %v871 = vadd.f32 %v492, %v855
      %v872 = vadd.f32 %v497, %v860
      %v873 = vadd.f32 %v500, %v863
      %s874 = scalar_lea.vmem %s5, 4
      %v875 = vld [vmem:[%s874] sm:$0x3]
      %v877 = vsel %vm334, %v875, 0
      %879 = vmatprep.subr.bf16.mxu0 0
      %880 = vmatpush1.bf16.msra.mxu0 0
      %881 = vmatprep.subr.bf16.mxu0 0
      %882 = vmatpush1.bf16.msra.mxu0 0
      %883 = vmatprep.subr.bf16.mxu0 0
      %884 = vmatpush1.bf16.msra.mxu0 0
      %885 = vmatprep.subr.bf16.mxu0 0
      %886 = vmatpush1.bf16.msra.mxu0 0
      %887 = vmatprep.subr.bf16.mxu0 0
      %888 = vmatpush1.bf16.msra.mxu0 0
      %889 = vmatprep.subr.bf16.mxu0 0
      %890 = vmatpush1.bf16.msra.mxu0 0
      %891 = vmatprep.subr.bf16.mxu0 0
      %892 = vmatpush1.bf16.msra.mxu0 0
      %893 = vmatprep.subr.bf16.mxu0 0
      %894 = vmatpush1.bf16.msra.mxu0 %v877
      %895 = vmatprep.subr.bf16.mxu0 0
      %896 = vmatpush2.bf16.msra.mxu0 0
      %897 = vmatprep.subr.bf16.mxu0 0
      %898 = vmatpush2.bf16.msra.mxu0 0
      %899 = vmatprep.subr.bf16.mxu0 0
      %900 = vmatpush2.bf16.msra.mxu0 0
      %901 = vmatprep.subr.bf16.mxu0 0
      %902 = vmatpush2.bf16.msra.mxu0 0
      %903 = vmatprep.subr.bf16.mxu0 0
      %904 = vmatpush2.bf16.msra.mxu0 0
      %905 = vmatprep.subr.bf16.mxu0 0
      %906 = vmatpush2.bf16.msra.mxu0 0
      %907 = vmatprep.subr.bf16.mxu0 0
      %908 = vmatpush2.bf16.msra.mxu0 0
      %909 = vmatprep.subr.bf16.mxu0 0
      %910 = vmatpush2.bf16.msra.mxu0 0
      %911 = vmatprep.mubr.bf16.mxu0 0
      %912 = vmatmul.mubr.bf16.gmra.mxu0 %v787
      %v913 = vpop.f32.mrf.mxu0
      %v914 = vadd.f32 0.0, %v913
      %v915 = vpop.f32.mrf.mxu0
      %v916 = vpop.f32.mrf.mxu0
      %v917 = vadd.f32 0.0, %v916
      %v918 = vpop.f32.mrf.mxu0
      %919 = vmatprep.mubr.bf16.mxu0 0
      %920 = vmatmul.mubr.bf16.gmra.mxu0 %v790
      %v921 = vpop.f32.mrf.mxu0
      %v922 = vadd.f32 0.0, %v921
      %v923 = vpop.f32.mrf.mxu0
      %v924 = vpop.f32.mrf.mxu0
      %v925 = vadd.f32 0.0, %v924
      %v926 = vpop.f32.mrf.mxu0
      %927 = vmatprep.mubr.bf16.mxu0 0
      %928 = vmatmul.mubr.bf16.gmra.mxu0 %v793
      %v929 = vpop.f32.mrf.mxu0
      %v930 = vadd.f32 0.0, %v929
      %v931 = vpop.f32.mrf.mxu0
      %v932 = vpop.f32.mrf.mxu0
      %v933 = vadd.f32 0.0, %v932
      %v934 = vpop.f32.mrf.mxu0
      %935 = vmatprep.mubr.bf16.mxu0 0
      %936 = vmatmul.mubr.bf16.gmra.mxu0 %v796
      %v937 = vpop.f32.mrf.mxu0
      %v938 = vadd.f32 0.0, %v937
      %v939 = vpop.f32.mrf.mxu0
      %v940 = vpop.f32.mrf.mxu0
      %v941 = vadd.f32 0.0, %v940
      %v942 = vpop.f32.mrf.mxu0
      %943 = vdwg.mxu0
      %v944 = vadd.f32 %v611, %v914
      %v945 = vadd.f32 %v614, %v917
      %v946 = vadd.f32 %v619, %v922
      %v947 = vadd.f32 %v622, %v925
      %v948 = vadd.f32 %v627, %v930
      %v949 = vadd.f32 %v630, %v933
      %v950 = vadd.f32 %v635, %v938
      %v951 = vadd.f32 %v638, %v941
      %s952 = scalar_lea.vmem %s273, 144
      %v953 = vld [vmem:[%s952] sm:$0xf]
      %v954 = vld [vmem:[%s952 + $0x8] sm:$0xf]
      %v955 = vld [vmem:[%s952 + $0x10] sm:$0xf]
      %v956 = vld [vmem:[%s952 + $0x18] sm:$0xf]
      %v957 = vld [vmem:[%s952 + $0x20] sm:$0xf]
      %v958 = vld [vmem:[%s952 + $0x28] sm:$0xf]
      %v959 = vld [vmem:[%s952 + $0x30] sm:$0xf]
      %v960 = vld [vmem:[%s952 + $0x38] sm:$0xf]
      %s961 = scalar_lea.vmem %s1, 6
      %v962 = vld [vmem:[%s961] sm:$0x3]
      %v971 = vunpack.c.l.b16 %v953
      %v972 = vunpack.c.l.b16 %v954
      %v973 = vunpack.c.l.b16 %v955
      %v974 = vunpack.c.l.b16 %v956
      %v975 = vunpack.c.l.b16 %v957
      %v976 = vunpack.c.l.b16 %v958
      %v977 = vunpack.c.l.b16 %v959
      %v978 = vunpack.c.l.b16 %v960
      %v979 = vpack.c.b16 %v972, %v971
      %v980 = vpack.c.b16 %v974, %v973
      %v981 = vpack.c.b16 %v976, %v975
      %v982 = vpack.c.b16 %v978, %v977
      %v984 = vsel %vm321, %v979, 0
      %v987 = vsel %vm321, %v980, 0
      %v990 = vsel %vm321, %v981, 0
      %v993 = vsel %vm321, %v982, 0
      %v996 = vsel %vm334, %v962, 0
      %998 = vmatprep.subr.bf16.mxu0 0
      %999 = vmatpush1.bf16.msra.mxu0 0
      %1000 = vmatprep.subr.bf16.mxu0 0
      %1001 = vmatpush1.bf16.msra.mxu0 0
      %1002 = vmatprep.subr.bf16.mxu0 0
      %1003 = vmatpush1.bf16.msra.mxu0 0
      %1004 = vmatprep.subr.bf16.mxu0 0
      %1005 = vmatpush1.bf16.msra.mxu0 0
      %1006 = vmatprep.subr.bf16.mxu0 0
      %1007 = vmatpush1.bf16.msra.mxu0 0
      %1008 = vmatprep.subr.bf16.mxu0 0
      %1009 = vmatpush1.bf16.msra.mxu0 0
      %1010 = vmatprep.subr.bf16.mxu0 0
      %1011 = vmatpush1.bf16.msra.mxu0 0
      %1012 = vmatprep.subr.bf16.mxu0 0
      %1013 = vmatpush1.bf16.msra.mxu0 %v996
      %1014 = vmatprep.subr.bf16.mxu0 0
      %1015 = vmatpush2.bf16.msra.mxu0 0
      %1016 = vmatprep.subr.bf16.mxu0 0
      %1017 = vmatpush2.bf16.msra.mxu0 0
      %1018 = vmatprep.subr.bf16.mxu0 0
      %1019 = vmatpush2.bf16.msra.mxu0 0
      %1020 = vmatprep.subr.bf16.mxu0 0
      %1021 = vmatpush2.bf16.msra.mxu0 0
      %1022 = vmatprep.subr.bf16.mxu0 0
      %1023 = vmatpush2.bf16.msra.mxu0 0
      %1024 = vmatprep.subr.bf16.mxu0 0
      %1025 = vmatpush2.bf16.msra.mxu0 0
      %1026 = vmatprep.subr.bf16.mxu0 0
      %1027 = vmatpush2.bf16.msra.mxu0 0
      %1028 = vmatprep.subr.bf16.mxu0 0
      %1029 = vmatpush2.bf16.msra.mxu0 0
      %1030 = vmatprep.mubr.bf16.mxu0 0
      %1031 = vmatmul.mubr.bf16.gmra.mxu0 %v984
      %v1032 = vpop.f32.mrf.mxu0
      %v1033 = vadd.f32 0.0, %v1032
      %v1034 = vpop.f32.mrf.mxu0
      %v1035 = vpop.f32.mrf.mxu0
      %v1036 = vadd.f32 0.0, %v1035
      %v1037 = vpop.f32.mrf.mxu0
      %1038 = vmatprep.mubr.bf16.mxu0 0
      %1039 = vmatmul.mubr.bf16.gmra.mxu0 %v987
      %v1040 = vpop.f32.mrf.mxu0
      %v1041 = vadd.f32 0.0, %v1040
      %v1042 = vpop.f32.mrf.mxu0
      %v1043 = vpop.f32.mrf.mxu0
      %v1044 = vadd.f32 0.0, %v1043
      %v1045 = vpop.f32.mrf.mxu0
      %1046 = vmatprep.mubr.bf16.mxu0 0
      %1047 = vmatmul.mubr.bf16.gmra.mxu0 %v990
      %v1048 = vpop.f32.mrf.mxu0
      %v1049 = vadd.f32 0.0, %v1048
      %v1050 = vpop.f32.mrf.mxu0
      %v1051 = vpop.f32.mrf.mxu0
      %v1052 = vadd.f32 0.0, %v1051
      %v1053 = vpop.f32.mrf.mxu0
      %1054 = vmatprep.mubr.bf16.mxu0 0
      %1055 = vmatmul.mubr.bf16.gmra.mxu0 %v993
      %v1056 = vpop.f32.mrf.mxu0
      %v1057 = vadd.f32 0.0, %v1056
      %v1058 = vpop.f32.mrf.mxu0
      %v1059 = vpop.f32.mrf.mxu0
      %v1060 = vadd.f32 0.0, %v1059
      %v1061 = vpop.f32.mrf.mxu0
      %1062 = vdwg.mxu0
      %v1063 = vadd.f32 %v866, %v1033
      %v1064 = vadd.f32 %v867, %v1036
      %v1065 = vadd.f32 %v868, %v1041
      %v1066 = vadd.f32 %v869, %v1044
      %v1067 = vadd.f32 %v870, %v1049
      %v1068 = vadd.f32 %v871, %v1052
      %v1069 = vadd.f32 %v872, %v1057
      %v1070 = vadd.f32 %v873, %v1060
      %s1071 = scalar_lea.vmem %s5, 6
      %v1072 = vld [vmem:[%s1071] sm:$0x3]
      %v1074 = vsel %vm334, %v1072, 0
      %1076 = vmatprep.subr.bf16.mxu0 0
      %1077 = vmatpush1.bf16.msra.mxu0 0
      %1078 = vmatprep.subr.bf16.mxu0 0
      %1079 = vmatpush1.bf16.msra.mxu0 0
      %1080 = vmatprep.subr.bf16.mxu0 0
      %1081 = vmatpush1.bf16.msra.mxu0 0
      %1082 = vmatprep.subr.bf16.mxu0 0
      %1083 = vmatpush1.bf16.msra.mxu0 0
      %1084 = vmatprep.subr.bf16.mxu0 0
      %1085 = vmatpush1.bf16.msra.mxu0 0
      %1086 = vmatprep.subr.bf16.mxu0 0
      %1087 = vmatpush1.bf16.msra.mxu0 0
      %1088 = vmatprep.subr.bf16.mxu0 0
      %1089 = vmatpush1.bf16.msra.mxu0 0
      %1090 = vmatprep.subr.bf16.mxu0 0
      %1091 = vmatpush1.bf16.msra.mxu0 %v1074
      %1092 = vmatprep.subr.bf16.mxu0 0
      %1093 = vmatpush2.bf16.msra.mxu0 0
      %1094 = vmatprep.subr.bf16.mxu0 0
      %1095 = vmatpush2.bf16.msra.mxu0 0
      %1096 = vmatprep.subr.bf16.mxu0 0
      %1097 = vmatpush2.bf16.msra.mxu0 0
      %1098 = vmatprep.subr.bf16.mxu0 0
      %1099 = vmatpush2.bf16.msra.mxu0 0
      %1100 = vmatprep.subr.bf16.mxu0 0
      %1101 = vmatpush2.bf16.msra.mxu0 0
      %1102 = vmatprep.subr.bf16.mxu0 0
      %1103 = vmatpush2.bf16.msra.mxu0 0
      %1104 = vmatprep.subr.bf16.mxu0 0
      %1105 = vmatpush2.bf16.msra.mxu0 0
      %1106 = vmatprep.subr.bf16.mxu0 0
      %1107 = vmatpush2.bf16.msra.mxu0 0
      %1108 = vmatprep.mubr.bf16.mxu0 0
      %1109 = vmatmul.mubr.bf16.gmra.mxu0 %v984
      %v1110 = vpop.f32.mrf.mxu0
      %v1111 = vadd.f32 0.0, %v1110
      %v1112 = vpop.f32.mrf.mxu0
      %v1113 = vpop.f32.mrf.mxu0
      %v1114 = vadd.f32 0.0, %v1113
      %v1115 = vpop.f32.mrf.mxu0
      %1116 = vmatprep.mubr.bf16.mxu0 0
      %1117 = vmatmul.mubr.bf16.gmra.mxu0 %v987
      %v1118 = vpop.f32.mrf.mxu0
      %v1119 = vadd.f32 0.0, %v1118
      %v1120 = vpop.f32.mrf.mxu0
      %v1121 = vpop.f32.mrf.mxu0
      %v1122 = vadd.f32 0.0, %v1121
      %v1123 = vpop.f32.mrf.mxu0
      %1124 = vmatprep.mubr.bf16.mxu0 0
      %1125 = vmatmul.mubr.bf16.gmra.mxu0 %v990
      %v1126 = vpop.f32.mrf.mxu0
      %v1127 = vadd.f32 0.0, %v1126
      %v1128 = vpop.f32.mrf.mxu0
      %v1129 = vpop.f32.mrf.mxu0
      %v1130 = vadd.f32 0.0, %v1129
      %v1131 = vpop.f32.mrf.mxu0
      %1132 = vmatprep.mubr.bf16.mxu0 0
      %1133 = vmatmul.mubr.bf16.gmra.mxu0 %v993
      %v1134 = vpop.f32.mrf.mxu0
      %v1135 = vadd.f32 0.0, %v1134
      %v1136 = vpop.f32.mrf.mxu0
      %v1137 = vpop.f32.mrf.mxu0
      %v1138 = vadd.f32 0.0, %v1137
      %v1139 = vpop.f32.mrf.mxu0
      %1140 = vdwg.mxu0
      %v1141 = vadd.f32 %v944, %v1111
      %v1142 = vadd.f32 %v945, %v1114
      %v1143 = vadd.f32 %v946, %v1119
      %v1144 = vadd.f32 %v947, %v1122
      %v1145 = vadd.f32 %v948, %v1127
      %v1146 = vadd.f32 %v949, %v1130
      %v1147 = vadd.f32 %v950, %v1135
      %v1148 = vadd.f32 %v951, %v1138
      %s1149 = scalar_lea.vmem %s273, 216
      %v1150 = vld [vmem:[%s1149] sm:$0xf]
      %v1151 = vld [vmem:[%s1149 + $0x8] sm:$0xf]
      %v1152 = vld [vmem:[%s1149 + $0x10] sm:$0xf]
      %v1153 = vld [vmem:[%s1149 + $0x18] sm:$0xf]
      %v1154 = vld [vmem:[%s1149 + $0x20] sm:$0xf]
      %v1155 = vld [vmem:[%s1149 + $0x28] sm:$0xf]
      %v1156 = vld [vmem:[%s1149 + $0x30] sm:$0xf]
      %v1157 = vld [vmem:[%s1149 + $0x38] sm:$0xf]
      %s1158 = scalar_lea.vmem %s1, 8
      %v1159 = vld [vmem:[%s1158] sm:$0x3]
      %v1168 = vunpack.c.l.b16 %v1150
      %v1169 = vunpack.c.l.b16 %v1151
      %v1170 = vunpack.c.l.b16 %v1152
      %v1171 = vunpack.c.l.b16 %v1153
      %v1172 = vunpack.c.l.b16 %v1154
      %v1173 = vunpack.c.l.b16 %v1155
      %v1174 = vunpack.c.l.b16 %v1156
      %v1175 = vunpack.c.l.b16 %v1157
      %v1176 = vpack.c.b16 %v1169, %v1168
      %v1177 = vpack.c.b16 %v1171, %v1170
      %v1178 = vpack.c.b16 %v1173, %v1172
      %v1179 = vpack.c.b16 %v1175, %v1174
      %v1181 = vsel %vm321, %v1176, 0
      %v1184 = vsel %vm321, %v1177, 0
      %v1187 = vsel %vm321, %v1178, 0
      %v1190 = vsel %vm321, %v1179, 0
      %v1193 = vsel %vm334, %v1159, 0
      %1195 = vmatprep.subr.bf16.mxu0 0
      %1196 = vmatpush1.bf16.msra.mxu0 0
      %1197 = vmatprep.subr.bf16.mxu0 0
      %1198 = vmatpush1.bf16.msra.mxu0 0
      %1199 = vmatprep.subr.bf16.mxu0 0
      %1200 = vmatpush1.bf16.msra.mxu0 0
      %1201 = vmatprep.subr.bf16.mxu0 0
      %1202 = vmatpush1.bf16.msra.mxu0 0
      %1203 = vmatprep.subr.bf16.mxu0 0
      %1204 = vmatpush1.bf16.msra.mxu0 0
      %1205 = vmatprep.subr.bf16.mxu0 0
      %1206 = vmatpush1.bf16.msra.mxu0 0
      %1207 = vmatprep.subr.bf16.mxu0 0
      %1208 = vmatpush1.bf16.msra.mxu0 0
      %1209 = vmatprep.subr.bf16.mxu0 0
      %1210 = vmatpush1.bf16.msra.mxu0 %v1193
      %1211 = vmatprep.subr.bf16.mxu0 0
      %1212 = vmatpush2.bf16.msra.mxu0 0
      %1213 = vmatprep.subr.bf16.mxu0 0
      %1214 = vmatpush2.bf16.msra.mxu0 0
      %1215 = vmatprep.subr.bf16.mxu0 0
      %1216 = vmatpush2.bf16.msra.mxu0 0
      %1217 = vmatprep.subr.bf16.mxu0 0
      %1218 = vmatpush2.bf16.msra.mxu0 0
      %1219 = vmatprep.subr.bf16.mxu0 0
      %1220 = vmatpush2.bf16.msra.mxu0 0
      %1221 = vmatprep.subr.bf16.mxu0 0
      %1222 = vmatpush2.bf16.msra.mxu0 0
      %1223 = vmatprep.subr.bf16.mxu0 0
      %1224 = vmatpush2.bf16.msra.mxu0 0
      %1225 = vmatprep.subr.bf16.mxu0 0
      %1226 = vmatpush2.bf16.msra.mxu0 0
      %1227 = vmatprep.mubr.bf16.mxu0 0
      %1228 = vmatmul.mubr.bf16.gmra.mxu0 %v1181
      %v1229 = vpop.f32.mrf.mxu0
      %v1230 = vadd.f32 0.0, %v1229
      %v1231 = vpop.f32.mrf.mxu0
      %v1232 = vpop.f32.mrf.mxu0
      %v1233 = vadd.f32 0.0, %v1232
      %v1234 = vpop.f32.mrf.mxu0
      %1235 = vmatprep.mubr.bf16.mxu0 0
      %1236 = vmatmul.mubr.bf16.gmra.mxu0 %v1184
      %v1237 = vpop.f32.mrf.mxu0
      %v1238 = vadd.f32 0.0, %v1237
      %v1239 = vpop.f32.mrf.mxu0
      %v1240 = vpop.f32.mrf.mxu0
      %v1241 = vadd.f32 0.0, %v1240
      %v1242 = vpop.f32.mrf.mxu0
      %1243 = vmatprep.mubr.bf16.mxu0 0
      %1244 = vmatmul.mubr.bf16.gmra.mxu0 %v1187
      %v1245 = vpop.f32.mrf.mxu0
      %v1246 = vadd.f32 0.0, %v1245
      %v1247 = vpop.f32.mrf.mxu0
      %v1248 = vpop.f32.mrf.mxu0
      %v1249 = vadd.f32 0.0, %v1248
      %v1250 = vpop.f32.mrf.mxu0
      %1251 = vmatprep.mubr.bf16.mxu0 0
      %1252 = vmatmul.mubr.bf16.gmra.mxu0 %v1190
      %v1253 = vpop.f32.mrf.mxu0
      %v1254 = vadd.f32 0.0, %v1253
      %v1255 = vpop.f32.mrf.mxu0
      %v1256 = vpop.f32.mrf.mxu0
      %v1257 = vadd.f32 0.0, %v1256
      %v1258 = vpop.f32.mrf.mxu0
      %1259 = vdwg.mxu0
      %v1260 = vadd.f32 %v1063, %v1230
      %v1261 = vadd.f32 %v1064, %v1233
      %v1262 = vadd.f32 %v1065, %v1238
      %v1263 = vadd.f32 %v1066, %v1241
      %v1264 = vadd.f32 %v1067, %v1246
      %v1265 = vadd.f32 %v1068, %v1249
      %v1266 = vadd.f32 %v1069, %v1254
      %v1267 = vadd.f32 %v1070, %v1257
      %s1268 = scalar_lea.vmem %s5, 8
      %v1269 = vld [vmem:[%s1268] sm:$0x3]
      %v1271 = vsel %vm334, %v1269, 0
      %1273 = vmatprep.subr.bf16.mxu0 0
      %1274 = vmatpush1.bf16.msra.mxu0 0
      %1275 = vmatprep.subr.bf16.mxu0 0
      %1276 = vmatpush1.bf16.msra.mxu0 0
      %1277 = vmatprep.subr.bf16.mxu0 0
      %1278 = vmatpush1.bf16.msra.mxu0 0
      %1279 = vmatprep.subr.bf16.mxu0 0
      %1280 = vmatpush1.bf16.msra.mxu0 0
      %1281 = vmatprep.subr.bf16.mxu0 0
      %1282 = vmatpush1.bf16.msra.mxu0 0
      %1283 = vmatprep.subr.bf16.mxu0 0
      %1284 = vmatpush1.bf16.msra.mxu0 0
      %1285 = vmatprep.subr.bf16.mxu0 0
      %1286 = vmatpush1.bf16.msra.mxu0 0
      %1287 = vmatprep.subr.bf16.mxu0 0
      %1288 = vmatpush1.bf16.msra.mxu0 %v1271
      %1289 = vmatprep.subr.bf16.mxu0 0
      %1290 = vmatpush2.bf16.msra.mxu0 0
      %1291 = vmatprep.subr.bf16.mxu0 0
      %1292 = vmatpush2.bf16.msra.mxu0 0
      %1293 = vmatprep.subr.bf16.mxu0 0
      %1294 = vmatpush2.bf16.msra.mxu0 0
      %1295 = vmatprep.subr.bf16.mxu0 0
      %1296 = vmatpush2.bf16.msra.mxu0 0
      %1297 = vmatprep.subr.bf16.mxu0 0
      %1298 = vmatpush2.bf16.msra.mxu0 0
      %1299 = vmatprep.subr.bf16.mxu0 0
      %1300 = vmatpush2.bf16.msra.mxu0 0
      %1301 = vmatprep.subr.bf16.mxu0 0
      %1302 = vmatpush2.bf16.msra.mxu0 0
      %1303 = vmatprep.subr.bf16.mxu0 0
      %1304 = vmatpush2.bf16.msra.mxu0 0
      %1305 = vmatprep.mubr.bf16.mxu0 0
      %1306 = vmatmul.mubr.bf16.gmra.mxu0 %v1181
      %v1307 = vpop.f32.mrf.mxu0
      %v1308 = vadd.f32 0.0, %v1307
      %v1309 = vpop.f32.mrf.mxu0
      %v1310 = vpop.f32.mrf.mxu0
      %v1311 = vadd.f32 0.0, %v1310
      %v1312 = vpop.f32.mrf.mxu0
      %1313 = vmatprep.mubr.bf16.mxu0 0
      %1314 = vmatmul.mubr.bf16.gmra.mxu0 %v1184
      %v1315 = vpop.f32.mrf.mxu0
      %v1316 = vadd.f32 0.0, %v1315
      %v1317 = vpop.f32.mrf.mxu0
      %v1318 = vpop.f32.mrf.mxu0
      %v1319 = vadd.f32 0.0, %v1318
      %v1320 = vpop.f32.mrf.mxu0
      %1321 = vmatprep.mubr.bf16.mxu0 0
      %1322 = vmatmul.mubr.bf16.gmra.mxu0 %v1187
      %v1323 = vpop.f32.mrf.mxu0
      %v1324 = vadd.f32 0.0, %v1323
      %v1325 = vpop.f32.mrf.mxu0
      %v1326 = vpop.f32.mrf.mxu0
      %v1327 = vadd.f32 0.0, %v1326
      %v1328 = vpop.f32.mrf.mxu0
      %1329 = vmatprep.mubr.bf16.mxu0 0
      %1330 = vmatmul.mubr.bf16.gmra.mxu0 %v1190
      %v1331 = vpop.f32.mrf.mxu0
      %v1332 = vadd.f32 0.0, %v1331
      %v1333 = vpop.f32.mrf.mxu0
      %v1334 = vpop.f32.mrf.mxu0
      %v1335 = vadd.f32 0.0, %v1334
      %v1336 = vpop.f32.mrf.mxu0
      %1337 = vdwg.mxu0
      %v1338 = vadd.f32 %v1141, %v1308
      %v1339 = vadd.f32 %v1142, %v1311
      %v1340 = vadd.f32 %v1143, %v1316
      %v1341 = vadd.f32 %v1144, %v1319
      %v1342 = vadd.f32 %v1145, %v1324
      %v1343 = vadd.f32 %v1146, %v1327
      %v1344 = vadd.f32 %v1147, %v1332
      %v1345 = vadd.f32 %v1148, %v1335
      %v1346 = vld [vmem:[%s952] sm:$0xf]
      %v1347 = vld [vmem:[%s952 + $0x4] sm:$0x1]
      %v1348 = vld [vmem:[%s952 + $0x8] sm:$0xf]
      %v1349 = vld [vmem:[%s952 + $0xc] sm:$0x1]
      %v1350 = vld [vmem:[%s952 + $0x10] sm:$0xf]
      %v1351 = vld [vmem:[%s952 + $0x14] sm:$0x1]
      %v1352 = vld [vmem:[%s952 + $0x18] sm:$0xf]
      %v1353 = vld [vmem:[%s952 + $0x1c] sm:$0x1]
      %v1354 = vld [vmem:[%s952 + $0x20] sm:$0xf]
      %v1355 = vld [vmem:[%s952 + $0x24] sm:$0x1]
      %v1356 = vld [vmem:[%s952 + $0x28] sm:$0xf]
      %v1357 = vld [vmem:[%s952 + $0x2c] sm:$0x1]
      %v1358 = vld [vmem:[%s952 + $0x30] sm:$0xf]
      %v1359 = vld [vmem:[%s952 + $0x34] sm:$0x1]
      %v1360 = vld [vmem:[%s952 + $0x38] sm:$0xf]
      %v1361 = vld [vmem:[%s952 + $0x3c] sm:$0x1]
      %v1363 = vshrl.u32 %v1346, 16
      %v1365 = vrot.slane %v1363, 4
      %v1366 = vshll.u32 %v1346, 16
      %v1368 = vrot.slane %v1366, 5
      %v1369 = vor.u32 %v1365, %v1368
      %v1370 = vrot.slane %v1369, 4
      %v1372 = vshll.u32 %v1347, 16
      %v1374 = vrot.slane %v1372, 5
      %v1375 = vsel %vm659, %v1370, %v1374
      %v1377 = vshrl.u32 %v1348, 16
      %v1379 = vrot.slane %v1377, 4
      %v1380 = vshll.u32 %v1348, 16
      %v1382 = vrot.slane %v1380, 5
      %v1383 = vor.u32 %v1379, %v1382
      %v1384 = vrot.slane %v1383, 4
      %v1386 = vshll.u32 %v1349, 16
      %v1388 = vrot.slane %v1386, 5
      %v1389 = vsel %vm659, %v1384, %v1388
      %v1391 = vshrl.u32 %v1350, 16
      %v1393 = vrot.slane %v1391, 4
      %v1394 = vshll.u32 %v1350, 16
      %v1396 = vrot.slane %v1394, 5
      %v1397 = vor.u32 %v1393, %v1396
      %v1398 = vrot.slane %v1397, 4
      %v1400 = vshll.u32 %v1351, 16
      %v1402 = vrot.slane %v1400, 5
      %v1403 = vsel %vm659, %v1398, %v1402
      %v1405 = vshrl.u32 %v1352, 16
      %v1407 = vrot.slane %v1405, 4
      %v1408 = vshll.u32 %v1352, 16
      %v1410 = vrot.slane %v1408, 5
      %v1411 = vor.u32 %v1407, %v1410
      %v1412 = vrot.slane %v1411, 4
      %v1414 = vshll.u32 %v1353, 16
      %v1416 = vrot.slane %v1414, 5
      %v1417 = vsel %vm659, %v1412, %v1416
      %v1419 = vshrl.u32 %v1354, 16
      %v1421 = vrot.slane %v1419, 4
      %v1422 = vshll.u32 %v1354, 16
      %v1424 = vrot.slane %v1422, 5
      %v1425 = vor.u32 %v1421, %v1424
      %v1426 = vrot.slane %v1425, 4
      %v1428 = vshll.u32 %v1355, 16
      %v1430 = vrot.slane %v1428, 5
      %v1431 = vsel %vm659, %v1426, %v1430
      %v1433 = vshrl.u32 %v1356, 16
      %v1435 = vrot.slane %v1433, 4
      %v1436 = vshll.u32 %v1356, 16
      %v1438 = vrot.slane %v1436, 5
      %v1439 = vor.u32 %v1435, %v1438
      %v1440 = vrot.slane %v1439, 4
      %v1442 = vshll.u32 %v1357, 16
      %v1444 = vrot.slane %v1442, 5
      %v1445 = vsel %vm659, %v1440, %v1444
      %v1447 = vshrl.u32 %v1358, 16
      %v1449 = vrot.slane %v1447, 4
      %v1450 = vshll.u32 %v1358, 16
      %v1452 = vrot.slane %v1450, 5
      %v1453 = vor.u32 %v1449, %v1452
      %v1454 = vrot.slane %v1453, 4
      %v1456 = vshll.u32 %v1359, 16
      %v1458 = vrot.slane %v1456, 5
      %v1459 = vsel %vm659, %v1454, %v1458
      %v1461 = vshrl.u32 %v1360, 16
      %v1463 = vrot.slane %v1461, 4
      %v1464 = vshll.u32 %v1360, 16
      %v1466 = vrot.slane %v1464, 5
      %v1467 = vor.u32 %v1463, %v1466
      %v1468 = vrot.slane %v1467, 4
      %v1470 = vshll.u32 %v1361, 16
      %v1472 = vrot.slane %v1470, 5
      %v1473 = vsel %vm659, %v1468, %v1472
      %s1474 = scalar_lea.vmem %s1, 10
      %v1475 = vld [vmem:[%s1474] sm:$0x3]
      %v1476 = vunpack.c.l.b16 %v1375
      %v1477 = vunpack.c.l.b16 %v1389
      %v1478 = vunpack.c.l.b16 %v1403
      %v1479 = vunpack.c.l.b16 %v1417
      %v1480 = vunpack.c.l.b16 %v1431
      %v1481 = vunpack.c.l.b16 %v1445
      %v1482 = vunpack.c.l.b16 %v1459
      %v1483 = vunpack.c.l.b16 %v1473
      %v1484 = vpack.c.b16 %v1477, %v1476
      %v1485 = vpack.c.b16 %v1479, %v1478
      %v1486 = vpack.c.b16 %v1481, %v1480
      %v1487 = vpack.c.b16 %v1483, %v1482
      %v1489 = vsel %vm321, %v1484, 0
      %v1492 = vsel %vm321, %v1485, 0
      %v1495 = vsel %vm321, %v1486, 0
      %v1498 = vsel %vm321, %v1487, 0
      %v1501 = vsel %vm334, %v1475, 0
      %1503 = vmatprep.subr.bf16.mxu0 0
      %1504 = vmatpush1.bf16.msra.mxu0 0
      %1505 = vmatprep.subr.bf16.mxu0 0
      %1506 = vmatpush1.bf16.msra.mxu0 0
      %1507 = vmatprep.subr.bf16.mxu0 0
      %1508 = vmatpush1.bf16.msra.mxu0 0
      %1509 = vmatprep.subr.bf16.mxu0 0
      %1510 = vmatpush1.bf16.msra.mxu0 0
      %1511 = vmatprep.subr.bf16.mxu0 0
      %1512 = vmatpush1.bf16.msra.mxu0 0
      %1513 = vmatprep.subr.bf16.mxu0 0
      %1514 = vmatpush1.bf16.msra.mxu0 0
      %1515 = vmatprep.subr.bf16.mxu0 0
      %1516 = vmatpush1.bf16.msra.mxu0 0
      %1517 = vmatprep.subr.bf16.mxu0 0
      %1518 = vmatpush1.bf16.msra.mxu0 %v1501
      %1519 = vmatprep.subr.bf16.mxu0 0
      %1520 = vmatpush2.bf16.msra.mxu0 0
      %1521 = vmatprep.subr.bf16.mxu0 0
      %1522 = vmatpush2.bf16.msra.mxu0 0
      %1523 = vmatprep.subr.bf16.mxu0 0
      %1524 = vmatpush2.bf16.msra.mxu0 0
      %1525 = vmatprep.subr.bf16.mxu0 0
      %1526 = vmatpush2.bf16.msra.mxu0 0
      %1527 = vmatprep.subr.bf16.mxu0 0
      %1528 = vmatpush2.bf16.msra.mxu0 0
      %1529 = vmatprep.subr.bf16.mxu0 0
      %1530 = vmatpush2.bf16.msra.mxu0 0
      %1531 = vmatprep.subr.bf16.mxu0 0
      %1532 = vmatpush2.bf16.msra.mxu0 0
      %1533 = vmatprep.subr.bf16.mxu0 0
      %1534 = vmatpush2.bf16.msra.mxu0 0
      %1535 = vmatprep.mubr.bf16.mxu0 0
      %1536 = vmatmul.mubr.bf16.gmra.mxu0 %v1489
      %v1537 = vpop.f32.mrf.mxu0
      %v1538 = vadd.f32 0.0, %v1537
      %v1539 = vpop.f32.mrf.mxu0
      %v1540 = vpop.f32.mrf.mxu0
      %v1541 = vadd.f32 0.0, %v1540
      %v1542 = vpop.f32.mrf.mxu0
      %1543 = vmatprep.mubr.bf16.mxu0 0
      %1544 = vmatmul.mubr.bf16.gmra.mxu0 %v1492
      %v1545 = vpop.f32.mrf.mxu0
      %v1546 = vadd.f32 0.0, %v1545
      %v1547 = vpop.f32.mrf.mxu0
      %v1548 = vpop.f32.mrf.mxu0
      %v1549 = vadd.f32 0.0, %v1548
      %v1550 = vpop.f32.mrf.mxu0
      %1551 = vmatprep.mubr.bf16.mxu0 0
      %1552 = vmatmul.mubr.bf16.gmra.mxu0 %v1495
      %v1553 = vpop.f32.mrf.mxu0
      %v1554 = vadd.f32 0.0, %v1553
      %v1555 = vpop.f32.mrf.mxu0
      %v1556 = vpop.f32.mrf.mxu0
      %v1557 = vadd.f32 0.0, %v1556
      %v1558 = vpop.f32.mrf.mxu0
      %1559 = vmatprep.mubr.bf16.mxu0 0
      %1560 = vmatmul.mubr.bf16.gmra.mxu0 %v1498
      %v1561 = vpop.f32.mrf.mxu0
      %v1562 = vadd.f32 0.0, %v1561
      %v1563 = vpop.f32.mrf.mxu0
      %v1564 = vpop.f32.mrf.mxu0
      %v1565 = vadd.f32 0.0, %v1564
      %v1566 = vpop.f32.mrf.mxu0
      %1567 = vdwg.mxu0
      %v1568 = vadd.f32 %v1260, %v1538
      %v1569 = vadd.f32 %v1261, %v1541
      %v1570 = vadd.f32 %v1262, %v1546
      %v1571 = vadd.f32 %v1263, %v1549
      %v1572 = vadd.f32 %v1264, %v1554
      %v1573 = vadd.f32 %v1265, %v1557
      %v1574 = vadd.f32 %v1266, %v1562
      %v1575 = vadd.f32 %v1267, %v1565
      %s1576 = scalar_lea.vmem %s5, 10
      %v1577 = vld [vmem:[%s1576] sm:$0x3]
      %v1579 = vsel %vm334, %v1577, 0
      %1581 = vmatprep.subr.bf16.mxu0 0
      %1582 = vmatpush1.bf16.msra.mxu0 0
      %1583 = vmatprep.subr.bf16.mxu0 0
      %1584 = vmatpush1.bf16.msra.mxu0 0
      %1585 = vmatprep.subr.bf16.mxu0 0
      %1586 = vmatpush1.bf16.msra.mxu0 0
      %1587 = vmatprep.subr.bf16.mxu0 0
      %1588 = vmatpush1.bf16.msra.mxu0 0
      %1589 = vmatprep.subr.bf16.mxu0 0
      %1590 = vmatpush1.bf16.msra.mxu0 0
      %1591 = vmatprep.subr.bf16.mxu0 0
      %1592 = vmatpush1.bf16.msra.mxu0 0
      %1593 = vmatprep.subr.bf16.mxu0 0
      %1594 = vmatpush1.bf16.msra.mxu0 0
      %1595 = vmatprep.subr.bf16.mxu0 0
      %1596 = vmatpush1.bf16.msra.mxu0 %v1579
      %1597 = vmatprep.subr.bf16.mxu0 0
      %1598 = vmatpush2.bf16.msra.mxu0 0
      %1599 = vmatprep.subr.bf16.mxu0 0
      %1600 = vmatpush2.bf16.msra.mxu0 0
      %1601 = vmatprep.subr.bf16.mxu0 0
      %1602 = vmatpush2.bf16.msra.mxu0 0
      %1603 = vmatprep.subr.bf16.mxu0 0
      %1604 = vmatpush2.bf16.msra.mxu0 0
      %1605 = vmatprep.subr.bf16.mxu0 0
      %1606 = vmatpush2.bf16.msra.mxu0 0
      %1607 = vmatprep.subr.bf16.mxu0 0
      %1608 = vmatpush2.bf16.msra.mxu0 0
      %1609 = vmatprep.subr.bf16.mxu0 0
      %1610 = vmatpush2.bf16.msra.mxu0 0
      %1611 = vmatprep.subr.bf16.mxu0 0
      %1612 = vmatpush2.bf16.msra.mxu0 0
      %1613 = vmatprep.mubr.bf16.mxu0 0
      %1614 = vmatmul.mubr.bf16.gmra.mxu0 %v1489
      %v1615 = vpop.f32.mrf.mxu0
      %v1616 = vadd.f32 0.0, %v1615
      %v1617 = vpop.f32.mrf.mxu0
      %v1618 = vpop.f32.mrf.mxu0
      %v1619 = vadd.f32 0.0, %v1618
      %v1620 = vpop.f32.mrf.mxu0
      %1621 = vmatprep.mubr.bf16.mxu0 0
      %1622 = vmatmul.mubr.bf16.gmra.mxu0 %v1492
      %v1623 = vpop.f32.mrf.mxu0
      %v1624 = vadd.f32 0.0, %v1623
      %v1625 = vpop.f32.mrf.mxu0
      %v1626 = vpop.f32.mrf.mxu0
      %v1627 = vadd.f32 0.0, %v1626
      %v1628 = vpop.f32.mrf.mxu0
      %1629 = vmatprep.mubr.bf16.mxu0 0
      %1630 = vmatmul.mubr.bf16.gmra.mxu0 %v1495
      %v1631 = vpop.f32.mrf.mxu0
      %v1632 = vadd.f32 0.0, %v1631
      %v1633 = vpop.f32.mrf.mxu0
      %v1634 = vpop.f32.mrf.mxu0
      %v1635 = vadd.f32 0.0, %v1634
      %v1636 = vpop.f32.mrf.mxu0
      %1637 = vmatprep.mubr.bf16.mxu0 0
      %1638 = vmatmul.mubr.bf16.gmra.mxu0 %v1498
      %v1639 = vpop.f32.mrf.mxu0
      %v1640 = vadd.f32 0.0, %v1639
      %v1641 = vpop.f32.mrf.mxu0
      %v1642 = vpop.f32.mrf.mxu0
      %v1643 = vadd.f32 0.0, %v1642
      %v1644 = vpop.f32.mrf.mxu0
      %1645 = vdwg.mxu0
      %v1646 = vadd.f32 %v1338, %v1616
      %v1647 = vadd.f32 %v1339, %v1619
      %v1648 = vadd.f32 %v1340, %v1624
      %v1649 = vadd.f32 %v1341, %v1627
      %v1650 = vadd.f32 %v1342, %v1632
      %v1651 = vadd.f32 %v1343, %v1635
      %v1652 = vadd.f32 %v1344, %v1640
      %v1653 = vadd.f32 %v1345, %v1643
      %s1654 = scalar_lea.vmem %s273, 8
      %v1655 = vld [vmem:[%s1654] sm:$0xf]
      %v1656 = vld [vmem:[%s1654 + $0x8] sm:$0xf]
      %v1657 = vld [vmem:[%s1654 + $0x10] sm:$0xf]
      %v1658 = vld [vmem:[%s1654 + $0x18] sm:$0xf]
      %v1659 = vld [vmem:[%s1654 + $0x20] sm:$0xf]
      %v1660 = vld [vmem:[%s1654 + $0x28] sm:$0xf]
      %v1661 = vld [vmem:[%s1654 + $0x30] sm:$0xf]
      %v1662 = vld [vmem:[%s1654 + $0x38] sm:$0xf]
      %s1663 = scalar_lea.vmem %s1, 12
      %v1664 = vld [vmem:[%s1663] sm:$0x3]
      %v1673 = vunpack.c.l.b16 %v1655
      %v1674 = vunpack.c.l.b16 %v1656
      %v1675 = vunpack.c.l.b16 %v1657
      %v1676 = vunpack.c.l.b16 %v1658
      %v1677 = vunpack.c.l.b16 %v1659
      %v1678 = vunpack.c.l.b16 %v1660
      %v1679 = vunpack.c.l.b16 %v1661
      %v1680 = vunpack.c.l.b16 %v1662
      %v1681 = vpack.c.b16 %v1674, %v1673
      %v1682 = vpack.c.b16 %v1676, %v1675
      %v1683 = vpack.c.b16 %v1678, %v1677
      %v1684 = vpack.c.b16 %v1680, %v1679
      %v1686 = vsel %vm321, %v1681, 0
      %v1689 = vsel %vm321, %v1682, 0
      %v1692 = vsel %vm321, %v1683, 0
      %v1695 = vsel %vm321, %v1684, 0
      %v1698 = vsel %vm334, %v1664, 0
      %1700 = vmatprep.subr.bf16.mxu0 0
      %1701 = vmatpush1.bf16.msra.mxu0 0
      %1702 = vmatprep.subr.bf16.mxu0 0
      %1703 = vmatpush1.bf16.msra.mxu0 0
      %1704 = vmatprep.subr.bf16.mxu0 0
      %1705 = vmatpush1.bf16.msra.mxu0 0
      %1706 = vmatprep.subr.bf16.mxu0 0
      %1707 = vmatpush1.bf16.msra.mxu0 0
      %1708 = vmatprep.subr.bf16.mxu0 0
      %1709 = vmatpush1.bf16.msra.mxu0 0
      %1710 = vmatprep.subr.bf16.mxu0 0
      %1711 = vmatpush1.bf16.msra.mxu0 0
      %1712 = vmatprep.subr.bf16.mxu0 0
      %1713 = vmatpush1.bf16.msra.mxu0 0
      %1714 = vmatprep.subr.bf16.mxu0 0
      %1715 = vmatpush1.bf16.msra.mxu0 %v1698
      %1716 = vmatprep.subr.bf16.mxu0 0
      %1717 = vmatpush2.bf16.msra.mxu0 0
      %1718 = vmatprep.subr.bf16.mxu0 0
      %1719 = vmatpush2.bf16.msra.mxu0 0
      %1720 = vmatprep.subr.bf16.mxu0 0
      %1721 = vmatpush2.bf16.msra.mxu0 0
      %1722 = vmatprep.subr.bf16.mxu0 0
      %1723 = vmatpush2.bf16.msra.mxu0 0
      %1724 = vmatprep.subr.bf16.mxu0 0
      %1725 = vmatpush2.bf16.msra.mxu0 0
      %1726 = vmatprep.subr.bf16.mxu0 0
      %1727 = vmatpush2.bf16.msra.mxu0 0
      %1728 = vmatprep.subr.bf16.mxu0 0
      %1729 = vmatpush2.bf16.msra.mxu0 0
      %1730 = vmatprep.subr.bf16.mxu0 0
      %1731 = vmatpush2.bf16.msra.mxu0 0
      %1732 = vmatprep.mubr.bf16.mxu0 0
      %1733 = vmatmul.mubr.bf16.gmra.mxu0 %v1686
      %v1734 = vpop.f32.mrf.mxu0
      %v1735 = vadd.f32 0.0, %v1734
      %v1736 = vpop.f32.mrf.mxu0
      %v1737 = vpop.f32.mrf.mxu0
      %v1738 = vadd.f32 0.0, %v1737
      %v1739 = vpop.f32.mrf.mxu0
      %1740 = vmatprep.mubr.bf16.mxu0 0
      %1741 = vmatmul.mubr.bf16.gmra.mxu0 %v1689
      %v1742 = vpop.f32.mrf.mxu0
      %v1743 = vadd.f32 0.0, %v1742
      %v1744 = vpop.f32.mrf.mxu0
      %v1745 = vpop.f32.mrf.mxu0
      %v1746 = vadd.f32 0.0, %v1745
      %v1747 = vpop.f32.mrf.mxu0
      %1748 = vmatprep.mubr.bf16.mxu0 0
      %1749 = vmatmul.mubr.bf16.gmra.mxu0 %v1692
      %v1750 = vpop.f32.mrf.mxu0
      %v1751 = vadd.f32 0.0, %v1750
      %v1752 = vpop.f32.mrf.mxu0
      %v1753 = vpop.f32.mrf.mxu0
      %v1754 = vadd.f32 0.0, %v1753
      %v1755 = vpop.f32.mrf.mxu0
      %1756 = vmatprep.mubr.bf16.mxu0 0
      %1757 = vmatmul.mubr.bf16.gmra.mxu0 %v1695
      %v1758 = vpop.f32.mrf.mxu0
      %v1759 = vadd.f32 0.0, %v1758
      %v1760 = vpop.f32.mrf.mxu0
      %v1761 = vpop.f32.mrf.mxu0
      %v1762 = vadd.f32 0.0, %v1761
      %v1763 = vpop.f32.mrf.mxu0
      %1764 = vdwg.mxu0
      %v1765 = vadd.f32 %v1568, %v1735
      %v1766 = vadd.f32 %v1569, %v1738
      %v1767 = vadd.f32 %v1570, %v1743
      %v1768 = vadd.f32 %v1571, %v1746
      %v1769 = vadd.f32 %v1572, %v1751
      %v1770 = vadd.f32 %v1573, %v1754
      %v1771 = vadd.f32 %v1574, %v1759
      %v1772 = vadd.f32 %v1575, %v1762
      %s1773 = scalar_lea.vmem %s5, 12
      %v1774 = vld [vmem:[%s1773] sm:$0x3]
      %v1776 = vsel %vm334, %v1774, 0
      %1778 = vmatprep.subr.bf16.mxu0 0
      %1779 = vmatpush1.bf16.msra.mxu0 0
      %1780 = vmatprep.subr.bf16.mxu0 0
      %1781 = vmatpush1.bf16.msra.mxu0 0
      %1782 = vmatprep.subr.bf16.mxu0 0
      %1783 = vmatpush1.bf16.msra.mxu0 0
      %1784 = vmatprep.subr.bf16.mxu0 0
      %1785 = vmatpush1.bf16.msra.mxu0 0
      %1786 = vmatprep.subr.bf16.mxu0 0
      %1787 = vmatpush1.bf16.msra.mxu0 0
      %1788 = vmatprep.subr.bf16.mxu0 0
      %1789 = vmatpush1.bf16.msra.mxu0 0
      %1790 = vmatprep.subr.bf16.mxu0 0
      %1791 = vmatpush1.bf16.msra.mxu0 0
      %1792 = vmatprep.subr.bf16.mxu0 0
      %1793 = vmatpush1.bf16.msra.mxu0 %v1776
      %1794 = vmatprep.subr.bf16.mxu0 0
      %1795 = vmatpush2.bf16.msra.mxu0 0
      %1796 = vmatprep.subr.bf16.mxu0 0
      %1797 = vmatpush2.bf16.msra.mxu0 0
      %1798 = vmatprep.subr.bf16.mxu0 0
      %1799 = vmatpush2.bf16.msra.mxu0 0
      %1800 = vmatprep.subr.bf16.mxu0 0
      %1801 = vmatpush2.bf16.msra.mxu0 0
      %1802 = vmatprep.subr.bf16.mxu0 0
      %1803 = vmatpush2.bf16.msra.mxu0 0
      %1804 = vmatprep.subr.bf16.mxu0 0
      %1805 = vmatpush2.bf16.msra.mxu0 0
      %1806 = vmatprep.subr.bf16.mxu0 0
      %1807 = vmatpush2.bf16.msra.mxu0 0
      %1808 = vmatprep.subr.bf16.mxu0 0
      %1809 = vmatpush2.bf16.msra.mxu0 0
      %1810 = vmatprep.mubr.bf16.mxu0 0
      %1811 = vmatmul.mubr.bf16.gmra.mxu0 %v1686
      %v1812 = vpop.f32.mrf.mxu0
      %v1813 = vadd.f32 0.0, %v1812
      %v1814 = vpop.f32.mrf.mxu0
      %v1815 = vpop.f32.mrf.mxu0
      %v1816 = vadd.f32 0.0, %v1815
      %v1817 = vpop.f32.mrf.mxu0
      %1818 = vmatprep.mubr.bf16.mxu0 0
      %1819 = vmatmul.mubr.bf16.gmra.mxu0 %v1689
      %v1820 = vpop.f32.mrf.mxu0
      %v1821 = vadd.f32 0.0, %v1820
      %v1822 = vpop.f32.mrf.mxu0
      %v1823 = vpop.f32.mrf.mxu0
      %v1824 = vadd.f32 0.0, %v1823
      %v1825 = vpop.f32.mrf.mxu0
      %1826 = vmatprep.mubr.bf16.mxu0 0
      %1827 = vmatmul.mubr.bf16.gmra.mxu0 %v1692
      %v1828 = vpop.f32.mrf.mxu0
      %v1829 = vadd.f32 0.0, %v1828
      %v1830 = vpop.f32.mrf.mxu0
      %v1831 = vpop.f32.mrf.mxu0
      %v1832 = vadd.f32 0.0, %v1831
      %v1833 = vpop.f32.mrf.mxu0
      %1834 = vmatprep.mubr.bf16.mxu0 0
      %1835 = vmatmul.mubr.bf16.gmra.mxu0 %v1695
      %v1836 = vpop.f32.mrf.mxu0
      %v1837 = vadd.f32 0.0, %v1836
      %v1838 = vpop.f32.mrf.mxu0
      %v1839 = vpop.f32.mrf.mxu0
      %v1840 = vadd.f32 0.0, %v1839
      %v1841 = vpop.f32.mrf.mxu0
      %1842 = vdwg.mxu0
      %v1843 = vadd.f32 %v1646, %v1813
      %v1844 = vadd.f32 %v1647, %v1816
      %v1845 = vadd.f32 %v1648, %v1821
      %v1846 = vadd.f32 %v1649, %v1824
      %v1847 = vadd.f32 %v1650, %v1829
      %v1848 = vadd.f32 %v1651, %v1832
      %v1849 = vadd.f32 %v1652, %v1837
      %v1850 = vadd.f32 %v1653, %v1840
      %s1851 = scalar_lea.vmem %s273, 80
      %v1852 = vld [vmem:[%s1851] sm:$0xf]
      %v1853 = vld [vmem:[%s1851 + $0x8] sm:$0xf]
      %v1854 = vld [vmem:[%s1851 + $0x10] sm:$0xf]
      %v1855 = vld [vmem:[%s1851 + $0x18] sm:$0xf]
      %v1856 = vld [vmem:[%s1851 + $0x20] sm:$0xf]
      %v1857 = vld [vmem:[%s1851 + $0x28] sm:$0xf]
      %v1858 = vld [vmem:[%s1851 + $0x30] sm:$0xf]
      %v1859 = vld [vmem:[%s1851 + $0x38] sm:$0xf]
      %s1860 = scalar_lea.vmem %s1, 14
      %v1861 = vld [vmem:[%s1860] sm:$0x3]
      %v1870 = vunpack.c.l.b16 %v1852
      %v1871 = vunpack.c.l.b16 %v1853
      %v1872 = vunpack.c.l.b16 %v1854
      %v1873 = vunpack.c.l.b16 %v1855
      %v1874 = vunpack.c.l.b16 %v1856
      %v1875 = vunpack.c.l.b16 %v1857
      %v1876 = vunpack.c.l.b16 %v1858
      %v1877 = vunpack.c.l.b16 %v1859
      %v1878 = vpack.c.b16 %v1871, %v1870
      %v1879 = vpack.c.b16 %v1873, %v1872
      %v1880 = vpack.c.b16 %v1875, %v1874
      %v1881 = vpack.c.b16 %v1877, %v1876
      %v1883 = vsel %vm321, %v1878, 0
      %v1886 = vsel %vm321, %v1879, 0
      %v1889 = vsel %vm321, %v1880, 0
      %v1892 = vsel %vm321, %v1881, 0
      %v1895 = vsel %vm334, %v1861, 0
      %1897 = vmatprep.subr.bf16.mxu0 0
      %1898 = vmatpush1.bf16.msra.mxu0 0
      %1899 = vmatprep.subr.bf16.mxu0 0
      %1900 = vmatpush1.bf16.msra.mxu0 0
      %1901 = vmatprep.subr.bf16.mxu0 0
      %1902 = vmatpush1.bf16.msra.mxu0 0
      %1903 = vmatprep.subr.bf16.mxu0 0
      %1904 = vmatpush1.bf16.msra.mxu0 0
      %1905 = vmatprep.subr.bf16.mxu0 0
      %1906 = vmatpush1.bf16.msra.mxu0 0
      %1907 = vmatprep.subr.bf16.mxu0 0
      %1908 = vmatpush1.bf16.msra.mxu0 0
      %1909 = vmatprep.subr.bf16.mxu0 0
      %1910 = vmatpush1.bf16.msra.mxu0 0
      %1911 = vmatprep.subr.bf16.mxu0 0
      %1912 = vmatpush1.bf16.msra.mxu0 %v1895
      %1913 = vmatprep.subr.bf16.mxu0 0
      %1914 = vmatpush2.bf16.msra.mxu0 0
      %1915 = vmatprep.subr.bf16.mxu0 0
      %1916 = vmatpush2.bf16.msra.mxu0 0
      %1917 = vmatprep.subr.bf16.mxu0 0
      %1918 = vmatpush2.bf16.msra.mxu0 0
      %1919 = vmatprep.subr.bf16.mxu0 0
      %1920 = vmatpush2.bf16.msra.mxu0 0
      %1921 = vmatprep.subr.bf16.mxu0 0
      %1922 = vmatpush2.bf16.msra.mxu0 0
      %1923 = vmatprep.subr.bf16.mxu0 0
      %1924 = vmatpush2.bf16.msra.mxu0 0
      %1925 = vmatprep.subr.bf16.mxu0 0
      %1926 = vmatpush2.bf16.msra.mxu0 0
      %1927 = vmatprep.subr.bf16.mxu0 0
      %1928 = vmatpush2.bf16.msra.mxu0 0
      %1929 = vmatprep.mubr.bf16.mxu0 0
      %1930 = vmatmul.mubr.bf16.gmra.mxu0 %v1883
      %v1931 = vpop.f32.mrf.mxu0
      %v1932 = vadd.f32 0.0, %v1931
      %v1933 = vpop.f32.mrf.mxu0
      %v1934 = vpop.f32.mrf.mxu0
      %v1935 = vadd.f32 0.0, %v1934
      %v1936 = vpop.f32.mrf.mxu0
      %1937 = vmatprep.mubr.bf16.mxu0 0
      %1938 = vmatmul.mubr.bf16.gmra.mxu0 %v1886
      %v1939 = vpop.f32.mrf.mxu0
      %v1940 = vadd.f32 0.0, %v1939
      %v1941 = vpop.f32.mrf.mxu0
      %v1942 = vpop.f32.mrf.mxu0
      %v1943 = vadd.f32 0.0, %v1942
      %v1944 = vpop.f32.mrf.mxu0
      %1945 = vmatprep.mubr.bf16.mxu0 0
      %1946 = vmatmul.mubr.bf16.gmra.mxu0 %v1889
      %v1947 = vpop.f32.mrf.mxu0
      %v1948 = vadd.f32 0.0, %v1947
      %v1949 = vpop.f32.mrf.mxu0
      %v1950 = vpop.f32.mrf.mxu0
      %v1951 = vadd.f32 0.0, %v1950
      %v1952 = vpop.f32.mrf.mxu0
      %1953 = vmatprep.mubr.bf16.mxu0 0
      %1954 = vmatmul.mubr.bf16.gmra.mxu0 %v1892
      %v1955 = vpop.f32.mrf.mxu0
      %v1956 = vadd.f32 0.0, %v1955
      %v1957 = vpop.f32.mrf.mxu0
      %v1958 = vpop.f32.mrf.mxu0
      %v1959 = vadd.f32 0.0, %v1958
      %v1960 = vpop.f32.mrf.mxu0
      %1961 = vdwg.mxu0
      %v1962 = vadd.f32 %v1765, %v1932
      %v1963 = vadd.f32 %v1766, %v1935
      %v1964 = vadd.f32 %v1767, %v1940
      %v1965 = vadd.f32 %v1768, %v1943
      %v1966 = vadd.f32 %v1769, %v1948
      %v1967 = vadd.f32 %v1770, %v1951
      %v1968 = vadd.f32 %v1771, %v1956
      %v1969 = vadd.f32 %v1772, %v1959
      %s1970 = scalar_lea.vmem %s5, 14
      %v1971 = vld [vmem:[%s1970] sm:$0x3]
      %v1973 = vsel %vm334, %v1971, 0
      %1975 = vmatprep.subr.bf16.mxu0 0
      %1976 = vmatpush1.bf16.msra.mxu0 0
      %1977 = vmatprep.subr.bf16.mxu0 0
      %1978 = vmatpush1.bf16.msra.mxu0 0
      %1979 = vmatprep.subr.bf16.mxu0 0
      %1980 = vmatpush1.bf16.msra.mxu0 0
      %1981 = vmatprep.subr.bf16.mxu0 0
      %1982 = vmatpush1.bf16.msra.mxu0 0
      %1983 = vmatprep.subr.bf16.mxu0 0
      %1984 = vmatpush1.bf16.msra.mxu0 0
      %1985 = vmatprep.subr.bf16.mxu0 0
      %1986 = vmatpush1.bf16.msra.mxu0 0
      %1987 = vmatprep.subr.bf16.mxu0 0
      %1988 = vmatpush1.bf16.msra.mxu0 0
      %1989 = vmatprep.subr.bf16.mxu0 0
      %1990 = vmatpush1.bf16.msra.mxu0 %v1973
      %1991 = vmatprep.subr.bf16.mxu0 0
      %1992 = vmatpush2.bf16.msra.mxu0 0
      %1993 = vmatprep.subr.bf16.mxu0 0
      %1994 = vmatpush2.bf16.msra.mxu0 0
      %1995 = vmatprep.subr.bf16.mxu0 0
      %1996 = vmatpush2.bf16.msra.mxu0 0
      %1997 = vmatprep.subr.bf16.mxu0 0
      %1998 = vmatpush2.bf16.msra.mxu0 0
      %1999 = vmatprep.subr.bf16.mxu0 0
      %2000 = vmatpush2.bf16.msra.mxu0 0
      %2001 = vmatprep.subr.bf16.mxu0 0
      %2002 = vmatpush2.bf16.msra.mxu0 0
      %2003 = vmatprep.subr.bf16.mxu0 0
      %2004 = vmatpush2.bf16.msra.mxu0 0
      %2005 = vmatprep.subr.bf16.mxu0 0
      %2006 = vmatpush2.bf16.msra.mxu0 0
      %2007 = vmatprep.mubr.bf16.mxu0 0
      %2008 = vmatmul.mubr.bf16.gmra.mxu0 %v1883
      %v2009 = vpop.f32.mrf.mxu0
      %v2010 = vadd.f32 0.0, %v2009
      %v2011 = vpop.f32.mrf.mxu0
      %v2012 = vpop.f32.mrf.mxu0
      %v2013 = vadd.f32 0.0, %v2012
      %v2014 = vpop.f32.mrf.mxu0
      %2015 = vmatprep.mubr.bf16.mxu0 0
      %2016 = vmatmul.mubr.bf16.gmra.mxu0 %v1886
      %v2017 = vpop.f32.mrf.mxu0
      %v2018 = vadd.f32 0.0, %v2017
      %v2019 = vpop.f32.mrf.mxu0
      %v2020 = vpop.f32.mrf.mxu0
      %v2021 = vadd.f32 0.0, %v2020
      %v2022 = vpop.f32.mrf.mxu0
      %2023 = vmatprep.mubr.bf16.mxu0 0
      %2024 = vmatmul.mubr.bf16.gmra.mxu0 %v1889
      %v2025 = vpop.f32.mrf.mxu0
      %v2026 = vadd.f32 0.0, %v2025
      %v2027 = vpop.f32.mrf.mxu0
      %v2028 = vpop.f32.mrf.mxu0
      %v2029 = vadd.f32 0.0, %v2028
      %v2030 = vpop.f32.mrf.mxu0
      %2031 = vmatprep.mubr.bf16.mxu0 0
      %2032 = vmatmul.mubr.bf16.gmra.mxu0 %v1892
      %v2033 = vpop.f32.mrf.mxu0
      %v2034 = vadd.f32 0.0, %v2033
      %v2035 = vpop.f32.mrf.mxu0
      %v2036 = vpop.f32.mrf.mxu0
      %v2037 = vadd.f32 0.0, %v2036
      %v2038 = vpop.f32.mrf.mxu0
      %2039 = vdwg.mxu0
      %v2040 = vadd.f32 %v1843, %v2010
      %v2041 = vadd.f32 %v1844, %v2013
      %v2042 = vadd.f32 %v1845, %v2018
      %v2043 = vadd.f32 %v1846, %v2021
      %v2044 = vadd.f32 %v1847, %v2026
      %v2045 = vadd.f32 %v1848, %v2029
      %v2046 = vadd.f32 %v1849, %v2034
      %v2047 = vadd.f32 %v1850, %v2037
      %v2048 = vld [vmem:[%s1654] sm:$0xf]
      %v2049 = vld [vmem:[%s1654 + $0x4] sm:$0x1]
      %v2050 = vld [vmem:[%s1654 + $0x8] sm:$0xf]
      %v2051 = vld [vmem:[%s1654 + $0xc] sm:$0x1]
      %v2052 = vld [vmem:[%s1654 + $0x10] sm:$0xf]
      %v2053 = vld [vmem:[%s1654 + $0x14] sm:$0x1]
      %v2054 = vld [vmem:[%s1654 + $0x18] sm:$0xf]
      %v2055 = vld [vmem:[%s1654 + $0x1c] sm:$0x1]
      %v2056 = vld [vmem:[%s1654 + $0x20] sm:$0xf]
      %v2057 = vld [vmem:[%s1654 + $0x24] sm:$0x1]
      %v2058 = vld [vmem:[%s1654 + $0x28] sm:$0xf]
      %v2059 = vld [vmem:[%s1654 + $0x2c] sm:$0x1]
      %v2060 = vld [vmem:[%s1654 + $0x30] sm:$0xf]
      %v2061 = vld [vmem:[%s1654 + $0x34] sm:$0x1]
      %v2062 = vld [vmem:[%s1654 + $0x38] sm:$0xf]
      %v2063 = vld [vmem:[%s1654 + $0x3c] sm:$0x1]
      %v2065 = vshrl.u32 %v2048, 16
      %v2067 = vrot.slane %v2065, 4
      %v2068 = vshll.u32 %v2048, 16
      %v2070 = vrot.slane %v2068, 5
      %v2071 = vor.u32 %v2067, %v2070
      %v2072 = vrot.slane %v2071, 4
      %v2074 = vshll.u32 %v2049, 16
      %v2076 = vrot.slane %v2074, 5
      %v2077 = vsel %vm659, %v2072, %v2076
      %v2079 = vshrl.u32 %v2050, 16
      %v2081 = vrot.slane %v2079, 4
      %v2082 = vshll.u32 %v2050, 16
      %v2084 = vrot.slane %v2082, 5
      %v2085 = vor.u32 %v2081, %v2084
      %v2086 = vrot.slane %v2085, 4
      %v2088 = vshll.u32 %v2051, 16
      %v2090 = vrot.slane %v2088, 5
      %v2091 = vsel %vm659, %v2086, %v2090
      %v2093 = vshrl.u32 %v2052, 16
      %v2095 = vrot.slane %v2093, 4
      %v2096 = vshll.u32 %v2052, 16
      %v2098 = vrot.slane %v2096, 5
      %v2099 = vor.u32 %v2095, %v2098
      %v2100 = vrot.slane %v2099, 4
      %v2102 = vshll.u32 %v2053, 16
      %v2104 = vrot.slane %v2102, 5
      %v2105 = vsel %vm659, %v2100, %v2104
      %v2107 = vshrl.u32 %v2054, 16
      %v2109 = vrot.slane %v2107, 4
      %v2110 = vshll.u32 %v2054, 16
      %v2112 = vrot.slane %v2110, 5
      %v2113 = vor.u32 %v2109, %v2112
      %v2114 = vrot.slane %v2113, 4
      %v2116 = vshll.u32 %v2055, 16
      %v2118 = vrot.slane %v2116, 5
      %v2119 = vsel %vm659, %v2114, %v2118
      %v2121 = vshrl.u32 %v2056, 16
      %v2123 = vrot.slane %v2121, 4
      %v2124 = vshll.u32 %v2056, 16
      %v2126 = vrot.slane %v2124, 5
      %v2127 = vor.u32 %v2123, %v2126
      %v2128 = vrot.slane %v2127, 4
      %v2130 = vshll.u32 %v2057, 16
      %v2132 = vrot.slane %v2130, 5
      %v2133 = vsel %vm659, %v2128, %v2132
      %v2135 = vshrl.u32 %v2058, 16
      %v2137 = vrot.slane %v2135, 4
      %v2138 = vshll.u32 %v2058, 16
      %v2140 = vrot.slane %v2138, 5
      %v2141 = vor.u32 %v2137, %v2140
      %v2142 = vrot.slane %v2141, 4
      %v2144 = vshll.u32 %v2059, 16
      %v2146 = vrot.slane %v2144, 5
      %v2147 = vsel %vm659, %v2142, %v2146
      %v2149 = vshrl.u32 %v2060, 16
      %v2151 = vrot.slane %v2149, 4
      %v2152 = vshll.u32 %v2060, 16
      %v2154 = vrot.slane %v2152, 5
      %v2155 = vor.u32 %v2151, %v2154
      %v2156 = vrot.slane %v2155, 4
      %v2158 = vshll.u32 %v2061, 16
      %v2160 = vrot.slane %v2158, 5
      %v2161 = vsel %vm659, %v2156, %v2160
      %v2163 = vshrl.u32 %v2062, 16
      %v2165 = vrot.slane %v2163, 4
      %v2166 = vshll.u32 %v2062, 16
      %v2168 = vrot.slane %v2166, 5
      %v2169 = vor.u32 %v2165, %v2168
      %v2170 = vrot.slane %v2169, 4
      %v2172 = vshll.u32 %v2063, 16
      %v2174 = vrot.slane %v2172, 5
      %v2175 = vsel %vm659, %v2170, %v2174
      %s2176 = scalar_lea.vmem %s1, 16
      %v2177 = vld [vmem:[%s2176] sm:$0x3]
      %v2178 = vunpack.c.l.b16 %v2077
      %v2179 = vunpack.c.l.b16 %v2091
      %v2180 = vunpack.c.l.b16 %v2105
      %v2181 = vunpack.c.l.b16 %v2119
      %v2182 = vunpack.c.l.b16 %v2133
      %v2183 = vunpack.c.l.b16 %v2147
      %v2184 = vunpack.c.l.b16 %v2161
      %v2185 = vunpack.c.l.b16 %v2175
      %v2186 = vpack.c.b16 %v2179, %v2178
      %v2187 = vpack.c.b16 %v2181, %v2180
      %v2188 = vpack.c.b16 %v2183, %v2182
      %v2189 = vpack.c.b16 %v2185, %v2184
      %v2191 = vsel %vm321, %v2186, 0
      %v2194 = vsel %vm321, %v2187, 0
      %v2197 = vsel %vm321, %v2188, 0
      %v2200 = vsel %vm321, %v2189, 0
      %v2203 = vsel %vm334, %v2177, 0
      %2205 = vmatprep.subr.bf16.mxu0 0
      %2206 = vmatpush1.bf16.msra.mxu0 0
      %2207 = vmatprep.subr.bf16.mxu0 0
      %2208 = vmatpush1.bf16.msra.mxu0 0
      %2209 = vmatprep.subr.bf16.mxu0 0
      %2210 = vmatpush1.bf16.msra.mxu0 0
      %2211 = vmatprep.subr.bf16.mxu0 0
      %2212 = vmatpush1.bf16.msra.mxu0 0
      %2213 = vmatprep.subr.bf16.mxu0 0
      %2214 = vmatpush1.bf16.msra.mxu0 0
      %2215 = vmatprep.subr.bf16.mxu0 0
      %2216 = vmatpush1.bf16.msra.mxu0 0
      %2217 = vmatprep.subr.bf16.mxu0 0
      %2218 = vmatpush1.bf16.msra.mxu0 0
      %2219 = vmatprep.subr.bf16.mxu0 0
      %2220 = vmatpush1.bf16.msra.mxu0 %v2203
      %2221 = vmatprep.subr.bf16.mxu0 0
      %2222 = vmatpush2.bf16.msra.mxu0 0
      %2223 = vmatprep.subr.bf16.mxu0 0
      %2224 = vmatpush2.bf16.msra.mxu0 0
      %2225 = vmatprep.subr.bf16.mxu0 0
      %2226 = vmatpush2.bf16.msra.mxu0 0
      %2227 = vmatprep.subr.bf16.mxu0 0
      %2228 = vmatpush2.bf16.msra.mxu0 0
      %2229 = vmatprep.subr.bf16.mxu0 0
      %2230 = vmatpush2.bf16.msra.mxu0 0
      %2231 = vmatprep.subr.bf16.mxu0 0
      %2232 = vmatpush2.bf16.msra.mxu0 0
      %2233 = vmatprep.subr.bf16.mxu0 0
      %2234 = vmatpush2.bf16.msra.mxu0 0
      %2235 = vmatprep.subr.bf16.mxu0 0
      %2236 = vmatpush2.bf16.msra.mxu0 0
      %2237 = vmatprep.mubr.bf16.mxu0 0
      %2238 = vmatmul.mubr.bf16.gmra.mxu0 %v2191
      %v2239 = vpop.f32.mrf.mxu0
      %v2240 = vadd.f32 0.0, %v2239
      %v2241 = vpop.f32.mrf.mxu0
      %v2242 = vpop.f32.mrf.mxu0
      %v2243 = vadd.f32 0.0, %v2242
      %v2244 = vpop.f32.mrf.mxu0
      %2245 = vmatprep.mubr.bf16.mxu0 0
      %2246 = vmatmul.mubr.bf16.gmra.mxu0 %v2194
      %v2247 = vpop.f32.mrf.mxu0
      %v2248 = vadd.f32 0.0, %v2247
      %v2249 = vpop.f32.mrf.mxu0
      %v2250 = vpop.f32.mrf.mxu0
      %v2251 = vadd.f32 0.0, %v2250
      %v2252 = vpop.f32.mrf.mxu0
      %2253 = vmatprep.mubr.bf16.mxu0 0
      %2254 = vmatmul.mubr.bf16.gmra.mxu0 %v2197
      %v2255 = vpop.f32.mrf.mxu0
      %v2256 = vadd.f32 0.0, %v2255
      %v2257 = vpop.f32.mrf.mxu0
      %v2258 = vpop.f32.mrf.mxu0
      %v2259 = vadd.f32 0.0, %v2258
      %v2260 = vpop.f32.mrf.mxu0
      %2261 = vmatprep.mubr.bf16.mxu0 0
      %2262 = vmatmul.mubr.bf16.gmra.mxu0 %v2200
      %v2263 = vpop.f32.mrf.mxu0
      %v2264 = vadd.f32 0.0, %v2263
      %v2265 = vpop.f32.mrf.mxu0
      %v2266 = vpop.f32.mrf.mxu0
      %v2267 = vadd.f32 0.0, %v2266
      %v2268 = vpop.f32.mrf.mxu0
      %2269 = vdwg.mxu0
      %v2270 = vadd.f32 %v1962, %v2240
      %v2271 = vadd.f32 %v1963, %v2243
      %v2272 = vadd.f32 %v1964, %v2248
      %v2273 = vadd.f32 %v1965, %v2251
      %v2274 = vadd.f32 %v1966, %v2256
      %v2275 = vadd.f32 %v1967, %v2259
      %v2276 = vadd.f32 %v1968, %v2264
      %v2277 = vadd.f32 %v1969, %v2267
      %s2278 = scalar_lea.vmem %s5, 16
      %v2279 = vld [vmem:[%s2278] sm:$0x3]
      %v2281 = vsel %vm334, %v2279, 0
      %2283 = vmatprep.subr.bf16.mxu0 0
      %2284 = vmatpush1.bf16.msra.mxu0 0
      %2285 = vmatprep.subr.bf16.mxu0 0
      %2286 = vmatpush1.bf16.msra.mxu0 0
      %2287 = vmatprep.subr.bf16.mxu0 0
      %2288 = vmatpush1.bf16.msra.mxu0 0
      %2289 = vmatprep.subr.bf16.mxu0 0
      %2290 = vmatpush1.bf16.msra.mxu0 0
      %2291 = vmatprep.subr.bf16.mxu0 0
      %2292 = vmatpush1.bf16.msra.mxu0 0
      %2293 = vmatprep.subr.bf16.mxu0 0
      %2294 = vmatpush1.bf16.msra.mxu0 0
      %2295 = vmatprep.subr.bf16.mxu0 0
      %2296 = vmatpush1.bf16.msra.mxu0 0
      %2297 = vmatprep.subr.bf16.mxu0 0
      %2298 = vmatpush1.bf16.msra.mxu0 %v2281
      %2299 = vmatprep.subr.bf16.mxu0 0
      %2300 = vmatpush2.bf16.msra.mxu0 0
      %2301 = vmatprep.subr.bf16.mxu0 0
      %2302 = vmatpush2.bf16.msra.mxu0 0
      %2303 = vmatprep.subr.bf16.mxu0 0
      %2304 = vmatpush2.bf16.msra.mxu0 0
      %2305 = vmatprep.subr.bf16.mxu0 0
      %2306 = vmatpush2.bf16.msra.mxu0 0
      %2307 = vmatprep.subr.bf16.mxu0 0
      %2308 = vmatpush2.bf16.msra.mxu0 0
      %2309 = vmatprep.subr.bf16.mxu0 0
      %2310 = vmatpush2.bf16.msra.mxu0 0
      %2311 = vmatprep.subr.bf16.mxu0 0
      %2312 = vmatpush2.bf16.msra.mxu0 0
      %2313 = vmatprep.subr.bf16.mxu0 0
      %2314 = vmatpush2.bf16.msra.mxu0 0
      %2315 = vmatprep.mubr.bf16.mxu0 0
      %2316 = vmatmul.mubr.bf16.gmra.mxu0 %v2191
      %v2317 = vpop.f32.mrf.mxu0
      %v2318 = vadd.f32 0.0, %v2317
      %v2319 = vpop.f32.mrf.mxu0
      %v2320 = vpop.f32.mrf.mxu0
      %v2321 = vadd.f32 0.0, %v2320
      %v2322 = vpop.f32.mrf.mxu0
      %2323 = vmatprep.mubr.bf16.mxu0 0
      %2324 = vmatmul.mubr.bf16.gmra.mxu0 %v2194
      %v2325 = vpop.f32.mrf.mxu0
      %v2326 = vadd.f32 0.0, %v2325
      %v2327 = vpop.f32.mrf.mxu0
      %v2328 = vpop.f32.mrf.mxu0
      %v2329 = vadd.f32 0.0, %v2328
      %v2330 = vpop.f32.mrf.mxu0
      %2331 = vmatprep.mubr.bf16.mxu0 0
      %2332 = vmatmul.mubr.bf16.gmra.mxu0 %v2197
      %v2333 = vpop.f32.mrf.mxu0
      %v2334 = vadd.f32 0.0, %v2333
      %v2335 = vpop.f32.mrf.mxu0
      %v2336 = vpop.f32.mrf.mxu0
      %v2337 = vadd.f32 0.0, %v2336
      %v2338 = vpop.f32.mrf.mxu0
      %2339 = vmatprep.mubr.bf16.mxu0 0
      %2340 = vmatmul.mubr.bf16.gmra.mxu0 %v2200
      %v2341 = vpop.f32.mrf.mxu0
      %v2342 = vadd.f32 0.0, %v2341
      %v2343 = vpop.f32.mrf.mxu0
      %v2344 = vpop.f32.mrf.mxu0
      %v2345 = vadd.f32 0.0, %v2344
      %v2346 = vpop.f32.mrf.mxu0
      %2347 = vdwg.mxu0
      %v2348 = vadd.f32 %v2040, %v2318
      %v2349 = vadd.f32 %v2041, %v2321
      %v2350 = vadd.f32 %v2042, %v2326
      %v2351 = vadd.f32 %v2043, %v2329
      %v2352 = vadd.f32 %v2044, %v2334
      %v2353 = vadd.f32 %v2045, %v2337
      %v2354 = vadd.f32 %v2046, %v2342
      %v2355 = vadd.f32 %v2047, %v2345
      %v2356 = vld [vmem:[%s6] sm:$0x1]
      %v2358 = vlaneseq
      %v2359 = vshrl.u32 %v2358, 7
      %v2360 = vsub.s32 0, %v2359
      %v2361 = vrot.slane %v2356, %v2360
      %v2363 = vadd.f32 %v2348, %v2361
      %v2364 = vadd.f32 %v2349, %v2361
      %v2365 = vadd.f32 %v2350, %v2361
      %v2366 = vadd.f32 %v2351, %v2361
      %v2367 = vadd.f32 %v2352, %v2361
      %v2368 = vadd.f32 %v2353, %v2361
      %v2369 = vadd.f32 %v2354, %v2361
      %v2370 = vadd.f32 %v2355, %v2361
      %v2371 = vld [vmem:[%s2] sm:$0x1]
      %v2373 = vlaneseq
      %v2374 = vshrl.u32 %v2373, 7
      %v2375 = vsub.s32 0, %v2374
      %v2376 = vrot.slane %v2371, %v2375
      %v2378 = vadd.f32 %v2270, %v2376
      %v2379 = vadd.f32 %v2271, %v2376
      %v2380 = vadd.f32 %v2272, %v2376
      %v2381 = vadd.f32 %v2273, %v2376
      %v2382 = vadd.f32 %v2274, %v2376
      %v2383 = vadd.f32 %v2275, %v2376
      %v2384 = vadd.f32 %v2276, %v2376
      %v2385 = vadd.f32 %v2277, %v2376
      %v2386 = vmax.f32 %v2378, 0.0
      %v2387 = vmax.f32 %v2379, 0.0
      %v2388 = vmax.f32 %v2380, 0.0
      %v2389 = vmax.f32 %v2381, 0.0
      %v2390 = vmax.f32 %v2382, 0.0
      %v2391 = vmax.f32 %v2383, 0.0
      %v2392 = vmax.f32 %v2384, 0.0
      %v2393 = vmax.f32 %v2385, 0.0
      %v2394 = vpack.c.bf16 %v2387, %v2386
      %v2395 = vpack.c.bf16 %v2389, %v2388
      %v2396 = vpack.c.bf16 %v2391, %v2390
      %v2397 = vpack.c.bf16 %v2393, %v2392
      %2398 = vst [vmem:[#allocation2] sm:$0xf] 0
      %2399 = vst [vmem:[#allocation2 + $0x4] sm:$0x1] 0
      %2400 = vst [vmem:[#allocation2 + $0x8] sm:$0xf] 0
      %2401 = vst [vmem:[#allocation2 + $0xc] sm:$0x1] 0
      %2402 = vst [vmem:[#allocation2 + $0x10] sm:$0xf] 0
      %2403 = vst [vmem:[#allocation2 + $0x14] sm:$0x1] 0
      %2404 = vst [vmem:[#allocation2 + $0x18] sm:$0xf] 0
      %2405 = vst [vmem:[#allocation2 + $0x1c] sm:$0x1] 0
      %2406 = vst [vmem:[#allocation2 + $0x20] sm:$0xf] 0
      %2407 = vst [vmem:[#allocation2 + $0x24] sm:$0x1] 0
      %2408 = vst [vmem:[#allocation2 + $0x28] sm:$0xf] 0
      %2409 = vst [vmem:[#allocation2 + $0x2c] sm:$0x1] 0
      %2410 = vst [vmem:[#allocation2 + $0x30] sm:$0xf] 0
      %2411 = vst [vmem:[#allocation2 + $0x34] sm:$0x1] 0
      %2412 = vst [vmem:[#allocation2 + $0x38] sm:$0xf] 0
      %2413 = vst [vmem:[#allocation2 + $0x3c] sm:$0x1] 0
      %2414 = vst [vmem:[#allocation2 + $0x40] sm:$0xf] 0
      %2415 = vst [vmem:[#allocation2 + $0x44] sm:$0x1] 0
      %2416 = vst [vmem:[#allocation2 + $0x48] sm:$0xf] 0
      %2417 = vst [vmem:[#allocation2 + $0x4c] sm:$0x1] 0
      %v2422 = vunpack.c.l.b16 %v2394
      %v2423 = vunpack.c.h.b16 %v2394
      %v2424 = vunpack.c.l.b16 %v2395
      %v2425 = vunpack.c.h.b16 %v2395
      %v2426 = vunpack.c.l.b16 %v2396
      %v2427 = vunpack.c.h.b16 %v2396
      %v2428 = vunpack.c.l.b16 %v2397
      %v2429 = vunpack.c.h.b16 %v2397
      %v2430 = vpack.c.b16 %v2422, %v2422
      %v2431 = vpack.c.b16 %v2423, %v2423
      %v2432 = vpack.c.b16 %v2424, %v2424
      %v2433 = vpack.c.b16 %v2425, %v2425
      %v2434 = vpack.c.b16 %v2426, %v2426
      %v2435 = vpack.c.b16 %v2427, %v2427
      %v2436 = vpack.c.b16 %v2428, %v2428
      %v2437 = vpack.c.b16 %v2429, %v2429
      %v2439 = vshrl.u32 %v2430, 16
      %v2441 = vrot.slane %v2439, 7
      %v2442 = vshll.u32 %v2430, 16
      %v2444 = vor.u32 %v2441, %v2442
      %v2445 = vrot.slane %v2441, 4
      %v2447 = vshrl.u32 %v2431, 16
      %v2449 = vrot.slane %v2447, 7
      %v2450 = vshll.u32 %v2431, 16
      %v2452 = vor.u32 %v2449, %v2450
      %v2453 = vrot.slane %v2449, 4
      %v2455 = vshrl.u32 %v2432, 16
      %v2457 = vrot.slane %v2455, 7
      %v2458 = vshll.u32 %v2432, 16
      %v2460 = vor.u32 %v2457, %v2458
      %v2461 = vrot.slane %v2457, 4
      %v2463 = vshrl.u32 %v2433, 16
      %v2465 = vrot.slane %v2463, 7
      %v2466 = vshll.u32 %v2433, 16
      %v2468 = vor.u32 %v2465, %v2466
      %v2469 = vrot.slane %v2465, 4
      %v2471 = vshrl.u32 %v2434, 16
      %v2473 = vrot.slane %v2471, 7
      %v2474 = vshll.u32 %v2434, 16
      %v2476 = vor.u32 %v2473, %v2474
      %v2477 = vrot.slane %v2473, 4
      %v2479 = vshrl.u32 %v2435, 16
      %v2481 = vrot.slane %v2479, 7
      %v2482 = vshll.u32 %v2435, 16
      %v2484 = vor.u32 %v2481, %v2482
      %v2485 = vrot.slane %v2481, 4
      %v2487 = vshrl.u32 %v2436, 16
      %v2489 = vrot.slane %v2487, 7
      %v2490 = vshll.u32 %v2436, 16
      %v2492 = vor.u32 %v2489, %v2490
      %v2493 = vrot.slane %v2489, 4
      %v2495 = vshrl.u32 %v2437, 16
      %v2497 = vrot.slane %v2495, 7
      %v2498 = vshll.u32 %v2437, 16
      %v2500 = vor.u32 %v2497, %v2498
      %v2501 = vrot.slane %v2497, 4
      %s2518 = scalar_lea.vmem [#allocation2], 8
      %vm2519 = vcmask 1043456
      %vm2520 = vsmask.f32 7938
      %vm2521 = vmand %vm2519, %vm2520
      %v2522 = vld [vmem:[%s2518] sm:$0xf]
      %v2523 = vsel %vm2521, %v2444, %v2522
      %2524 = vst [vmem:[%s2518] sm:$0xf] %v2523
      %vm2525 = vcmask 1040384
      %vm2526 = vsmask.f32 256
      %vm2527 = vmand %vm2525, %vm2526
      %v2528 = vld [vmem:[%s2518 + $0x4] sm:$0x1]
      %v2529 = vsel %vm2527, %v2445, %v2528
      %2530 = vst [vmem:[%s2518 + $0x4] sm:$0x1] %v2529
      %v2531 = vld [vmem:[%s2518 + $0x8] sm:$0xf]
      %v2532 = vsel %vm2521, %v2452, %v2531
      %2533 = vst [vmem:[%s2518 + $0x8] sm:$0xf] %v2532
      %v2534 = vld [vmem:[%s2518 + $0xc] sm:$0x1]
      %v2535 = vsel %vm2527, %v2453, %v2534
      %2536 = vst [vmem:[%s2518 + $0xc] sm:$0x1] %v2535
      %v2537 = vld [vmem:[%s2518 + $0x10] sm:$0xf]
      %v2538 = vsel %vm2521, %v2460, %v2537
      %2539 = vst [vmem:[%s2518 + $0x10] sm:$0xf] %v2538
      %v2540 = vld [vmem:[%s2518 + $0x14] sm:$0x1]
      %v2541 = vsel %vm2527, %v2461, %v2540
      %2542 = vst [vmem:[%s2518 + $0x14] sm:$0x1] %v2541
      %v2543 = vld [vmem:[%s2518 + $0x18] sm:$0xf]
      %v2544 = vsel %vm2521, %v2468, %v2543
      %2545 = vst [vmem:[%s2518 + $0x18] sm:$0xf] %v2544
      %v2546 = vld [vmem:[%s2518 + $0x1c] sm:$0x1]
      %v2547 = vsel %vm2527, %v2469, %v2546
      %2548 = vst [vmem:[%s2518 + $0x1c] sm:$0x1] %v2547
      %v2549 = vld [vmem:[%s2518 + $0x20] sm:$0xf]
      %v2550 = vsel %vm2521, %v2476, %v2549
      %2551 = vst [vmem:[%s2518 + $0x20] sm:$0xf] %v2550
      %v2552 = vld [vmem:[%s2518 + $0x24] sm:$0x1]
      %v2553 = vsel %vm2527, %v2477, %v2552
      %2554 = vst [vmem:[%s2518 + $0x24] sm:$0x1] %v2553
      %v2555 = vld [vmem:[%s2518 + $0x28] sm:$0xf]
      %v2556 = vsel %vm2521, %v2484, %v2555
      %2557 = vst [vmem:[%s2518 + $0x28] sm:$0xf] %v2556
      %v2558 = vld [vmem:[%s2518 + $0x2c] sm:$0x1]
      %v2559 = vsel %vm2527, %v2485, %v2558
      %2560 = vst [vmem:[%s2518 + $0x2c] sm:$0x1] %v2559
      %v2561 = vld [vmem:[%s2518 + $0x30] sm:$0xf]
      %v2562 = vsel %vm2521, %v2492, %v2561
      %2563 = vst [vmem:[%s2518 + $0x30] sm:$0xf] %v2562
      %v2564 = vld [vmem:[%s2518 + $0x34] sm:$0x1]
      %v2565 = vsel %vm2527, %v2493, %v2564
      %2566 = vst [vmem:[%s2518 + $0x34] sm:$0x1] %v2565
      %v2567 = vld [vmem:[%s2518 + $0x38] sm:$0xf]
      %v2568 = vsel %vm2521, %v2500, %v2567
      %2569 = vst [vmem:[%s2518 + $0x38] sm:$0xf] %v2568
      %v2570 = vld [vmem:[%s2518 + $0x3c] sm:$0x1]
      %v2571 = vsel %vm2527, %v2501, %v2570
      %2572 = vst [vmem:[%s2518 + $0x3c] sm:$0x1] %v2571
      %v2573 = vld [vmem:[#allocation2] sm:$0xf]
      %v2574 = vld [vmem:[#allocation2 + $0x8] sm:$0xf]
      %v2575 = vld [vmem:[#allocation2 + $0x10] sm:$0xf]
      %v2576 = vld [vmem:[#allocation2 + $0x18] sm:$0xf]
      %v2577 = vld [vmem:[#allocation2 + $0x20] sm:$0xf]
      %v2578 = vld [vmem:[#allocation2 + $0x28] sm:$0xf]
      %v2579 = vld [vmem:[#allocation2 + $0x30] sm:$0xf]
      %v2580 = vld [vmem:[#allocation2 + $0x38] sm:$0xf]
      %v2581 = vld [vmem:[%s3] sm:$0xf]
      %v2582 = vld [vmem:[%s3 + $0x4] sm:$0xf]
      %v2583 = vld [vmem:[%s3 + $0x8] sm:$0xf]
      %v2584 = vld [vmem:[%s3 + $0xc] sm:$0xf]
      %v2585 = vld [vmem:[%s3 + $0x10] sm:$0xf]
      %v2586 = vld [vmem:[%s3 + $0x14] sm:$0xf]
      %v2587 = vld [vmem:[%s3 + $0x18] sm:$0xf]
      %v2588 = vld [vmem:[%s3 + $0x1c] sm:$0xf]
      %v2589 = vld [vmem:[%s3 + $0x20] sm:$0xf]
      %v2590 = vld [vmem:[%s3 + $0x24] sm:$0xf]
      %v2591 = vld [vmem:[%s3 + $0x28] sm:$0xf]
      %v2592 = vld [vmem:[%s3 + $0x2c] sm:$0xf]
      %v2593 = vld [vmem:[%s3 + $0x30] sm:$0xf]
      %v2594 = vld [vmem:[%s3 + $0x34] sm:$0xf]
      %v2595 = vld [vmem:[%s3 + $0x38] sm:$0xf]
      %v2596 = vld [vmem:[%s3 + $0x3c] sm:$0xf]
      %v2597 = vld [vmem:[#allocation2 + $0x4] sm:$0x1]
      %v2598 = vld [vmem:[#allocation2 + $0xc] sm:$0x1]
      %v2599 = vld [vmem:[#allocation2 + $0x14] sm:$0x1]
      %v2600 = vld [vmem:[#allocation2 + $0x1c] sm:$0x1]
      %v2601 = vld [vmem:[#allocation2 + $0x24] sm:$0x1]
      %v2602 = vld [vmem:[#allocation2 + $0x2c] sm:$0x1]
      %v2603 = vld [vmem:[#allocation2 + $0x34] sm:$0x1]
      %v2604 = vld [vmem:[#allocation2 + $0x3c] sm:$0x1]
      %v2606 = vshrl.u32 %v2573, 16
      %v2608 = vrot.slane %v2606, 4
      %v2609 = vshll.u32 %v2573, 16
      %v2611 = vrot.slane %v2609, 5
      %v2612 = vor.u32 %v2608, %v2611
      %v2613 = vrot.slane %v2612, 4
      %v2615 = vshll.u32 %v2597, 16
      %v2617 = vrot.slane %v2615, 5
      %v2618 = vsel %vm659, %v2613, %v2617
      %v2620 = vshrl.u32 %v2574, 16
      %v2622 = vrot.slane %v2620, 4
      %v2623 = vshll.u32 %v2574, 16
      %v2625 = vrot.slane %v2623, 5
      %v2626 = vor.u32 %v2622, %v2625
      %v2627 = vrot.slane %v2626, 4
      %v2629 = vshll.u32 %v2598, 16
      %v2631 = vrot.slane %v2629, 5
      %v2632 = vsel %vm659, %v2627, %v2631
      %v2634 = vshrl.u32 %v2575, 16
      %v2636 = vrot.slane %v2634, 4
      %v2637 = vshll.u32 %v2575, 16
      %v2639 = vrot.slane %v2637, 5
      %v2640 = vor.u32 %v2636, %v2639
      %v2641 = vrot.slane %v2640, 4
      %v2643 = vshll.u32 %v2599, 16
      %v2645 = vrot.slane %v2643, 5
      %v2646 = vsel %vm659, %v2641, %v2645
      %v2648 = vshrl.u32 %v2576, 16
      %v2650 = vrot.slane %v2648, 4
      %v2651 = vshll.u32 %v2576, 16
      %v2653 = vrot.slane %v2651, 5
      %v2654 = vor.u32 %v2650, %v2653
      %v2655 = vrot.slane %v2654, 4
      %v2657 = vshll.u32 %v2600, 16
      %v2659 = vrot.slane %v2657, 5
      %v2660 = vsel %vm659, %v2655, %v2659
      %v2662 = vshrl.u32 %v2577, 16
      %v2664 = vrot.slane %v2662, 4
      %v2665 = vshll.u32 %v2577, 16
      %v2667 = vrot.slane %v2665, 5
      %v2668 = vor.u32 %v2664, %v2667
      %v2669 = vrot.slane %v2668, 4
      %v2671 = vshll.u32 %v2601, 16
      %v2673 = vrot.slane %v2671, 5
      %v2674 = vsel %vm659, %v2669, %v2673
      %v2676 = vshrl.u32 %v2578, 16
      %v2678 = vrot.slane %v2676, 4
      %v2679 = vshll.u32 %v2578, 16
      %v2681 = vrot.slane %v2679, 5
      %v2682 = vor.u32 %v2678, %v2681
      %v2683 = vrot.slane %v2682, 4
      %v2685 = vshll.u32 %v2602, 16
      %v2687 = vrot.slane %v2685, 5
      %v2688 = vsel %vm659, %v2683, %v2687
      %v2690 = vshrl.u32 %v2579, 16
      %v2692 = vrot.slane %v2690, 4
      %v2693 = vshll.u32 %v2579, 16
      %v2695 = vrot.slane %v2693, 5
      %v2696 = vor.u32 %v2692, %v2695
      %v2697 = vrot.slane %v2696, 4
      %v2699 = vshll.u32 %v2603, 16
      %v2701 = vrot.slane %v2699, 5
      %v2702 = vsel %vm659, %v2697, %v2701
      %v2704 = vshrl.u32 %v2580, 16
      %v2706 = vrot.slane %v2704, 4
      %v2707 = vshll.u32 %v2580, 16
      %v2709 = vrot.slane %v2707, 5
      %v2710 = vor.u32 %v2706, %v2709
      %v2711 = vrot.slane %v2710, 4
      %v2713 = vshll.u32 %v2604, 16
      %v2715 = vrot.slane %v2713, 5
      %v2716 = vsel %vm659, %v2711, %v2715
      %s2717 = scalar_lea.vmem %s3, 64
      %v2718 = vld [vmem:[%s2717] sm:$0xf]
      %v2719 = vld [vmem:[%s2717 + $0x4] sm:$0xf]
      %v2720 = vld [vmem:[%s2717 + $0x8] sm:$0xf]
      %v2721 = vld [vmem:[%s2717 + $0xc] sm:$0xf]
      %v2722 = vld [vmem:[%s2717 + $0x10] sm:$0xf]
      %v2723 = vld [vmem:[%s2717 + $0x14] sm:$0xf]
      %v2724 = vld [vmem:[%s2717 + $0x18] sm:$0xf]
      %v2725 = vld [vmem:[%s2717 + $0x1c] sm:$0xf]
      %v2726 = vld [vmem:[%s2717 + $0x20] sm:$0xf]
      %v2727 = vld [vmem:[%s2717 + $0x24] sm:$0xf]
      %v2728 = vld [vmem:[%s2717 + $0x28] sm:$0xf]
      %v2729 = vld [vmem:[%s2717 + $0x2c] sm:$0xf]
      %v2730 = vld [vmem:[%s2717 + $0x30] sm:$0xf]
      %v2731 = vld [vmem:[%s2717 + $0x34] sm:$0xf]
      %v2732 = vld [vmem:[%s2717 + $0x38] sm:$0xf]
      %v2733 = vld [vmem:[%s2717 + $0x3c] sm:$0xf]
      %v2734 = vunpack.c.l.b16 %v2618
      %v2735 = vunpack.c.l.b16 %v2632
      %v2736 = vunpack.c.l.b16 %v2646
      %v2737 = vunpack.c.l.b16 %v2660
      %v2738 = vunpack.c.l.b16 %v2674
      %v2739 = vunpack.c.l.b16 %v2688
      %v2740 = vunpack.c.l.b16 %v2702
      %v2741 = vunpack.c.l.b16 %v2716
      %v2742 = vpack.c.b16 %v2735, %v2734
      %v2743 = vpack.c.b16 %v2737, %v2736
      %v2744 = vpack.c.b16 %v2739, %v2738
      %v2745 = vpack.c.b16 %v2741, %v2740
      %v2766 = vunpack.c.l.b16 %v2718
      %v2767 = vunpack.c.l.b16 %v2719
      %v2768 = vunpack.c.l.b16 %v2720
      %v2769 = vunpack.c.l.b16 %v2721
      %v2770 = vunpack.c.l.b16 %v2722
      %v2771 = vunpack.c.l.b16 %v2723
      %v2772 = vunpack.c.l.b16 %v2724
      %v2773 = vunpack.c.l.b16 %v2725
      %v2774 = vunpack.c.l.b16 %v2726
      %v2775 = vunpack.c.l.b16 %v2727
      %v2776 = vunpack.c.l.b16 %v2728
      %v2777 = vunpack.c.l.b16 %v2729
      %v2778 = vunpack.c.l.b16 %v2730
      %v2779 = vunpack.c.l.b16 %v2731
      %v2780 = vunpack.c.l.b16 %v2732
      %v2781 = vunpack.c.l.b16 %v2733
      %v2782 = vpack.c.b16 %v2767, %v2766
      %v2783 = vpack.c.b16 %v2769, %v2768
      %v2784 = vpack.c.b16 %v2771, %v2770
      %v2785 = vpack.c.b16 %v2773, %v2772
      %v2786 = vpack.c.b16 %v2775, %v2774
      %v2787 = vpack.c.b16 %v2777, %v2776
      %v2788 = vpack.c.b16 %v2779, %v2778
      %v2789 = vpack.c.b16 %v2781, %v2780
      %2798 = vmatprep.subr.bf16.mxu0 0
      %2799 = vmatpush1.bf16.msra.mxu0 %v2789
      %2800 = vmatprep.subr.bf16.mxu0 0
      %2801 = vmatpush1.bf16.msra.mxu0 %v2788
      %2802 = vmatprep.subr.bf16.mxu0 0
      %2803 = vmatpush1.bf16.msra.mxu0 %v2787
      %2804 = vmatprep.subr.bf16.mxu0 0
      %2805 = vmatpush1.bf16.msra.mxu0 %v2786
      %2806 = vmatprep.subr.bf16.mxu0 0
      %2807 = vmatpush1.bf16.msra.mxu0 %v2785
      %2808 = vmatprep.subr.bf16.mxu0 0
      %2809 = vmatpush1.bf16.msra.mxu0 %v2784
      %2810 = vmatprep.subr.bf16.mxu0 0
      %2811 = vmatpush1.bf16.msra.mxu0 %v2783
      %2812 = vmatprep.subr.bf16.mxu0 0
      %2813 = vmatpush1.bf16.msra.mxu0 %v2782
      %2814 = vmatprep.subr.bf16.mxu0 0
      %2815 = vmatpush2.bf16.msra.mxu0 0
      %2816 = vmatprep.subr.bf16.mxu0 0
      %2817 = vmatpush2.bf16.msra.mxu0 0
      %2818 = vmatprep.subr.bf16.mxu0 0
      %2819 = vmatpush2.bf16.msra.mxu0 0
      %2820 = vmatprep.subr.bf16.mxu0 0
      %2821 = vmatpush2.bf16.msra.mxu0 0
      %2822 = vmatprep.subr.bf16.mxu0 0
      %2823 = vmatpush2.bf16.msra.mxu0 0
      %2824 = vmatprep.subr.bf16.mxu0 0
      %2825 = vmatpush2.bf16.msra.mxu0 0
      %2826 = vmatprep.subr.bf16.mxu0 0
      %2827 = vmatpush2.bf16.msra.mxu0 0
      %2828 = vmatprep.subr.bf16.mxu0 0
      %2829 = vmatpush2.bf16.msra.mxu0 0
      %2830 = vmatprep.mubr.bf16.mxu0 0
      %2831 = vmatmul.mubr.bf16.gmra.mxu0 %v2742
      %v2832 = vpop.f32.mrf.mxu0
      %v2833 = vadd.f32 0.0, %v2832
      %v2834 = vpop.f32.mrf.mxu0
      %v2835 = vpop.f32.mrf.mxu0
      %v2836 = vadd.f32 0.0, %v2835
      %v2837 = vpop.f32.mrf.mxu0
      %2838 = vmatprep.mubr.bf16.mxu0 0
      %2839 = vmatmul.mubr.bf16.gmra.mxu0 %v2743
      %v2840 = vpop.f32.mrf.mxu0
      %v2841 = vadd.f32 0.0, %v2840
      %v2842 = vpop.f32.mrf.mxu0
      %v2843 = vpop.f32.mrf.mxu0
      %v2844 = vadd.f32 0.0, %v2843
      %v2845 = vpop.f32.mrf.mxu0
      %2846 = vmatprep.mubr.bf16.mxu0 0
      %2847 = vmatmul.mubr.bf16.gmra.mxu0 %v2744
      %v2848 = vpop.f32.mrf.mxu0
      %v2849 = vadd.f32 0.0, %v2848
      %v2850 = vpop.f32.mrf.mxu0
      %v2851 = vpop.f32.mrf.mxu0
      %v2852 = vadd.f32 0.0, %v2851
      %v2853 = vpop.f32.mrf.mxu0
      %2854 = vmatprep.mubr.bf16.mxu0 0
      %2855 = vmatmul.mubr.bf16.gmra.mxu0 %v2745
      %v2856 = vpop.f32.mrf.mxu0
      %v2857 = vadd.f32 0.0, %v2856
      %v2858 = vpop.f32.mrf.mxu0
      %v2859 = vpop.f32.mrf.mxu0
      %v2860 = vadd.f32 0.0, %v2859
      %v2861 = vpop.f32.mrf.mxu0
      %2862 = vdwg.mxu0
      %v2871 = vunpack.c.l.b16 %v2573
      %v2872 = vunpack.c.l.b16 %v2574
      %v2873 = vunpack.c.l.b16 %v2575
      %v2874 = vunpack.c.l.b16 %v2576
      %v2875 = vunpack.c.l.b16 %v2577
      %v2876 = vunpack.c.l.b16 %v2578
      %v2877 = vunpack.c.l.b16 %v2579
      %v2878 = vunpack.c.l.b16 %v2580
      %v2879 = vpack.c.b16 %v2872, %v2871
      %v2880 = vpack.c.b16 %v2874, %v2873
      %v2881 = vpack.c.b16 %v2876, %v2875
      %v2882 = vpack.c.b16 %v2878, %v2877
      %v2903 = vunpack.c.l.b16 %v2581
      %v2904 = vunpack.c.l.b16 %v2582
      %v2905 = vunpack.c.l.b16 %v2583
      %v2906 = vunpack.c.l.b16 %v2584
      %v2907 = vunpack.c.l.b16 %v2585
      %v2908 = vunpack.c.l.b16 %v2586
      %v2909 = vunpack.c.l.b16 %v2587
      %v2910 = vunpack.c.l.b16 %v2588
      %v2911 = vunpack.c.l.b16 %v2589
      %v2912 = vunpack.c.l.b16 %v2590
      %v2913 = vunpack.c.l.b16 %v2591
      %v2914 = vunpack.c.l.b16 %v2592
      %v2915 = vunpack.c.l.b16 %v2593
      %v2916 = vunpack.c.l.b16 %v2594
      %v2917 = vunpack.c.l.b16 %v2595
      %v2918 = vunpack.c.l.b16 %v2596
      %v2919 = vpack.c.b16 %v2904, %v2903
      %v2920 = vpack.c.b16 %v2906, %v2905
      %v2921 = vpack.c.b16 %v2908, %v2907
      %v2922 = vpack.c.b16 %v2910, %v2909
      %v2923 = vpack.c.b16 %v2912, %v2911
      %v2924 = vpack.c.b16 %v2914, %v2913
      %v2925 = vpack.c.b16 %v2916, %v2915
      %v2926 = vpack.c.b16 %v2918, %v2917
      %2935 = vmatprep.subr.bf16.mxu0 0
      %2936 = vmatpush1.bf16.msra.mxu0 %v2926
      %2937 = vmatprep.subr.bf16.mxu0 0
      %2938 = vmatpush1.bf16.msra.mxu0 %v2925
      %2939 = vmatprep.subr.bf16.mxu0 0
      %2940 = vmatpush1.bf16.msra.mxu0 %v2924
      %2941 = vmatprep.subr.bf16.mxu0 0
      %2942 = vmatpush1.bf16.msra.mxu0 %v2923
      %2943 = vmatprep.subr.bf16.mxu0 0
      %2944 = vmatpush1.bf16.msra.mxu0 %v2922
      %2945 = vmatprep.subr.bf16.mxu0 0
      %2946 = vmatpush1.bf16.msra.mxu0 %v2921
      %2947 = vmatprep.subr.bf16.mxu0 0
      %2948 = vmatpush1.bf16.msra.mxu0 %v2920
      %2949 = vmatprep.subr.bf16.mxu0 0
      %2950 = vmatpush1.bf16.msra.mxu0 %v2919
      %2951 = vmatprep.subr.bf16.mxu0 0
      %2952 = vmatpush2.bf16.msra.mxu0 0
      %2953 = vmatprep.subr.bf16.mxu0 0
      %2954 = vmatpush2.bf16.msra.mxu0 0
      %2955 = vmatprep.subr.bf16.mxu0 0
      %2956 = vmatpush2.bf16.msra.mxu0 0
      %2957 = vmatprep.subr.bf16.mxu0 0
      %2958 = vmatpush2.bf16.msra.mxu0 0
      %2959 = vmatprep.subr.bf16.mxu0 0
      %2960 = vmatpush2.bf16.msra.mxu0 0
      %2961 = vmatprep.subr.bf16.mxu0 0
      %2962 = vmatpush2.bf16.msra.mxu0 0
      %2963 = vmatprep.subr.bf16.mxu0 0
      %2964 = vmatpush2.bf16.msra.mxu0 0
      %2965 = vmatprep.subr.bf16.mxu0 0
      %2966 = vmatpush2.bf16.msra.mxu0 0
      %2967 = vmatprep.mubr.bf16.mxu0 0
      %2968 = vmatmul.mubr.bf16.gmra.mxu0 %v2879
      %v2969 = vpop.f32.mrf.mxu0
      %v2970 = vadd.f32 %v2833, %v2969
      %v2971 = vpop.f32.mrf.mxu0
      %v2972 = vpop.f32.mrf.mxu0
      %v2973 = vadd.f32 %v2836, %v2972
      %v2974 = vpop.f32.mrf.mxu0
      %2975 = vmatprep.mubr.bf16.mxu0 0
      %2976 = vmatmul.mubr.bf16.gmra.mxu0 %v2880
      %v2977 = vpop.f32.mrf.mxu0
      %v2978 = vadd.f32 %v2841, %v2977
      %v2979 = vpop.f32.mrf.mxu0
      %v2980 = vpop.f32.mrf.mxu0
      %v2981 = vadd.f32 %v2844, %v2980
      %v2982 = vpop.f32.mrf.mxu0
      %2983 = vmatprep.mubr.bf16.mxu0 0
      %2984 = vmatmul.mubr.bf16.gmra.mxu0 %v2881
      %v2985 = vpop.f32.mrf.mxu0
      %v2986 = vadd.f32 %v2849, %v2985
      %v2987 = vpop.f32.mrf.mxu0
      %v2988 = vpop.f32.mrf.mxu0
      %v2989 = vadd.f32 %v2852, %v2988
      %v2990 = vpop.f32.mrf.mxu0
      %2991 = vmatprep.mubr.bf16.mxu0 0
      %2992 = vmatmul.mubr.bf16.gmra.mxu0 %v2882
      %v2993 = vpop.f32.mrf.mxu0
      %v2994 = vadd.f32 %v2857, %v2993
      %v2995 = vpop.f32.mrf.mxu0
      %v2996 = vpop.f32.mrf.mxu0
      %v2997 = vadd.f32 %v2860, %v2996
      %v2998 = vpop.f32.mrf.mxu0
      %2999 = vdwg.mxu0
      %v3000 = vld [vmem:[#allocation2] sm:$0xe]
      %v3001 = vld [vmem:[#allocation2 + $0x8] sm:$0xe]
      %v3002 = vld [vmem:[#allocation2 + $0x10] sm:$0xe]
      %v3003 = vld [vmem:[#allocation2 + $0x18] sm:$0xe]
      %v3004 = vld [vmem:[#allocation2 + $0x20] sm:$0xe]
      %v3005 = vld [vmem:[#allocation2 + $0x28] sm:$0xe]
      %v3006 = vld [vmem:[#allocation2 + $0x30] sm:$0xe]
      %v3007 = vld [vmem:[#allocation2 + $0x38] sm:$0xe]
      %vm3024 = vcmask 1042432
      %vm3025 = vcmask 1046532
      %vm3026 = vmor %vm3024, %vm3025
      %v3027 = vrot.slane %v3000, 5
      %v3028 = vrot.slane %v3027, 4
      %v3029 = vrot.slane %v2597, 5
      %v3030 = vsel %vm3026, %v3028, %v3029
      %v3031 = vrot.slane %v3001, 5
      %v3032 = vrot.slane %v3031, 4
      %v3033 = vrot.slane %v2598, 5
      %v3034 = vsel %vm3026, %v3032, %v3033
      %v3035 = vrot.slane %v3002, 5
      %v3036 = vrot.slane %v3035, 4
      %v3037 = vrot.slane %v2599, 5
      %v3038 = vsel %vm3026, %v3036, %v3037
      %v3039 = vrot.slane %v3003, 5
      %v3040 = vrot.slane %v3039, 4
      %v3041 = vrot.slane %v2600, 5
      %v3042 = vsel %vm3026, %v3040, %v3041
      %v3043 = vrot.slane %v3004, 5
      %v3044 = vrot.slane %v3043, 4
      %v3045 = vrot.slane %v2601, 5
      %v3046 = vsel %vm3026, %v3044, %v3045
      %v3047 = vrot.slane %v3005, 5
      %v3048 = vrot.slane %v3047, 4
      %v3049 = vrot.slane %v2602, 5
      %v3050 = vsel %vm3026, %v3048, %v3049
      %v3051 = vrot.slane %v3006, 5
      %v3052 = vrot.slane %v3051, 4
      %v3053 = vrot.slane %v2603, 5
      %v3054 = vsel %vm3026, %v3052, %v3053
      %v3055 = vrot.slane %v3007, 5
      %v3056 = vrot.slane %v3055, 4
      %v3057 = vrot.slane %v2604, 5
      %v3058 = vsel %vm3026, %v3056, %v3057
      %s3059 = scalar_lea.vmem %s3, 128
      %v3060 = vld [vmem:[%s3059] sm:$0xf]
      %v3061 = vld [vmem:[%s3059 + $0x4] sm:$0xf]
      %v3062 = vld [vmem:[%s3059 + $0x8] sm:$0xf]
      %v3063 = vld [vmem:[%s3059 + $0xc] sm:$0xf]
      %v3064 = vld [vmem:[%s3059 + $0x10] sm:$0xf]
      %v3065 = vld [vmem:[%s3059 + $0x14] sm:$0xf]
      %v3066 = vld [vmem:[%s3059 + $0x18] sm:$0xf]
      %v3067 = vld [vmem:[%s3059 + $0x1c] sm:$0xf]
      %v3068 = vld [vmem:[%s3059 + $0x20] sm:$0xf]
      %v3069 = vld [vmem:[%s3059 + $0x24] sm:$0xf]
      %v3070 = vld [vmem:[%s3059 + $0x28] sm:$0xf]
      %v3071 = vld [vmem:[%s3059 + $0x2c] sm:$0xf]
      %v3072 = vld [vmem:[%s3059 + $0x30] sm:$0xf]
      %v3073 = vld [vmem:[%s3059 + $0x34] sm:$0xf]
      %v3074 = vld [vmem:[%s3059 + $0x38] sm:$0xf]
      %v3075 = vld [vmem:[%s3059 + $0x3c] sm:$0xf]
      %v3076 = vunpack.c.l.b16 %v3030
      %v3077 = vunpack.c.l.b16 %v3034
      %v3078 = vunpack.c.l.b16 %v3038
      %v3079 = vunpack.c.l.b16 %v3042
      %v3080 = vunpack.c.l.b16 %v3046
      %v3081 = vunpack.c.l.b16 %v3050
      %v3082 = vunpack.c.l.b16 %v3054
      %v3083 = vunpack.c.l.b16 %v3058
      %v3084 = vpack.c.b16 %v3077, %v3076
      %v3085 = vpack.c.b16 %v3079, %v3078
      %v3086 = vpack.c.b16 %v3081, %v3080
      %v3087 = vpack.c.b16 %v3083, %v3082
      %v3108 = vunpack.c.l.b16 %v3060
      %v3109 = vunpack.c.l.b16 %v3061
      %v3110 = vunpack.c.l.b16 %v3062
      %v3111 = vunpack.c.l.b16 %v3063
      %v3112 = vunpack.c.l.b16 %v3064
      %v3113 = vunpack.c.l.b16 %v3065
      %v3114 = vunpack.c.l.b16 %v3066
      %v3115 = vunpack.c.l.b16 %v3067
      %v3116 = vunpack.c.l.b16 %v3068
      %v3117 = vunpack.c.l.b16 %v3069
      %v3118 = vunpack.c.l.b16 %v3070
      %v3119 = vunpack.c.l.b16 %v3071
      %v3120 = vunpack.c.l.b16 %v3072
      %v3121 = vunpack.c.l.b16 %v3073
      %v3122 = vunpack.c.l.b16 %v3074
      %v3123 = vunpack.c.l.b16 %v3075
      %v3124 = vpack.c.b16 %v3109, %v3108
      %v3125 = vpack.c.b16 %v3111, %v3110
      %v3126 = vpack.c.b16 %v3113, %v3112
      %v3127 = vpack.c.b16 %v3115, %v3114
      %v3128 = vpack.c.b16 %v3117, %v3116
      %v3129 = vpack.c.b16 %v3119, %v3118
      %v3130 = vpack.c.b16 %v3121, %v3120
      %v3131 = vpack.c.b16 %v3123, %v3122
      %3140 = vmatprep.subr.bf16.mxu0 0
      %3141 = vmatpush1.bf16.msra.mxu0 %v3131
      %3142 = vmatprep.subr.bf16.mxu0 0
      %3143 = vmatpush1.bf16.msra.mxu0 %v3130
      %3144 = vmatprep.subr.bf16.mxu0 0
      %3145 = vmatpush1.bf16.msra.mxu0 %v3129
      %3146 = vmatprep.subr.bf16.mxu0 0
      %3147 = vmatpush1.bf16.msra.mxu0 %v3128
      %3148 = vmatprep.subr.bf16.mxu0 0
      %3149 = vmatpush1.bf16.msra.mxu0 %v3127
      %3150 = vmatprep.subr.bf16.mxu0 0
      %3151 = vmatpush1.bf16.msra.mxu0 %v3126
      %3152 = vmatprep.subr.bf16.mxu0 0
      %3153 = vmatpush1.bf16.msra.mxu0 %v3125
      %3154 = vmatprep.subr.bf16.mxu0 0
      %3155 = vmatpush1.bf16.msra.mxu0 %v3124
      %3156 = vmatprep.subr.bf16.mxu0 0
      %3157 = vmatpush2.bf16.msra.mxu0 0
      %3158 = vmatprep.subr.bf16.mxu0 0
      %3159 = vmatpush2.bf16.msra.mxu0 0
      %3160 = vmatprep.subr.bf16.mxu0 0
      %3161 = vmatpush2.bf16.msra.mxu0 0
      %3162 = vmatprep.subr.bf16.mxu0 0
      %3163 = vmatpush2.bf16.msra.mxu0 0
      %3164 = vmatprep.subr.bf16.mxu0 0
      %3165 = vmatpush2.bf16.msra.mxu0 0
      %3166 = vmatprep.subr.bf16.mxu0 0
      %3167 = vmatpush2.bf16.msra.mxu0 0
      %3168 = vmatprep.subr.bf16.mxu0 0
      %3169 = vmatpush2.bf16.msra.mxu0 0
      %3170 = vmatprep.subr.bf16.mxu0 0
      %3171 = vmatpush2.bf16.msra.mxu0 0
      %3172 = vmatprep.mubr.bf16.mxu0 0
      %3173 = vmatmul.mubr.bf16.gmra.mxu0 %v3084
      %v3174 = vpop.f32.mrf.mxu0
      %v3175 = vadd.f32 0.0, %v3174
      %v3176 = vpop.f32.mrf.mxu0
      %v3177 = vpop.f32.mrf.mxu0
      %v3178 = vadd.f32 0.0, %v3177
      %v3179 = vpop.f32.mrf.mxu0
      %3180 = vmatprep.mubr.bf16.mxu0 0
      %3181 = vmatmul.mubr.bf16.gmra.mxu0 %v3085
      %v3182 = vpop.f32.mrf.mxu0
      %v3183 = vadd.f32 0.0, %v3182
      %v3184 = vpop.f32.mrf.mxu0
      %v3185 = vpop.f32.mrf.mxu0
      %v3186 = vadd.f32 0.0, %v3185
      %v3187 = vpop.f32.mrf.mxu0
      %3188 = vmatprep.mubr.bf16.mxu0 0
      %3189 = vmatmul.mubr.bf16.gmra.mxu0 %v3086
      %v3190 = vpop.f32.mrf.mxu0
      %v3191 = vadd.f32 0.0, %v3190
      %v3192 = vpop.f32.mrf.mxu0
      %v3193 = vpop.f32.mrf.mxu0
      %v3194 = vadd.f32 0.0, %v3193
      %v3195 = vpop.f32.mrf.mxu0
      %3196 = vmatprep.mubr.bf16.mxu0 0
      %3197 = vmatmul.mubr.bf16.gmra.mxu0 %v3087
      %v3198 = vpop.f32.mrf.mxu0
      %v3199 = vadd.f32 0.0, %v3198
      %v3200 = vpop.f32.mrf.mxu0
      %v3201 = vpop.f32.mrf.mxu0
      %v3202 = vadd.f32 0.0, %v3201
      %v3203 = vpop.f32.mrf.mxu0
      %3204 = vdwg.mxu0
      %v3205 = vadd.f32 %v2970, %v3175
      %v3206 = vadd.f32 %v2973, %v3178
      %v3207 = vadd.f32 %v2978, %v3183
      %v3208 = vadd.f32 %v2981, %v3186
      %v3209 = vadd.f32 %v2986, %v3191
      %v3210 = vadd.f32 %v2989, %v3194
      %v3211 = vadd.f32 %v2994, %v3199
      %v3212 = vadd.f32 %v2997, %v3202
      %v3213 = vld [vmem:[%s2518] sm:$0xf]
      %v3214 = vld [vmem:[%s2518 + $0x8] sm:$0xf]
      %v3215 = vld [vmem:[%s2518 + $0x10] sm:$0xf]
      %v3216 = vld [vmem:[%s2518 + $0x18] sm:$0xf]
      %v3217 = vld [vmem:[%s2518 + $0x20] sm:$0xf]
      %v3218 = vld [vmem:[%s2518 + $0x28] sm:$0xf]
      %v3219 = vld [vmem:[%s2518 + $0x30] sm:$0xf]
      %v3220 = vld [vmem:[%s2518 + $0x38] sm:$0xf]
      %s3221 = scalar_lea.vmem %s3, 192
      %v3222 = vld [vmem:[%s3221] sm:$0xf]
      %v3223 = vld [vmem:[%s3221 + $0x4] sm:$0xf]
      %v3224 = vld [vmem:[%s3221 + $0x8] sm:$0xf]
      %v3225 = vld [vmem:[%s3221 + $0xc] sm:$0xf]
      %v3226 = vld [vmem:[%s3221 + $0x10] sm:$0xf]
      %v3227 = vld [vmem:[%s3221 + $0x14] sm:$0xf]
      %v3228 = vld [vmem:[%s3221 + $0x18] sm:$0xf]
      %v3229 = vld [vmem:[%s3221 + $0x1c] sm:$0xf]
      %v3230 = vld [vmem:[%s3221 + $0x20] sm:$0xf]
      %v3231 = vld [vmem:[%s3221 + $0x24] sm:$0xf]
      %v3232 = vld [vmem:[%s3221 + $0x28] sm:$0xf]
      %v3233 = vld [vmem:[%s3221 + $0x2c] sm:$0xf]
      %v3234 = vld [vmem:[%s3221 + $0x30] sm:$0xf]
      %v3235 = vld [vmem:[%s3221 + $0x34] sm:$0xf]
      %v3236 = vld [vmem:[%s3221 + $0x38] sm:$0xf]
      %v3237 = vld [vmem:[%s3221 + $0x3c] sm:$0xf]
      %v3246 = vunpack.c.l.b16 %v3213
      %v3247 = vunpack.c.l.b16 %v3214
      %v3248 = vunpack.c.l.b16 %v3215
      %v3249 = vunpack.c.l.b16 %v3216
      %v3250 = vunpack.c.l.b16 %v3217
      %v3251 = vunpack.c.l.b16 %v3218
      %v3252 = vunpack.c.l.b16 %v3219
      %v3253 = vunpack.c.l.b16 %v3220
      %v3254 = vpack.c.b16 %v3247, %v3246
      %v3255 = vpack.c.b16 %v3249, %v3248
      %v3256 = vpack.c.b16 %v3251, %v3250
      %v3257 = vpack.c.b16 %v3253, %v3252
      %v3278 = vunpack.c.l.b16 %v3222
      %v3279 = vunpack.c.l.b16 %v3223
      %v3280 = vunpack.c.l.b16 %v3224
      %v3281 = vunpack.c.l.b16 %v3225
      %v3282 = vunpack.c.l.b16 %v3226
      %v3283 = vunpack.c.l.b16 %v3227
      %v3284 = vunpack.c.l.b16 %v3228
      %v3285 = vunpack.c.l.b16 %v3229
      %v3286 = vunpack.c.l.b16 %v3230
      %v3287 = vunpack.c.l.b16 %v3231
      %v3288 = vunpack.c.l.b16 %v3232
      %v3289 = vunpack.c.l.b16 %v3233
      %v3290 = vunpack.c.l.b16 %v3234
      %v3291 = vunpack.c.l.b16 %v3235
      %v3292 = vunpack.c.l.b16 %v3236
      %v3293 = vunpack.c.l.b16 %v3237
      %v3294 = vpack.c.b16 %v3279, %v3278
      %v3295 = vpack.c.b16 %v3281, %v3280
      %v3296 = vpack.c.b16 %v3283, %v3282
      %v3297 = vpack.c.b16 %v3285, %v3284
      %v3298 = vpack.c.b16 %v3287, %v3286
      %v3299 = vpack.c.b16 %v3289, %v3288
      %v3300 = vpack.c.b16 %v3291, %v3290
      %v3301 = vpack.c.b16 %v3293, %v3292
      %3310 = vmatprep.subr.bf16.mxu0 0
      %3311 = vmatpush1.bf16.msra.mxu0 %v3301
      %3312 = vmatprep.subr.bf16.mxu0 0
      %3313 = vmatpush1.bf16.msra.mxu0 %v3300
      %3314 = vmatprep.subr.bf16.mxu0 0
      %3315 = vmatpush1.bf16.msra.mxu0 %v3299
      %3316 = vmatprep.subr.bf16.mxu0 0
      %3317 = vmatpush1.bf16.msra.mxu0 %v3298
      %3318 = vmatprep.subr.bf16.mxu0 0
      %3319 = vmatpush1.bf16.msra.mxu0 %v3297
      %3320 = vmatprep.subr.bf16.mxu0 0
      %3321 = vmatpush1.bf16.msra.mxu0 %v3296
      %3322 = vmatprep.subr.bf16.mxu0 0
      %3323 = vmatpush1.bf16.msra.mxu0 %v3295
      %3324 = vmatprep.subr.bf16.mxu0 0
      %3325 = vmatpush1.bf16.msra.mxu0 %v3294
      %3326 = vmatprep.subr.bf16.mxu0 0
      %3327 = vmatpush2.bf16.msra.mxu0 0
      %3328 = vmatprep.subr.bf16.mxu0 0
      %3329 = vmatpush2.bf16.msra.mxu0 0
      %3330 = vmatprep.subr.bf16.mxu0 0
      %3331 = vmatpush2.bf16.msra.mxu0 0
      %3332 = vmatprep.subr.bf16.mxu0 0
      %3333 = vmatpush2.bf16.msra.mxu0 0
      %3334 = vmatprep.subr.bf16.mxu0 0
      %3335 = vmatpush2.bf16.msra.mxu0 0
      %3336 = vmatprep.subr.bf16.mxu0 0
      %3337 = vmatpush2.bf16.msra.mxu0 0
      %3338 = vmatprep.subr.bf16.mxu0 0
      %3339 = vmatpush2.bf16.msra.mxu0 0
      %3340 = vmatprep.subr.bf16.mxu0 0
      %3341 = vmatpush2.bf16.msra.mxu0 0
      %3342 = vmatprep.mubr.bf16.mxu0 0
      %3343 = vmatmul.mubr.bf16.gmra.mxu0 %v3254
      %v3344 = vpop.f32.mrf.mxu0
      %v3345 = vadd.f32 0.0, %v3344
      %v3346 = vpop.f32.mrf.mxu0
      %v3347 = vpop.f32.mrf.mxu0
      %v3348 = vadd.f32 0.0, %v3347
      %v3349 = vpop.f32.mrf.mxu0
      %3350 = vmatprep.mubr.bf16.mxu0 0
      %3351 = vmatmul.mubr.bf16.gmra.mxu0 %v3255
      %v3352 = vpop.f32.mrf.mxu0
      %v3353 = vadd.f32 0.0, %v3352
      %v3354 = vpop.f32.mrf.mxu0
      %v3355 = vpop.f32.mrf.mxu0
      %v3356 = vadd.f32 0.0, %v3355
      %v3357 = vpop.f32.mrf.mxu0
      %3358 = vmatprep.mubr.bf16.mxu0 0
      %3359 = vmatmul.mubr.bf16.gmra.mxu0 %v3256
      %v3360 = vpop.f32.mrf.mxu0
      %v3361 = vadd.f32 0.0, %v3360
      %v3362 = vpop.f32.mrf.mxu0
      %v3363 = vpop.f32.mrf.mxu0
      %v3364 = vadd.f32 0.0, %v3363
      %v3365 = vpop.f32.mrf.mxu0
      %3366 = vmatprep.mubr.bf16.mxu0 0
      %3367 = vmatmul.mubr.bf16.gmra.mxu0 %v3257
      %v3368 = vpop.f32.mrf.mxu0
      %v3369 = vadd.f32 0.0, %v3368
      %v3370 = vpop.f32.mrf.mxu0
      %v3371 = vpop.f32.mrf.mxu0
      %v3372 = vadd.f32 0.0, %v3371
      %v3373 = vpop.f32.mrf.mxu0
      %3374 = vdwg.mxu0
      %v3375 = vadd.f32 %v3205, %v3345
      %v3376 = vadd.f32 %v3206, %v3348
      %v3377 = vadd.f32 %v3207, %v3353
      %v3378 = vadd.f32 %v3208, %v3356
      %v3379 = vadd.f32 %v3209, %v3361
      %v3380 = vadd.f32 %v3210, %v3364
      %v3381 = vadd.f32 %v3211, %v3369
      %v3382 = vadd.f32 %v3212, %v3372
      %v3383 = vld [vmem:[%s2518] sm:$0xf]
      %v3384 = vld [vmem:[%s2518 + $0x4] sm:$0x1]
      %v3385 = vld [vmem:[%s2518 + $0x8] sm:$0xf]
      %v3386 = vld [vmem:[%s2518 + $0xc] sm:$0x1]
      %v3387 = vld [vmem:[%s2518 + $0x10] sm:$0xf]
      %v3388 = vld [vmem:[%s2518 + $0x14] sm:$0x1]
      %v3389 = vld [vmem:[%s2518 + $0x18] sm:$0xf]
      %v3390 = vld [vmem:[%s2518 + $0x1c] sm:$0x1]
      %v3391 = vld [vmem:[%s2518 + $0x20] sm:$0xf]
      %v3392 = vld [vmem:[%s2518 + $0x24] sm:$0x1]
      %v3393 = vld [vmem:[%s2518 + $0x28] sm:$0xf]
      %v3394 = vld [vmem:[%s2518 + $0x2c] sm:$0x1]
      %v3395 = vld [vmem:[%s2518 + $0x30] sm:$0xf]
      %v3396 = vld [vmem:[%s2518 + $0x34] sm:$0x1]
      %v3397 = vld [vmem:[%s2518 + $0x38] sm:$0xf]
      %v3398 = vld [vmem:[%s2518 + $0x3c] sm:$0x1]
      %v3400 = vshrl.u32 %v3383, 16
      %v3402 = vrot.slane %v3400, 4
      %v3403 = vshll.u32 %v3383, 16
      %v3405 = vrot.slane %v3403, 5
      %v3406 = vor.u32 %v3402, %v3405
      %v3407 = vrot.slane %v3406, 4
      %v3409 = vshll.u32 %v3384, 16
      %v3411 = vrot.slane %v3409, 5
      %v3412 = vsel %vm659, %v3407, %v3411
      %v3414 = vshrl.u32 %v3385, 16
      %v3416 = vrot.slane %v3414, 4
      %v3417 = vshll.u32 %v3385, 16
      %v3419 = vrot.slane %v3417, 5
      %v3420 = vor.u32 %v3416, %v3419
      %v3421 = vrot.slane %v3420, 4
      %v3423 = vshll.u32 %v3386, 16
      %v3425 = vrot.slane %v3423, 5
      %v3426 = vsel %vm659, %v3421, %v3425
      %v3428 = vshrl.u32 %v3387, 16
      %v3430 = vrot.slane %v3428, 4
      %v3431 = vshll.u32 %v3387, 16
      %v3433 = vrot.slane %v3431, 5
      %v3434 = vor.u32 %v3430, %v3433
      %v3435 = vrot.slane %v3434, 4
      %v3437 = vshll.u32 %v3388, 16
      %v3439 = vrot.slane %v3437, 5
      %v3440 = vsel %vm659, %v3435, %v3439
      %v3442 = vshrl.u32 %v3389, 16
      %v3444 = vrot.slane %v3442, 4
      %v3445 = vshll.u32 %v3389, 16
      %v3447 = vrot.slane %v3445, 5
      %v3448 = vor.u32 %v3444, %v3447
      %v3449 = vrot.slane %v3448, 4
      %v3451 = vshll.u32 %v3390, 16
      %v3453 = vrot.slane %v3451, 5
      %v3454 = vsel %vm659, %v3449, %v3453
      %v3456 = vshrl.u32 %v3391, 16
      %v3458 = vrot.slane %v3456, 4
      %v3459 = vshll.u32 %v3391, 16
      %v3461 = vrot.slane %v3459, 5
      %v3462 = vor.u32 %v3458, %v3461
      %v3463 = vrot.slane %v3462, 4
      %v3465 = vshll.u32 %v3392, 16
      %v3467 = vrot.slane %v3465, 5
      %v3468 = vsel %vm659, %v3463, %v3467
      %v3470 = vshrl.u32 %v3393, 16
      %v3472 = vrot.slane %v3470, 4
      %v3473 = vshll.u32 %v3393, 16
      %v3475 = vrot.slane %v3473, 5
      %v3476 = vor.u32 %v3472, %v3475
      %v3477 = vrot.slane %v3476, 4
      %v3479 = vshll.u32 %v3394, 16
      %v3481 = vrot.slane %v3479, 5
      %v3482 = vsel %vm659, %v3477, %v3481
      %v3484 = vshrl.u32 %v3395, 16
      %v3486 = vrot.slane %v3484, 4
      %v3487 = vshll.u32 %v3395, 16
      %v3489 = vrot.slane %v3487, 5
      %v3490 = vor.u32 %v3486, %v3489
      %v3491 = vrot.slane %v3490, 4
      %v3493 = vshll.u32 %v3396, 16
      %v3495 = vrot.slane %v3493, 5
      %v3496 = vsel %vm659, %v3491, %v3495
      %v3498 = vshrl.u32 %v3397, 16
      %v3500 = vrot.slane %v3498, 4
      %v3501 = vshll.u32 %v3397, 16
      %v3503 = vrot.slane %v3501, 5
      %v3504 = vor.u32 %v3500, %v3503
      %v3505 = vrot.slane %v3504, 4
      %v3507 = vshll.u32 %v3398, 16
      %v3509 = vrot.slane %v3507, 5
      %v3510 = vsel %vm659, %v3505, %v3509
      %s3511 = scalar_lea.vmem %s3, 256
      %v3512 = vld [vmem:[%s3511] sm:$0xf]
      %v3513 = vld [vmem:[%s3511 + $0x4] sm:$0xf]
      %v3514 = vld [vmem:[%s3511 + $0x8] sm:$0xf]
      %v3515 = vld [vmem:[%s3511 + $0xc] sm:$0xf]
      %v3516 = vld [vmem:[%s3511 + $0x10] sm:$0xf]
      %v3517 = vld [vmem:[%s3511 + $0x14] sm:$0xf]
      %v3518 = vld [vmem:[%s3511 + $0x18] sm:$0xf]
      %v3519 = vld [vmem:[%s3511 + $0x1c] sm:$0xf]
      %v3520 = vld [vmem:[%s3511 + $0x20] sm:$0xf]
      %v3521 = vld [vmem:[%s3511 + $0x24] sm:$0xf]
      %v3522 = vld [vmem:[%s3511 + $0x28] sm:$0xf]
      %v3523 = vld [vmem:[%s3511 + $0x2c] sm:$0xf]
      %v3524 = vld [vmem:[%s3511 + $0x30] sm:$0xf]
      %v3525 = vld [vmem:[%s3511 + $0x34] sm:$0xf]
      %v3526 = vld [vmem:[%s3511 + $0x38] sm:$0xf]
      %v3527 = vld [vmem:[%s3511 + $0x3c] sm:$0xf]
      %v3528 = vunpack.c.l.b16 %v3412
      %v3529 = vunpack.c.l.b16 %v3426
      %v3530 = vunpack.c.l.b16 %v3440
      %v3531 = vunpack.c.l.b16 %v3454
      %v3532 = vunpack.c.l.b16 %v3468
      %v3533 = vunpack.c.l.b16 %v3482
      %v3534 = vunpack.c.l.b16 %v3496
      %v3535 = vunpack.c.l.b16 %v3510
      %v3536 = vpack.c.b16 %v3529, %v3528
      %v3537 = vpack.c.b16 %v3531, %v3530
      %v3538 = vpack.c.b16 %v3533, %v3532
      %v3539 = vpack.c.b16 %v3535, %v3534
      %v3560 = vunpack.c.l.b16 %v3512
      %v3561 = vunpack.c.l.b16 %v3513
      %v3562 = vunpack.c.l.b16 %v3514
      %v3563 = vunpack.c.l.b16 %v3515
      %v3564 = vunpack.c.l.b16 %v3516
      %v3565 = vunpack.c.l.b16 %v3517
      %v3566 = vunpack.c.l.b16 %v3518
      %v3567 = vunpack.c.l.b16 %v3519
      %v3568 = vunpack.c.l.b16 %v3520
      %v3569 = vunpack.c.l.b16 %v3521
      %v3570 = vunpack.c.l.b16 %v3522
      %v3571 = vunpack.c.l.b16 %v3523
      %v3572 = vunpack.c.l.b16 %v3524
      %v3573 = vunpack.c.l.b16 %v3525
      %v3574 = vunpack.c.l.b16 %v3526
      %v3575 = vunpack.c.l.b16 %v3527
      %v3576 = vpack.c.b16 %v3561, %v3560
      %v3577 = vpack.c.b16 %v3563, %v3562
      %v3578 = vpack.c.b16 %v3565, %v3564
      %v3579 = vpack.c.b16 %v3567, %v3566
      %v3580 = vpack.c.b16 %v3569, %v3568
      %v3581 = vpack.c.b16 %v3571, %v3570
      %v3582 = vpack.c.b16 %v3573, %v3572
      %v3583 = vpack.c.b16 %v3575, %v3574
      %3592 = vmatprep.subr.bf16.mxu0 0
      %3593 = vmatpush1.bf16.msra.mxu0 %v3583
      %3594 = vmatprep.subr.bf16.mxu0 0
      %3595 = vmatpush1.bf16.msra.mxu0 %v3582
      %3596 = vmatprep.subr.bf16.mxu0 0
      %3597 = vmatpush1.bf16.msra.mxu0 %v3581
      %3598 = vmatprep.subr.bf16.mxu0 0
      %3599 = vmatpush1.bf16.msra.mxu0 %v3580
      %3600 = vmatprep.subr.bf16.mxu0 0
      %3601 = vmatpush1.bf16.msra.mxu0 %v3579
      %3602 = vmatprep.subr.bf16.mxu0 0
      %3603 = vmatpush1.bf16.msra.mxu0 %v3578
      %3604 = vmatprep.subr.bf16.mxu0 0
      %3605 = vmatpush1.bf16.msra.mxu0 %v3577
      %3606 = vmatprep.subr.bf16.mxu0 0
      %3607 = vmatpush1.bf16.msra.mxu0 %v3576
      %3608 = vmatprep.subr.bf16.mxu0 0
      %3609 = vmatpush2.bf16.msra.mxu0 0
      %3610 = vmatprep.subr.bf16.mxu0 0
      %3611 = vmatpush2.bf16.msra.mxu0 0
      %3612 = vmatprep.subr.bf16.mxu0 0
      %3613 = vmatpush2.bf16.msra.mxu0 0
      %3614 = vmatprep.subr.bf16.mxu0 0
      %3615 = vmatpush2.bf16.msra.mxu0 0
      %3616 = vmatprep.subr.bf16.mxu0 0
      %3617 = vmatpush2.bf16.msra.mxu0 0
      %3618 = vmatprep.subr.bf16.mxu0 0
      %3619 = vmatpush2.bf16.msra.mxu0 0
      %3620 = vmatprep.subr.bf16.mxu0 0
      %3621 = vmatpush2.bf16.msra.mxu0 0
      %3622 = vmatprep.subr.bf16.mxu0 0
      %3623 = vmatpush2.bf16.msra.mxu0 0
      %3624 = vmatprep.mubr.bf16.mxu0 0
      %3625 = vmatmul.mubr.bf16.gmra.mxu0 %v3536
      %v3626 = vpop.f32.mrf.mxu0
      %v3627 = vadd.f32 0.0, %v3626
      %v3628 = vpop.f32.mrf.mxu0
      %v3629 = vpop.f32.mrf.mxu0
      %v3630 = vadd.f32 0.0, %v3629
      %v3631 = vpop.f32.mrf.mxu0
      %3632 = vmatprep.mubr.bf16.mxu0 0
      %3633 = vmatmul.mubr.bf16.gmra.mxu0 %v3537
      %v3634 = vpop.f32.mrf.mxu0
      %v3635 = vadd.f32 0.0, %v3634
      %v3636 = vpop.f32.mrf.mxu0
      %v3637 = vpop.f32.mrf.mxu0
      %v3638 = vadd.f32 0.0, %v3637
      %v3639 = vpop.f32.mrf.mxu0
      %3640 = vmatprep.mubr.bf16.mxu0 0
      %3641 = vmatmul.mubr.bf16.gmra.mxu0 %v3538
      %v3642 = vpop.f32.mrf.mxu0
      %v3643 = vadd.f32 0.0, %v3642
      %v3644 = vpop.f32.mrf.mxu0
      %v3645 = vpop.f32.mrf.mxu0
      %v3646 = vadd.f32 0.0, %v3645
      %v3647 = vpop.f32.mrf.mxu0
      %3648 = vmatprep.mubr.bf16.mxu0 0
      %3649 = vmatmul.mubr.bf16.gmra.mxu0 %v3539
      %v3650 = vpop.f32.mrf.mxu0
      %v3651 = vadd.f32 0.0, %v3650
      %v3652 = vpop.f32.mrf.mxu0
      %v3653 = vpop.f32.mrf.mxu0
      %v3654 = vadd.f32 0.0, %v3653
      %v3655 = vpop.f32.mrf.mxu0
      %3656 = vdwg.mxu0
      %v3657 = vadd.f32 %v3375, %v3627
      %v3658 = vadd.f32 %v3376, %v3630
      %v3659 = vadd.f32 %v3377, %v3635
      %v3660 = vadd.f32 %v3378, %v3638
      %v3661 = vadd.f32 %v3379, %v3643
      %v3662 = vadd.f32 %v3380, %v3646
      %v3663 = vadd.f32 %v3381, %v3651
      %v3664 = vadd.f32 %v3382, %v3654
      %v3665 = vld [vmem:[%s2518] sm:$0xe]
      %v3666 = vld [vmem:[%s2518 + $0x8] sm:$0xe]
      %v3667 = vld [vmem:[%s2518 + $0x10] sm:$0xe]
      %v3668 = vld [vmem:[%s2518 + $0x18] sm:$0xe]
      %v3669 = vld [vmem:[%s2518 + $0x20] sm:$0xe]
      %v3670 = vld [vmem:[%s2518 + $0x28] sm:$0xe]
      %v3671 = vld [vmem:[%s2518 + $0x30] sm:$0xe]
      %v3672 = vld [vmem:[%s2518 + $0x38] sm:$0xe]
      %v3689 = vrot.slane %v3665, 5
      %v3690 = vrot.slane %v3689, 4
      %v3691 = vrot.slane %v3384, 5
      %v3692 = vsel %vm3026, %v3690, %v3691
      %v3693 = vrot.slane %v3666, 5
      %v3694 = vrot.slane %v3693, 4
      %v3695 = vrot.slane %v3386, 5
      %v3696 = vsel %vm3026, %v3694, %v3695
      %v3697 = vrot.slane %v3667, 5
      %v3698 = vrot.slane %v3697, 4
      %v3699 = vrot.slane %v3388, 5
      %v3700 = vsel %vm3026, %v3698, %v3699
      %v3701 = vrot.slane %v3668, 5
      %v3702 = vrot.slane %v3701, 4
      %v3703 = vrot.slane %v3390, 5
      %v3704 = vsel %vm3026, %v3702, %v3703
      %v3705 = vrot.slane %v3669, 5
      %v3706 = vrot.slane %v3705, 4
      %v3707 = vrot.slane %v3392, 5
      %v3708 = vsel %vm3026, %v3706, %v3707
      %v3709 = vrot.slane %v3670, 5
      %v3710 = vrot.slane %v3709, 4
      %v3711 = vrot.slane %v3394, 5
      %v3712 = vsel %vm3026, %v3710, %v3711
      %v3713 = vrot.slane %v3671, 5
      %v3714 = vrot.slane %v3713, 4
      %v3715 = vrot.slane %v3396, 5
      %v3716 = vsel %vm3026, %v3714, %v3715
      %v3717 = vrot.slane %v3672, 5
      %v3718 = vrot.slane %v3717, 4
      %v3719 = vrot.slane %v3398, 5
      %v3720 = vsel %vm3026, %v3718, %v3719
      %s3721 = scalar_lea.vmem %s3, 320
      %v3722 = vld [vmem:[%s3721] sm:$0xf]
      %v3723 = vld [vmem:[%s3721 + $0x4] sm:$0xf]
      %v3724 = vld [vmem:[%s3721 + $0x8] sm:$0xf]
      %v3725 = vld [vmem:[%s3721 + $0xc] sm:$0xf]
      %v3726 = vld [vmem:[%s3721 + $0x10] sm:$0xf]
      %v3727 = vld [vmem:[%s3721 + $0x14] sm:$0xf]
      %v3728 = vld [vmem:[%s3721 + $0x18] sm:$0xf]
      %v3729 = vld [vmem:[%s3721 + $0x1c] sm:$0xf]
      %v3730 = vld [vmem:[%s3721 + $0x20] sm:$0xf]
      %v3731 = vld [vmem:[%s3721 + $0x24] sm:$0xf]
      %v3732 = vld [vmem:[%s3721 + $0x28] sm:$0xf]
      %v3733 = vld [vmem:[%s3721 + $0x2c] sm:$0xf]
      %v3734 = vld [vmem:[%s3721 + $0x30] sm:$0xf]
      %v3735 = vld [vmem:[%s3721 + $0x34] sm:$0xf]
      %v3736 = vld [vmem:[%s3721 + $0x38] sm:$0xf]
      %v3737 = vld [vmem:[%s3721 + $0x3c] sm:$0xf]
      %v3738 = vunpack.c.l.b16 %v3692
      %v3739 = vunpack.c.l.b16 %v3696
      %v3740 = vunpack.c.l.b16 %v3700
      %v3741 = vunpack.c.l.b16 %v3704
      %v3742 = vunpack.c.l.b16 %v3708
      %v3743 = vunpack.c.l.b16 %v3712
      %v3744 = vunpack.c.l.b16 %v3716
      %v3745 = vunpack.c.l.b16 %v3720
      %v3746 = vpack.c.b16 %v3739, %v3738
      %v3747 = vpack.c.b16 %v3741, %v3740
      %v3748 = vpack.c.b16 %v3743, %v3742
      %v3749 = vpack.c.b16 %v3745, %v3744
      %v3770 = vunpack.c.l.b16 %v3722
      %v3771 = vunpack.c.l.b16 %v3723
      %v3772 = vunpack.c.l.b16 %v3724
      %v3773 = vunpack.c.l.b16 %v3725
      %v3774 = vunpack.c.l.b16 %v3726
      %v3775 = vunpack.c.l.b16 %v3727
      %v3776 = vunpack.c.l.b16 %v3728
      %v3777 = vunpack.c.l.b16 %v3729
      %v3778 = vunpack.c.l.b16 %v3730
      %v3779 = vunpack.c.l.b16 %v3731
      %v3780 = vunpack.c.l.b16 %v3732
      %v3781 = vunpack.c.l.b16 %v3733
      %v3782 = vunpack.c.l.b16 %v3734
      %v3783 = vunpack.c.l.b16 %v3735
      %v3784 = vunpack.c.l.b16 %v3736
      %v3785 = vunpack.c.l.b16 %v3737
      %v3786 = vpack.c.b16 %v3771, %v3770
      %v3787 = vpack.c.b16 %v3773, %v3772
      %v3788 = vpack.c.b16 %v3775, %v3774
      %v3789 = vpack.c.b16 %v3777, %v3776
      %v3790 = vpack.c.b16 %v3779, %v3778
      %v3791 = vpack.c.b16 %v3781, %v3780
      %v3792 = vpack.c.b16 %v3783, %v3782
      %v3793 = vpack.c.b16 %v3785, %v3784
      %3802 = vmatprep.subr.bf16.mxu0 0
      %3803 = vmatpush1.bf16.msra.mxu0 %v3793
      %3804 = vmatprep.subr.bf16.mxu0 0
      %3805 = vmatpush1.bf16.msra.mxu0 %v3792
      %3806 = vmatprep.subr.bf16.mxu0 0
      %3807 = vmatpush1.bf16.msra.mxu0 %v3791
      %3808 = vmatprep.subr.bf16.mxu0 0
      %3809 = vmatpush1.bf16.msra.mxu0 %v3790
      %3810 = vmatprep.subr.bf16.mxu0 0
      %3811 = vmatpush1.bf16.msra.mxu0 %v3789
      %3812 = vmatprep.subr.bf16.mxu0 0
      %3813 = vmatpush1.bf16.msra.mxu0 %v3788
      %3814 = vmatprep.subr.bf16.mxu0 0
      %3815 = vmatpush1.bf16.msra.mxu0 %v3787
      %3816 = vmatprep.subr.bf16.mxu0 0
      %3817 = vmatpush1.bf16.msra.mxu0 %v3786
      %3818 = vmatprep.subr.bf16.mxu0 0
      %3819 = vmatpush2.bf16.msra.mxu0 0
      %3820 = vmatprep.subr.bf16.mxu0 0
      %3821 = vmatpush2.bf16.msra.mxu0 0
      %3822 = vmatprep.subr.bf16.mxu0 0
      %3823 = vmatpush2.bf16.msra.mxu0 0
      %3824 = vmatprep.subr.bf16.mxu0 0
      %3825 = vmatpush2.bf16.msra.mxu0 0
      %3826 = vmatprep.subr.bf16.mxu0 0
      %3827 = vmatpush2.bf16.msra.mxu0 0
      %3828 = vmatprep.subr.bf16.mxu0 0
      %3829 = vmatpush2.bf16.msra.mxu0 0
      %3830 = vmatprep.subr.bf16.mxu0 0
      %3831 = vmatpush2.bf16.msra.mxu0 0
      %3832 = vmatprep.subr.bf16.mxu0 0
      %3833 = vmatpush2.bf16.msra.mxu0 0
      %3834 = vmatprep.mubr.bf16.mxu0 0
      %3835 = vmatmul.mubr.bf16.gmra.mxu0 %v3746
      %v3836 = vpop.f32.mrf.mxu0
      %v3837 = vadd.f32 0.0, %v3836
      %v3838 = vpop.f32.mrf.mxu0
      %v3839 = vpop.f32.mrf.mxu0
      %v3840 = vadd.f32 0.0, %v3839
      %v3841 = vpop.f32.mrf.mxu0
      %3842 = vmatprep.mubr.bf16.mxu0 0
      %3843 = vmatmul.mubr.bf16.gmra.mxu0 %v3747
      %v3844 = vpop.f32.mrf.mxu0
      %v3845 = vadd.f32 0.0, %v3844
      %v3846 = vpop.f32.mrf.mxu0
      %v3847 = vpop.f32.mrf.mxu0
      %v3848 = vadd.f32 0.0, %v3847
      %v3849 = vpop.f32.mrf.mxu0
      %3850 = vmatprep.mubr.bf16.mxu0 0
      %3851 = vmatmul.mubr.bf16.gmra.mxu0 %v3748
      %v3852 = vpop.f32.mrf.mxu0
      %v3853 = vadd.f32 0.0, %v3852
      %v3854 = vpop.f32.mrf.mxu0
      %v3855 = vpop.f32.mrf.mxu0
      %v3856 = vadd.f32 0.0, %v3855
      %v3857 = vpop.f32.mrf.mxu0
      %3858 = vmatprep.mubr.bf16.mxu0 0
      %3859 = vmatmul.mubr.bf16.gmra.mxu0 %v3749
      %v3860 = vpop.f32.mrf.mxu0
      %v3861 = vadd.f32 0.0, %v3860
      %v3862 = vpop.f32.mrf.mxu0
      %v3863 = vpop.f32.mrf.mxu0
      %v3864 = vadd.f32 0.0, %v3863
      %v3865 = vpop.f32.mrf.mxu0
      %3866 = vdwg.mxu0
      %v3867 = vadd.f32 %v3657, %v3837
      %v3868 = vadd.f32 %v3658, %v3840
      %v3869 = vadd.f32 %v3659, %v3845
      %v3870 = vadd.f32 %v3660, %v3848
      %v3871 = vadd.f32 %v3661, %v3853
      %v3872 = vadd.f32 %v3662, %v3856
      %v3873 = vadd.f32 %v3663, %v3861
      %v3874 = vadd.f32 %v3664, %v3864
      %s3875 = scalar_lea.vmem [#allocation2], 16
      %v3876 = vld [vmem:[%s3875] sm:$0xf]
      %v3877 = vld [vmem:[%s3875 + $0x8] sm:$0xf]
      %v3878 = vld [vmem:[%s3875 + $0x10] sm:$0xf]
      %v3879 = vld [vmem:[%s3875 + $0x18] sm:$0xf]
      %v3880 = vld [vmem:[%s3875 + $0x20] sm:$0xf]
      %v3881 = vld [vmem:[%s3875 + $0x28] sm:$0xf]
      %v3882 = vld [vmem:[%s3875 + $0x30] sm:$0xf]
      %v3883 = vld [vmem:[%s3875 + $0x38] sm:$0xf]
      %s3884 = scalar_lea.vmem %s3, 384
      %v3885 = vld [vmem:[%s3884] sm:$0xf]
      %v3886 = vld [vmem:[%s3884 + $0x4] sm:$0xf]
      %v3887 = vld [vmem:[%s3884 + $0x8] sm:$0xf]
      %v3888 = vld [vmem:[%s3884 + $0xc] sm:$0xf]
      %v3889 = vld [vmem:[%s3884 + $0x10] sm:$0xf]
      %v3890 = vld [vmem:[%s3884 + $0x14] sm:$0xf]
      %v3891 = vld [vmem:[%s3884 + $0x18] sm:$0xf]
      %v3892 = vld [vmem:[%s3884 + $0x1c] sm:$0xf]
      %v3893 = vld [vmem:[%s3884 + $0x20] sm:$0xf]
      %v3894 = vld [vmem:[%s3884 + $0x24] sm:$0xf]
      %v3895 = vld [vmem:[%s3884 + $0x28] sm:$0xf]
      %v3896 = vld [vmem:[%s3884 + $0x2c] sm:$0xf]
      %v3897 = vld [vmem:[%s3884 + $0x30] sm:$0xf]
      %v3898 = vld [vmem:[%s3884 + $0x34] sm:$0xf]
      %v3899 = vld [vmem:[%s3884 + $0x38] sm:$0xf]
      %v3900 = vld [vmem:[%s3884 + $0x3c] sm:$0xf]
      %v3909 = vunpack.c.l.b16 %v3876
      %v3910 = vunpack.c.l.b16 %v3877
      %v3911 = vunpack.c.l.b16 %v3878
      %v3912 = vunpack.c.l.b16 %v3879
      %v3913 = vunpack.c.l.b16 %v3880
      %v3914 = vunpack.c.l.b16 %v3881
      %v3915 = vunpack.c.l.b16 %v3882
      %v3916 = vunpack.c.l.b16 %v3883
      %v3917 = vpack.c.b16 %v3910, %v3909
      %v3918 = vpack.c.b16 %v3912, %v3911
      %v3919 = vpack.c.b16 %v3914, %v3913
      %v3920 = vpack.c.b16 %v3916, %v3915
      %v3941 = vunpack.c.l.b16 %v3885
      %v3942 = vunpack.c.l.b16 %v3886
      %v3943 = vunpack.c.l.b16 %v3887
      %v3944 = vunpack.c.l.b16 %v3888
      %v3945 = vunpack.c.l.b16 %v3889
      %v3946 = vunpack.c.l.b16 %v3890
      %v3947 = vunpack.c.l.b16 %v3891
      %v3948 = vunpack.c.l.b16 %v3892
      %v3949 = vunpack.c.l.b16 %v3893
      %v3950 = vunpack.c.l.b16 %v3894
      %v3951 = vunpack.c.l.b16 %v3895
      %v3952 = vunpack.c.l.b16 %v3896
      %v3953 = vunpack.c.l.b16 %v3897
      %v3954 = vunpack.c.l.b16 %v3898
      %v3955 = vunpack.c.l.b16 %v3899
      %v3956 = vunpack.c.l.b16 %v3900
      %v3957 = vpack.c.b16 %v3942, %v3941
      %v3958 = vpack.c.b16 %v3944, %v3943
      %v3959 = vpack.c.b16 %v3946, %v3945
      %v3960 = vpack.c.b16 %v3948, %v3947
      %v3961 = vpack.c.b16 %v3950, %v3949
      %v3962 = vpack.c.b16 %v3952, %v3951
      %v3963 = vpack.c.b16 %v3954, %v3953
      %v3964 = vpack.c.b16 %v3956, %v3955
      %3973 = vmatprep.subr.bf16.mxu0 0
      %3974 = vmatpush1.bf16.msra.mxu0 %v3964
      %3975 = vmatprep.subr.bf16.mxu0 0
      %3976 = vmatpush1.bf16.msra.mxu0 %v3963
      %3977 = vmatprep.subr.bf16.mxu0 0
      %3978 = vmatpush1.bf16.msra.mxu0 %v3962
      %3979 = vmatprep.subr.bf16.mxu0 0
      %3980 = vmatpush1.bf16.msra.mxu0 %v3961
      %3981 = vmatprep.subr.bf16.mxu0 0
      %3982 = vmatpush1.bf16.msra.mxu0 %v3960
      %3983 = vmatprep.subr.bf16.mxu0 0
      %3984 = vmatpush1.bf16.msra.mxu0 %v3959
      %3985 = vmatprep.subr.bf16.mxu0 0
      %3986 = vmatpush1.bf16.msra.mxu0 %v3958
      %3987 = vmatprep.subr.bf16.mxu0 0
      %3988 = vmatpush1.bf16.msra.mxu0 %v3957
      %3989 = vmatprep.subr.bf16.mxu0 0
      %3990 = vmatpush2.bf16.msra.mxu0 0
      %3991 = vmatprep.subr.bf16.mxu0 0
      %3992 = vmatpush2.bf16.msra.mxu0 0
      %3993 = vmatprep.subr.bf16.mxu0 0
      %3994 = vmatpush2.bf16.msra.mxu0 0
      %3995 = vmatprep.subr.bf16.mxu0 0
      %3996 = vmatpush2.bf16.msra.mxu0 0
      %3997 = vmatprep.subr.bf16.mxu0 0
      %3998 = vmatpush2.bf16.msra.mxu0 0
      %3999 = vmatprep.subr.bf16.mxu0 0
      %4000 = vmatpush2.bf16.msra.mxu0 0
      %4001 = vmatprep.subr.bf16.mxu0 0
      %4002 = vmatpush2.bf16.msra.mxu0 0
      %4003 = vmatprep.subr.bf16.mxu0 0
      %4004 = vmatpush2.bf16.msra.mxu0 0
      %4005 = vmatprep.mubr.bf16.mxu0 0
      %4006 = vmatmul.mubr.bf16.gmra.mxu0 %v3917
      %v4007 = vpop.f32.mrf.mxu0
      %v4008 = vadd.f32 0.0, %v4007
      %v4009 = vpop.f32.mrf.mxu0
      %v4010 = vpop.f32.mrf.mxu0
      %v4011 = vadd.f32 0.0, %v4010
      %v4012 = vpop.f32.mrf.mxu0
      %4013 = vmatprep.mubr.bf16.mxu0 0
      %4014 = vmatmul.mubr.bf16.gmra.mxu0 %v3918
      %v4015 = vpop.f32.mrf.mxu0
      %v4016 = vadd.f32 0.0, %v4015
      %v4017 = vpop.f32.mrf.mxu0
      %v4018 = vpop.f32.mrf.mxu0
      %v4019 = vadd.f32 0.0, %v4018
      %v4020 = vpop.f32.mrf.mxu0
      %4021 = vmatprep.mubr.bf16.mxu0 0
      %4022 = vmatmul.mubr.bf16.gmra.mxu0 %v3919
      %v4023 = vpop.f32.mrf.mxu0
      %v4024 = vadd.f32 0.0, %v4023
      %v4025 = vpop.f32.mrf.mxu0
      %v4026 = vpop.f32.mrf.mxu0
      %v4027 = vadd.f32 0.0, %v4026
      %v4028 = vpop.f32.mrf.mxu0
      %4029 = vmatprep.mubr.bf16.mxu0 0
      %4030 = vmatmul.mubr.bf16.gmra.mxu0 %v3920
      %v4031 = vpop.f32.mrf.mxu0
      %v4032 = vadd.f32 0.0, %v4031
      %v4033 = vpop.f32.mrf.mxu0
      %v4034 = vpop.f32.mrf.mxu0
      %v4035 = vadd.f32 0.0, %v4034
      %v4036 = vpop.f32.mrf.mxu0
      %4037 = vdwg.mxu0
      %v4038 = vadd.f32 %v3867, %v4008
      %v4039 = vadd.f32 %v3868, %v4011
      %v4040 = vadd.f32 %v3869, %v4016
      %v4041 = vadd.f32 %v3870, %v4019
      %v4042 = vadd.f32 %v3871, %v4024
      %v4043 = vadd.f32 %v3872, %v4027
      %v4044 = vadd.f32 %v3873, %v4032
      %v4045 = vadd.f32 %v3874, %v4035
      %v4046 = vld [vmem:[%s3875] sm:$0xf]
      %v4047 = vld [vmem:[%s3875 + $0x4] sm:$0x1]
      %v4048 = vld [vmem:[%s3875 + $0x8] sm:$0xf]
      %v4049 = vld [vmem:[%s3875 + $0xc] sm:$0x1]
      %v4050 = vld [vmem:[%s3875 + $0x10] sm:$0xf]
      %v4051 = vld [vmem:[%s3875 + $0x14] sm:$0x1]
      %v4052 = vld [vmem:[%s3875 + $0x18] sm:$0xf]
      %v4053 = vld [vmem:[%s3875 + $0x1c] sm:$0x1]
      %v4054 = vld [vmem:[%s3875 + $0x20] sm:$0xf]
      %v4055 = vld [vmem:[%s3875 + $0x24] sm:$0x1]
      %v4056 = vld [vmem:[%s3875 + $0x28] sm:$0xf]
      %v4057 = vld [vmem:[%s3875 + $0x2c] sm:$0x1]
      %v4058 = vld [vmem:[%s3875 + $0x30] sm:$0xf]
      %v4059 = vld [vmem:[%s3875 + $0x34] sm:$0x1]
      %v4060 = vld [vmem:[%s3875 + $0x38] sm:$0xf]
      %v4061 = vld [vmem:[%s3875 + $0x3c] sm:$0x1]
      %v4063 = vshrl.u32 %v4046, 16
      %v4065 = vrot.slane %v4063, 4
      %v4066 = vshll.u32 %v4046, 16
      %v4068 = vrot.slane %v4066, 5
      %v4069 = vor.u32 %v4065, %v4068
      %v4070 = vrot.slane %v4069, 4
      %v4072 = vshll.u32 %v4047, 16
      %v4074 = vrot.slane %v4072, 5
      %v4075 = vsel %vm659, %v4070, %v4074
      %v4077 = vshrl.u32 %v4048, 16
      %v4079 = vrot.slane %v4077, 4
      %v4080 = vshll.u32 %v4048, 16
      %v4082 = vrot.slane %v4080, 5
      %v4083 = vor.u32 %v4079, %v4082
      %v4084 = vrot.slane %v4083, 4
      %v4086 = vshll.u32 %v4049, 16
      %v4088 = vrot.slane %v4086, 5
      %v4089 = vsel %vm659, %v4084, %v4088
      %v4091 = vshrl.u32 %v4050, 16
      %v4093 = vrot.slane %v4091, 4
      %v4094 = vshll.u32 %v4050, 16
      %v4096 = vrot.slane %v4094, 5
      %v4097 = vor.u32 %v4093, %v4096
      %v4098 = vrot.slane %v4097, 4
      %v4100 = vshll.u32 %v4051, 16
      %v4102 = vrot.slane %v4100, 5
      %v4103 = vsel %vm659, %v4098, %v4102
      %v4105 = vshrl.u32 %v4052, 16
      %v4107 = vrot.slane %v4105, 4
      %v4108 = vshll.u32 %v4052, 16
      %v4110 = vrot.slane %v4108, 5
      %v4111 = vor.u32 %v4107, %v4110
      %v4112 = vrot.slane %v4111, 4
      %v4114 = vshll.u32 %v4053, 16
      %v4116 = vrot.slane %v4114, 5
      %v4117 = vsel %vm659, %v4112, %v4116
      %v4119 = vshrl.u32 %v4054, 16
      %v4121 = vrot.slane %v4119, 4
      %v4122 = vshll.u32 %v4054, 16
      %v4124 = vrot.slane %v4122, 5
      %v4125 = vor.u32 %v4121, %v4124
      %v4126 = vrot.slane %v4125, 4
      %v4128 = vshll.u32 %v4055, 16
      %v4130 = vrot.slane %v4128, 5
      %v4131 = vsel %vm659, %v4126, %v4130
      %v4133 = vshrl.u32 %v4056, 16
      %v4135 = vrot.slane %v4133, 4
      %v4136 = vshll.u32 %v4056, 16
      %v4138 = vrot.slane %v4136, 5
      %v4139 = vor.u32 %v4135, %v4138
      %v4140 = vrot.slane %v4139, 4
      %v4142 = vshll.u32 %v4057, 16
      %v4144 = vrot.slane %v4142, 5
      %v4145 = vsel %vm659, %v4140, %v4144
      %v4147 = vshrl.u32 %v4058, 16
      %v4149 = vrot.slane %v4147, 4
      %v4150 = vshll.u32 %v4058, 16
      %v4152 = vrot.slane %v4150, 5
      %v4153 = vor.u32 %v4149, %v4152
      %v4154 = vrot.slane %v4153, 4
      %v4156 = vshll.u32 %v4059, 16
      %v4158 = vrot.slane %v4156, 5
      %v4159 = vsel %vm659, %v4154, %v4158
      %v4161 = vshrl.u32 %v4060, 16
      %v4163 = vrot.slane %v4161, 4
      %v4164 = vshll.u32 %v4060, 16
      %v4166 = vrot.slane %v4164, 5
      %v4167 = vor.u32 %v4163, %v4166
      %v4168 = vrot.slane %v4167, 4
      %v4170 = vshll.u32 %v4061, 16
      %v4172 = vrot.slane %v4170, 5
      %v4173 = vsel %vm659, %v4168, %v4172
      %s4174 = scalar_lea.vmem %s3, 448
      %v4175 = vld [vmem:[%s4174] sm:$0xf]
      %v4176 = vld [vmem:[%s4174 + $0x4] sm:$0xf]
      %v4177 = vld [vmem:[%s4174 + $0x8] sm:$0xf]
      %v4178 = vld [vmem:[%s4174 + $0xc] sm:$0xf]
      %v4179 = vld [vmem:[%s4174 + $0x10] sm:$0xf]
      %v4180 = vld [vmem:[%s4174 + $0x14] sm:$0xf]
      %v4181 = vld [vmem:[%s4174 + $0x18] sm:$0xf]
      %v4182 = vld [vmem:[%s4174 + $0x1c] sm:$0xf]
      %v4183 = vld [vmem:[%s4174 + $0x20] sm:$0xf]
      %v4184 = vld [vmem:[%s4174 + $0x24] sm:$0xf]
      %v4185 = vld [vmem:[%s4174 + $0x28] sm:$0xf]
      %v4186 = vld [vmem:[%s4174 + $0x2c] sm:$0xf]
      %v4187 = vld [vmem:[%s4174 + $0x30] sm:$0xf]
      %v4188 = vld [vmem:[%s4174 + $0x34] sm:$0xf]
      %v4189 = vld [vmem:[%s4174 + $0x38] sm:$0xf]
      %v4190 = vld [vmem:[%s4174 + $0x3c] sm:$0xf]
      %v4191 = vunpack.c.l.b16 %v4075
      %v4192 = vunpack.c.l.b16 %v4089
      %v4193 = vunpack.c.l.b16 %v4103
      %v4194 = vunpack.c.l.b16 %v4117
      %v4195 = vunpack.c.l.b16 %v4131
      %v4196 = vunpack.c.l.b16 %v4145
      %v4197 = vunpack.c.l.b16 %v4159
      %v4198 = vunpack.c.l.b16 %v4173
      %v4199 = vpack.c.b16 %v4192, %v4191
      %v4200 = vpack.c.b16 %v4194, %v4193
      %v4201 = vpack.c.b16 %v4196, %v4195
      %v4202 = vpack.c.b16 %v4198, %v4197
      %v4223 = vunpack.c.l.b16 %v4175
      %v4224 = vunpack.c.l.b16 %v4176
      %v4225 = vunpack.c.l.b16 %v4177
      %v4226 = vunpack.c.l.b16 %v4178
      %v4227 = vunpack.c.l.b16 %v4179
      %v4228 = vunpack.c.l.b16 %v4180
      %v4229 = vunpack.c.l.b16 %v4181
      %v4230 = vunpack.c.l.b16 %v4182
      %v4231 = vunpack.c.l.b16 %v4183
      %v4232 = vunpack.c.l.b16 %v4184
      %v4233 = vunpack.c.l.b16 %v4185
      %v4234 = vunpack.c.l.b16 %v4186
      %v4235 = vunpack.c.l.b16 %v4187
      %v4236 = vunpack.c.l.b16 %v4188
      %v4237 = vunpack.c.l.b16 %v4189
      %v4238 = vunpack.c.l.b16 %v4190
      %v4239 = vpack.c.b16 %v4224, %v4223
      %v4240 = vpack.c.b16 %v4226, %v4225
      %v4241 = vpack.c.b16 %v4228, %v4227
      %v4242 = vpack.c.b16 %v4230, %v4229
      %v4243 = vpack.c.b16 %v4232, %v4231
      %v4244 = vpack.c.b16 %v4234, %v4233
      %v4245 = vpack.c.b16 %v4236, %v4235
      %v4246 = vpack.c.b16 %v4238, %v4237
      %4255 = vmatprep.subr.bf16.mxu0 0
      %4256 = vmatpush1.bf16.msra.mxu0 %v4246
      %4257 = vmatprep.subr.bf16.mxu0 0
      %4258 = vmatpush1.bf16.msra.mxu0 %v4245
      %4259 = vmatprep.subr.bf16.mxu0 0
      %4260 = vmatpush1.bf16.msra.mxu0 %v4244
      %4261 = vmatprep.subr.bf16.mxu0 0
      %4262 = vmatpush1.bf16.msra.mxu0 %v4243
      %4263 = vmatprep.subr.bf16.mxu0 0
      %4264 = vmatpush1.bf16.msra.mxu0 %v4242
      %4265 = vmatprep.subr.bf16.mxu0 0
      %4266 = vmatpush1.bf16.msra.mxu0 %v4241
      %4267 = vmatprep.subr.bf16.mxu0 0
      %4268 = vmatpush1.bf16.msra.mxu0 %v4240
      %4269 = vmatprep.subr.bf16.mxu0 0
      %4270 = vmatpush1.bf16.msra.mxu0 %v4239
      %4271 = vmatprep.subr.bf16.mxu0 0
      %4272 = vmatpush2.bf16.msra.mxu0 0
      %4273 = vmatprep.subr.bf16.mxu0 0
      %4274 = vmatpush2.bf16.msra.mxu0 0
      %4275 = vmatprep.subr.bf16.mxu0 0
      %4276 = vmatpush2.bf16.msra.mxu0 0
      %4277 = vmatprep.subr.bf16.mxu0 0
      %4278 = vmatpush2.bf16.msra.mxu0 0
      %4279 = vmatprep.subr.bf16.mxu0 0
      %4280 = vmatpush2.bf16.msra.mxu0 0
      %4281 = vmatprep.subr.bf16.mxu0 0
      %4282 = vmatpush2.bf16.msra.mxu0 0
      %4283 = vmatprep.subr.bf16.mxu0 0
      %4284 = vmatpush2.bf16.msra.mxu0 0
      %4285 = vmatprep.subr.bf16.mxu0 0
      %4286 = vmatpush2.bf16.msra.mxu0 0
      %4287 = vmatprep.mubr.bf16.mxu0 0
      %4288 = vmatmul.mubr.bf16.gmra.mxu0 %v4199
      %v4289 = vpop.f32.mrf.mxu0
      %v4290 = vadd.f32 0.0, %v4289
      %v4291 = vpop.f32.mrf.mxu0
      %v4292 = vpop.f32.mrf.mxu0
      %v4293 = vadd.f32 0.0, %v4292
      %v4294 = vpop.f32.mrf.mxu0
      %4295 = vmatprep.mubr.bf16.mxu0 0
      %4296 = vmatmul.mubr.bf16.gmra.mxu0 %v4200
      %v4297 = vpop.f32.mrf.mxu0
      %v4298 = vadd.f32 0.0, %v4297
      %v4299 = vpop.f32.mrf.mxu0
      %v4300 = vpop.f32.mrf.mxu0
      %v4301 = vadd.f32 0.0, %v4300
      %v4302 = vpop.f32.mrf.mxu0
      %4303 = vmatprep.mubr.bf16.mxu0 0
      %4304 = vmatmul.mubr.bf16.gmra.mxu0 %v4201
      %v4305 = vpop.f32.mrf.mxu0
      %v4306 = vadd.f32 0.0, %v4305
      %v4307 = vpop.f32.mrf.mxu0
      %v4308 = vpop.f32.mrf.mxu0
      %v4309 = vadd.f32 0.0, %v4308
      %v4310 = vpop.f32.mrf.mxu0
      %4311 = vmatprep.mubr.bf16.mxu0 0
      %4312 = vmatmul.mubr.bf16.gmra.mxu0 %v4202
      %v4313 = vpop.f32.mrf.mxu0
      %v4314 = vadd.f32 0.0, %v4313
      %v4315 = vpop.f32.mrf.mxu0
      %v4316 = vpop.f32.mrf.mxu0
      %v4317 = vadd.f32 0.0, %v4316
      %v4318 = vpop.f32.mrf.mxu0
      %4319 = vdwg.mxu0
      %v4320 = vadd.f32 %v4038, %v4290
      %v4321 = vadd.f32 %v4039, %v4293
      %v4322 = vadd.f32 %v4040, %v4298
      %v4323 = vadd.f32 %v4041, %v4301
      %v4324 = vadd.f32 %v4042, %v4306
      %v4325 = vadd.f32 %v4043, %v4309
      %v4326 = vadd.f32 %v4044, %v4314
      %v4327 = vadd.f32 %v4045, %v4317
      %v4328 = vld [vmem:[%s3875] sm:$0xe]
      %v4329 = vld [vmem:[%s3875 + $0x8] sm:$0xe]
      %v4330 = vld [vmem:[%s3875 + $0x10] sm:$0xe]
      %v4331 = vld [vmem:[%s3875 + $0x18] sm:$0xe]
      %v4332 = vld [vmem:[%s3875 + $0x20] sm:$0xe]
      %v4333 = vld [vmem:[%s3875 + $0x28] sm:$0xe]
      %v4334 = vld [vmem:[%s3875 + $0x30] sm:$0xe]
      %v4335 = vld [vmem:[%s3875 + $0x38] sm:$0xe]
      %v4352 = vrot.slane %v4328, 5
      %v4353 = vrot.slane %v4352, 4
      %v4354 = vrot.slane %v4047, 5
      %v4355 = vsel %vm3026, %v4353, %v4354
      %v4356 = vrot.slane %v4329, 5
      %v4357 = vrot.slane %v4356, 4
      %v4358 = vrot.slane %v4049, 5
      %v4359 = vsel %vm3026, %v4357, %v4358
      %v4360 = vrot.slane %v4330, 5
      %v4361 = vrot.slane %v4360, 4
      %v4362 = vrot.slane %v4051, 5
      %v4363 = vsel %vm3026, %v4361, %v4362
      %v4364 = vrot.slane %v4331, 5
      %v4365 = vrot.slane %v4364, 4
      %v4366 = vrot.slane %v4053, 5
      %v4367 = vsel %vm3026, %v4365, %v4366
      %v4368 = vrot.slane %v4332, 5
      %v4369 = vrot.slane %v4368, 4
      %v4370 = vrot.slane %v4055, 5
      %v4371 = vsel %vm3026, %v4369, %v4370
      %v4372 = vrot.slane %v4333, 5
      %v4373 = vrot.slane %v4372, 4
      %v4374 = vrot.slane %v4057, 5
      %v4375 = vsel %vm3026, %v4373, %v4374
      %v4376 = vrot.slane %v4334, 5
      %v4377 = vrot.slane %v4376, 4
      %v4378 = vrot.slane %v4059, 5
      %v4379 = vsel %vm3026, %v4377, %v4378
      %v4380 = vrot.slane %v4335, 5
      %v4381 = vrot.slane %v4380, 4
      %v4382 = vrot.slane %v4061, 5
      %v4383 = vsel %vm3026, %v4381, %v4382
      %s4384 = scalar_lea.vmem %s3, 512
      %v4385 = vld [vmem:[%s4384] sm:$0xf]
      %v4386 = vld [vmem:[%s4384 + $0x4] sm:$0xf]
      %v4387 = vld [vmem:[%s4384 + $0x8] sm:$0xf]
      %v4388 = vld [vmem:[%s4384 + $0xc] sm:$0xf]
      %v4389 = vld [vmem:[%s4384 + $0x10] sm:$0xf]
      %v4390 = vld [vmem:[%s4384 + $0x14] sm:$0xf]
      %v4391 = vld [vmem:[%s4384 + $0x18] sm:$0xf]
      %v4392 = vld [vmem:[%s4384 + $0x1c] sm:$0xf]
      %v4393 = vld [vmem:[%s4384 + $0x20] sm:$0xf]
      %v4394 = vld [vmem:[%s4384 + $0x24] sm:$0xf]
      %v4395 = vld [vmem:[%s4384 + $0x28] sm:$0xf]
      %v4396 = vld [vmem:[%s4384 + $0x2c] sm:$0xf]
      %v4397 = vld [vmem:[%s4384 + $0x30] sm:$0xf]
      %v4398 = vld [vmem:[%s4384 + $0x34] sm:$0xf]
      %v4399 = vld [vmem:[%s4384 + $0x38] sm:$0xf]
      %v4400 = vld [vmem:[%s4384 + $0x3c] sm:$0xf]
      %v4401 = vunpack.c.l.b16 %v4355
      %v4402 = vunpack.c.l.b16 %v4359
      %v4403 = vunpack.c.l.b16 %v4363
      %v4404 = vunpack.c.l.b16 %v4367
      %v4405 = vunpack.c.l.b16 %v4371
      %v4406 = vunpack.c.l.b16 %v4375
      %v4407 = vunpack.c.l.b16 %v4379
      %v4408 = vunpack.c.l.b16 %v4383
      %v4409 = vpack.c.b16 %v4402, %v4401
      %v4410 = vpack.c.b16 %v4404, %v4403
      %v4411 = vpack.c.b16 %v4406, %v4405
      %v4412 = vpack.c.b16 %v4408, %v4407
      %v4433 = vunpack.c.l.b16 %v4385
      %v4434 = vunpack.c.l.b16 %v4386
      %v4435 = vunpack.c.l.b16 %v4387
      %v4436 = vunpack.c.l.b16 %v4388
      %v4437 = vunpack.c.l.b16 %v4389
      %v4438 = vunpack.c.l.b16 %v4390
      %v4439 = vunpack.c.l.b16 %v4391
      %v4440 = vunpack.c.l.b16 %v4392
      %v4441 = vunpack.c.l.b16 %v4393
      %v4442 = vunpack.c.l.b16 %v4394
      %v4443 = vunpack.c.l.b16 %v4395
      %v4444 = vunpack.c.l.b16 %v4396
      %v4445 = vunpack.c.l.b16 %v4397
      %v4446 = vunpack.c.l.b16 %v4398
      %v4447 = vunpack.c.l.b16 %v4399
      %v4448 = vunpack.c.l.b16 %v4400
      %v4449 = vpack.c.b16 %v4434, %v4433
      %v4450 = vpack.c.b16 %v4436, %v4435
      %v4451 = vpack.c.b16 %v4438, %v4437
      %v4452 = vpack.c.b16 %v4440, %v4439
      %v4453 = vpack.c.b16 %v4442, %v4441
      %v4454 = vpack.c.b16 %v4444, %v4443
      %v4455 = vpack.c.b16 %v4446, %v4445
      %v4456 = vpack.c.b16 %v4448, %v4447
      %4465 = vmatprep.subr.bf16.mxu0 0
      %4466 = vmatpush1.bf16.msra.mxu0 %v4456
      %4467 = vmatprep.subr.bf16.mxu0 0
      %4468 = vmatpush1.bf16.msra.mxu0 %v4455
      %4469 = vmatprep.subr.bf16.mxu0 0
      %4470 = vmatpush1.bf16.msra.mxu0 %v4454
      %4471 = vmatprep.subr.bf16.mxu0 0
      %4472 = vmatpush1.bf16.msra.mxu0 %v4453
      %4473 = vmatprep.subr.bf16.mxu0 0
      %4474 = vmatpush1.bf16.msra.mxu0 %v4452
      %4475 = vmatprep.subr.bf16.mxu0 0
      %4476 = vmatpush1.bf16.msra.mxu0 %v4451
      %4477 = vmatprep.subr.bf16.mxu0 0
      %4478 = vmatpush1.bf16.msra.mxu0 %v4450
      %4479 = vmatprep.subr.bf16.mxu0 0
      %4480 = vmatpush1.bf16.msra.mxu0 %v4449
      %4481 = vmatprep.subr.bf16.mxu0 0
      %4482 = vmatpush2.bf16.msra.mxu0 0
      %4483 = vmatprep.subr.bf16.mxu0 0
      %4484 = vmatpush2.bf16.msra.mxu0 0
      %4485 = vmatprep.subr.bf16.mxu0 0
      %4486 = vmatpush2.bf16.msra.mxu0 0
      %4487 = vmatprep.subr.bf16.mxu0 0
      %4488 = vmatpush2.bf16.msra.mxu0 0
      %4489 = vmatprep.subr.bf16.mxu0 0
      %4490 = vmatpush2.bf16.msra.mxu0 0
      %4491 = vmatprep.subr.bf16.mxu0 0
      %4492 = vmatpush2.bf16.msra.mxu0 0
      %4493 = vmatprep.subr.bf16.mxu0 0
      %4494 = vmatpush2.bf16.msra.mxu0 0
      %4495 = vmatprep.subr.bf16.mxu0 0
      %4496 = vmatpush2.bf16.msra.mxu0 0
      %4497 = vmatprep.mubr.bf16.mxu0 0
      %4498 = vmatmul.mubr.bf16.gmra.mxu0 %v4409
      %v4499 = vpop.f32.mrf.mxu0
      %v4500 = vadd.f32 0.0, %v4499
      %v4501 = vpop.f32.mrf.mxu0
      %v4502 = vpop.f32.mrf.mxu0
      %v4503 = vadd.f32 0.0, %v4502
      %v4504 = vpop.f32.mrf.mxu0
      %4505 = vmatprep.mubr.bf16.mxu0 0
      %4506 = vmatmul.mubr.bf16.gmra.mxu0 %v4410
      %v4507 = vpop.f32.mrf.mxu0
      %v4508 = vadd.f32 0.0, %v4507
      %v4509 = vpop.f32.mrf.mxu0
      %v4510 = vpop.f32.mrf.mxu0
      %v4511 = vadd.f32 0.0, %v4510
      %v4512 = vpop.f32.mrf.mxu0
      %4513 = vmatprep.mubr.bf16.mxu0 0
      %4514 = vmatmul.mubr.bf16.gmra.mxu0 %v4411
      %v4515 = vpop.f32.mrf.mxu0
      %v4516 = vadd.f32 0.0, %v4515
      %v4517 = vpop.f32.mrf.mxu0
      %v4518 = vpop.f32.mrf.mxu0
      %v4519 = vadd.f32 0.0, %v4518
      %v4520 = vpop.f32.mrf.mxu0
      %4521 = vmatprep.mubr.bf16.mxu0 0
      %4522 = vmatmul.mubr.bf16.gmra.mxu0 %v4412
      %v4523 = vpop.f32.mrf.mxu0
      %v4524 = vadd.f32 0.0, %v4523
      %v4525 = vpop.f32.mrf.mxu0
      %v4526 = vpop.f32.mrf.mxu0
      %v4527 = vadd.f32 0.0, %v4526
      %v4528 = vpop.f32.mrf.mxu0
      %4529 = vdwg.mxu0
      %v4530 = vadd.f32 %v4320, %v4500
      %v4531 = vadd.f32 %v4321, %v4503
      %v4532 = vadd.f32 %v4322, %v4508
      %v4533 = vadd.f32 %v4323, %v4511
      %v4534 = vadd.f32 %v4324, %v4516
      %v4535 = vadd.f32 %v4325, %v4519
      %v4536 = vadd.f32 %v4326, %v4524
      %v4537 = vadd.f32 %v4327, %v4527
      %v4538 = vld [vmem:[%s4] sm:$0x1]
      %v4540 = vlaneseq
      %v4541 = vshrl.u32 %v4540, 7
      %v4542 = vsub.s32 0, %v4541
      %v4543 = vrot.slane %v4538, %v4542
      %v4545 = vadd.f32 %v4530, %v4543
      %v4546 = vadd.f32 %v4531, %v4543
      %v4547 = vadd.f32 %v4532, %v4543
      %v4548 = vadd.f32 %v4533, %v4543
      %v4549 = vadd.f32 %v4534, %v4543
      %v4550 = vadd.f32 %v4535, %v4543
      %v4551 = vadd.f32 %v4536, %v4543
      %v4552 = vadd.f32 %v4537, %v4543
      %v4553 = vadd.f32 %v4545, %v2363
      %v4554 = vadd.f32 %v4546, %v2364
      %v4555 = vadd.f32 %v4547, %v2365
      %v4556 = vadd.f32 %v4548, %v2366
      %v4557 = vadd.f32 %v4549, %v2367
      %v4558 = vadd.f32 %v4550, %v2368
      %v4559 = vadd.f32 %v4551, %v2369
      %v4560 = vadd.f32 %v4552, %v2370
      %v4561 = vmax.f32 %v4553, 0.0
      %v4562 = vmax.f32 %v4554, 0.0
      %v4563 = vmax.f32 %v4555, 0.0
      %v4564 = vmax.f32 %v4556, 0.0
      %v4565 = vmax.f32 %v4557, 0.0
      %v4566 = vmax.f32 %v4558, 0.0
      %v4567 = vmax.f32 %v4559, 0.0
      %v4568 = vmax.f32 %v4560, 0.0
      %4569 = vst [vmem:[%s278] sm:$0xff] %v4561
      %4570 = vst [vmem:[%s278 + $0x8] sm:$0xff] %v4562
      %4571 = vst [vmem:[%s278 + $0x10] sm:$0xff] %v4563
      %4572 = vst [vmem:[%s278 + $0x18] sm:$0xff] %v4564
      %4573 = vst [vmem:[%s278 + $0x20] sm:$0xff] %v4565
      %4574 = vst [vmem:[%s278 + $0x28] sm:$0xff] %v4566
      %4575 = vst [vmem:[%s278 + $0x30] sm:$0xff] %v4567
      %4576 = vst [vmem:[%s278 + $0x38] sm:$0xff] %v4568
      %p4577 = scmp.lt.s32.totalorder %s18, 1
      %s4578 = scalar_select %p4577, %s18, 1
      %s4579 = smul.addr %s4578, 8
      %s4580 = smul.addr %s4579, 8
      %s4581 = scalar_lea.vmem %s7, %s4580
      // Predicated region
      $region49: #{basic_block_forward.1} parent=47 // pred_check
        %p4582 = pneg %p188
      $region50: #{basic_block_forward.1} parent=47 // pred_check_branch
        %4584 = sbr.rel (%p4582) target = $region52
      $region51: #{basic_block_forward.1} parent=47 // pred_region
        _
      $region52: #{basic_block_forward.1} parent=47 // pred_fallthru
        _
    $region48: #{basic_block_forward.1} parent=5 // pred_fallthru
      _
    %p4585 = scmp.le.s32.totalorder 2, %s13
    // Predicated region
    $region53: #{basic_block_forward.1} parent=5 // pred_check
      %p4586 = pneg %p4585
    $region54: #{basic_block_forward.1} parent=5 // pred_check_branch
      %4588 = sbr.rel (%p4586) target = $region56
    $region55: #{basic_block_forward.1} parent=5 // pred_region
      %s4589 = ssub.s32 %s13, 2
      // Predicated region
      $region57: #{basic_block_forward.1} parent=55 // pred_check
        %p4590 = pneg %p194
      $region58: #{basic_block_forward.1} parent=55 // pred_check_branch
        %4592 = sbr.rel (%p4590) target = $region60
      $region59: #{basic_block_forward.1} parent=55 // pred_region
        %p4593 = scmp.lt.s32.totalorder %s19, 1
        %s4594 = scalar_select %p4593, %s19, 1
        %s4595 = smul.addr %s4594, 8
        %s4596 = smul.addr %s4595, 8
        %s4597 = scalar_lea.vmem %s7, %s4596
      $region60: #{basic_block_forward.1} parent=55 // pred_fallthru
        _
    $region56: #{basic_block_forward.1} parent=5 // pred_fallthru
      _
  $region6: #{basic_block_forward.1} parent=0 // loop_footer
    %s17 = sadd.s32 1, %s13
  $region7: #{basic_block_forward.1} parent=0 // loop_footer_branch
    %12 = sbr.rel target = $region3
  $region8: #{basic_block_forward.1} parent=0 // loop_exit
    _

</llo_original>
